<compile_context>
chip_gen: v7x
topology: tpu7x:2x2x1
jax: 0.10.0
libtpu: 0.0.40
codegen_flags: <defaults>
</compile_context>

<pallas_src>
import functools

import jax
import jax.numpy as jnp
from jax import lax
from jax.experimental import pallas as pl
from jax.experimental.pallas import tpu as pltpu


# Set to jnp.bfloat16 on v6e/v7x at real channel counts (then the relaxed
# tolerance path below applies).  f32 kept here so the 1e-4 check holds.
MXU_DTYPE = jnp.float32


# ----------------------------------------------------------------------------
# Fused Pallas kernel: the entire BasicBlock forward in one invocation.
# ----------------------------------------------------------------------------

def _basic_block_kernel(xph_ref, w1_ref, w2s_ref, bn1_ref, bn2_ref, b3_ref,
                        o_ref, c1pad_ref, c2pad_ref, p1_ref, p2_ref, *,
                        n, ho, wo, cin, cout, preact, remove_first_relu):
    m = n * ho * wo
    f32 = jnp.float32

    s1 = bn1_ref[0:1, :]      # (1, cin)   bn1 folded scale
    b1 = bn1_ref[1:2, :]      # (1, cin)   bn1 folded shift
    s2 = bn2_ref[0:1, :]      # (1, cout)  bn2 folded scale
    b2 = bn2_ref[1:2, :]      # (1, cout)  bn2 folded shift
    # b3_ref: (cout, 1) bn3 shift, applied lane-dense after the final transpose
    # (bn3 scale is pre-folded into w2s on the host).

    first_relu = True if preact else (not remove_first_relu)

    # ---- stage 1: bn1(+relu) on the four stride-2 phases of x, deposited into
    # a zero-HALO VMEM scratch so every conv1 tap is a unit-stride slice.
    # Data sits at rows 1..ho, cols 8..8+wo-1 (sublane-aligned store); only the
    # halo that taps actually read (row 0, col 7) is zeroed.  Cols 0..6 are
    # alignment padding: never read, never written.
    c1pad_ref[:, :, 0:1, 7:8 + wo, :] = jnp.zeros((4, n, 1, wo + 1, cin), f32)
    c1pad_ref[:, :, :, 7:8, :] = jnp.zeros((4, n, ho + 1, 1, cin), f32)
    for p in range(4):
        a = xph_ref[p, :, :, :, :] * s1 + b1          # (n, ho, wo, cin)
        if first_relu:
            a = jnp.maximum(a, 0.0)
        c1pad_ref[p, :, 1:1 + ho, 8:8 + wo, :] = a

    # ---- conv1: 3x3, stride 2, pad 1 as ONE im2col matmul (K = 9*cin).
    # Padded input row for output row r and kernel row dh is 2*r+dh-1, i.e.
    #   dh=0 -> odd-row phase, block r-1 ; dh=1 -> even, r ; dh=2 -> odd, r
    # which in scratch coordinates are slice starts 0/1/1 (rows), 7/8/8 (cols).
    row_map = ((1, 0), (0, 1), (1, 1))   # dh -> (row parity, row slice start)
    col_map = ((1, 7), (0, 8), (1, 8))   # dw -> (col parity, col slice start)
    for dh in range(3):
        rp, hs = row_map[dh]
        for dw in range(3):
            cp, ws = col_map[dw]
            t = dh * 3 + dw
            tap = c1pad_ref[2 * rp + cp, :, hs:hs + ho, ws:ws + wo, :]
            p1_ref[:, t * cin:(t + 1) * cin] = tap.reshape(m, cin)

    acc1 = jnp.dot(p1_ref[...].astype(MXU_DTYPE),
                   w1_ref[...].astype(MXU_DTYPE),
                   preferred_element_type=f32)        # (m, cout)

    # ---- bn2 + relu, fused as conv1's epilogue. ----
    y1 = jnp.maximum(acc1 * s2 + b2, 0.0)             # (m, cout)

    # ---- conv2: 3x3, stride 1, pad 1: same padded-scratch + im2col trick,
    # halo-only zeroing (rows 0 / ho+1, cols 7 / 8+wo).
    c2pad_ref[:, 0:1, 7:9 + wo, :] = jnp.zeros((n, 1, wo + 2, cout), f32)
    c2pad_ref[:, ho + 1:ho + 2, 7:9 + wo, :] = jnp.zeros((n, 1, wo + 2, cout), f32)
    c2pad_ref[:, :, 7:8, :] = jnp.zeros((n, ho + 2, 1, cout), f32)
    c2pad_ref[:, :, 8 + wo:9 + wo, :] = jnp.zeros((n, ho + 2, 1, cout), f32)
    c2pad_ref[:, 1:1 + ho, 8:8 + wo, :] = y1.reshape(n, ho, wo, cout)

    for dh in range(3):
        for dw in range(3):
            t = dh * 3 + dw
            tap = c2pad_ref[:, dh:dh + ho, 7 + dw:7 + dw + wo, :]
            p2_ref[:, t * cout:(t + 1) * cout] = tap.reshape(m, cout)

    # ---- 1x1 stride-2 shortcut folded into the conv2 GEMM as 4 extra K
    # columns (the even/even phase of x; activated x when preact=True).
    if preact:
        xsc = jnp.maximum(xph_ref[0, :, :, :, :] * s1 + b1, 0.0)
    else:
        xsc = xph_ref[0, :, :, :, :]
    p2_ref[:, 9 * cout:9 * cout + cin] = xsc.reshape(m, cin)

    acc2 = jnp.dot(p2_ref[...].astype(MXU_DTYPE),
                   w2s_ref[...].astype(MXU_DTYPE),
                   preferred_element_type=f32)        # (m, cout)

    # ---- lane-dense epilogue: transpose to (cout, m) = one full (8,128) vreg,
    # add bn3 shift, single unmasked store of the output.
    o_ref[...] = (acc2.T + b3_ref[...]).astype(o_ref.dtype)


# ----------------------------------------------------------------------------
# Host-side wrapper: layout prep (one permutation of x + tiny weight algebra)
# and a single pallas_call.
# ----------------------------------------------------------------------------

def _full_spec(shape):
    return pl.BlockSpec(shape, lambda: tuple(0 for _ in shape))


def fold_bn(gamma, beta, mean, var, eps=1e-5):
    scale = gamma / jnp.sqrt(var + eps)
    shift = beta - mean * scale
    return scale.astype(jnp.float32), shift.astype(jnp.float32)


def basic_block_forward(x_nchw, params, *, stride, remove_first_relu,
                        add_last_bn, preact):
    if stride != 2:
        raise NotImplementedError("this kernel is specialised for stride=2")

    N, Cin, H, W = x_nchw.shape
    Ho, Wo = H // 2, W // 2
    Cout = params["conv1"].shape[0]
    M = N * Ho * Wo

    # Stride-2 phase split FUSED into the single unavoidable NCHW->channel-last
    # layout permutation: reshape (free) -> one transpose copy -> reshape
    # (free).  Same HBM traffic as a plain NCHW->NHWC transpose; no extra pass.
    x = x_nchw.astype(jnp.float32)
    xph = (x.reshape(N, Cin, Ho, 2, Wo, 2)
             .transpose(3, 5, 0, 2, 4, 1)            # (2, 2, N, Ho, Wo, Cin)
             .reshape(4, N, Ho, Wo, Cin))            # phase p = 2*rp + cp

    s1, b1 = fold_bn(*params["bn1"])
    s2, b2 = fold_bn(*params["bn2"])
    if add_last_bn:
        s3, b3 = fold_bn(*params["bn3"])
    else:
        s3 = jnp.ones((Cout,), jnp.float32)
        b3 = jnp.zeros((Cout,), jnp.float32)

    # Conv weights -> (9*Cin_tap, Cout) im2col form; bn3 scale folded into w2;
    # 1x1 shortcut weights stacked under w2 (K = 9*Cout + Cin).
    w1 = (jnp.transpose(params["conv1"], (2, 3, 1, 0))
          .reshape(9 * Cin, Cout).astype(jnp.float32))
    w2 = ((jnp.transpose(params["conv2"], (2, 3, 1, 0)) * s3)
          .reshape(9 * Cout, Cout).astype(jnp.float32))
    wsc = jnp.transpose(params["shortcut"][:, :, 0, 0], (1, 0)).astype(jnp.float32)
    w2s = jnp.concatenate([w2, wsc], axis=0)          # (9*Cout + Cin, Cout)

    bn1p = jnp.stack([s1, b1], axis=0)                # (2, Cin)
    bn2p = jnp.stack([s2, b2], axis=0)                # (2, Cout)
    b3c = b3.reshape(Cout, 1)                         # (Cout, 1) lane-dense use

    kernel = functools.partial(
        _basic_block_kernel, n=N, ho=Ho, wo=Wo, cin=Cin, cout=Cout,
        preact=preact, remove_first_relu=remove_first_relu)

    # TODO(synk): at real ResNet shapes, add a "parallel" grid axis over M
    # tiles (v7x: 2 TensorCores) and size scratches against v7x's 64 MiB VMEM.
    out_t = pl.pallas_call(
        kernel,
        out_shape=jax.ShapeDtypeStruct((Cout, M), jnp.float32),
        in_specs=[_full_spec(xph.shape), _full_spec(w1.shape),
                  _full_spec(w2s.shape), _full_spec(bn1p.shape),
                  _full_spec(bn2p.shape), _full_spec(b3c.shape)],
        out_specs=_full_spec((Cout, M)),
        scratch_shapes=[
            # phase-split conv1 input, zero halo at row 0 / col 7
            pltpu.VMEM((4, N, Ho + 1, Wo + 8, Cin), jnp.float32),
            # conv2 input, zero halo at rows 0 & Ho+1, cols 7 & 8+Wo
            pltpu.VMEM((N, Ho + 2, Wo + 9, Cout), jnp.float32),
            # im2col patch matrices
            pltpu.VMEM((M, 9 * Cin), jnp.float32),
            pltpu.VMEM((M, 9 * Cout + Cin), jnp.float32),
        ],
    )(xph, w1, w2s, bn1p, bn2p, b3c)

    out = out_t.reshape(Cout, N, Ho, Wo)
    return jnp.transpose(out, (1, 0, 2, 3))           # -> NCHW


# ----------------------------------------------------------------------------
# Plain-JAX reference (for the correctness check)
# ----------------------------------------------------------------------------

def _ref_bn(x_nhwc, g, b, m, v, eps=1e-5):
    return (x_nhwc - m) / jnp.sqrt(v + eps) * g + b


def _ref_conv(x_nhwc, w_oihw, stride, pad):
    w = jnp.transpose(w_oihw, (2, 3, 1, 0))  # HWIO
    return lax.conv_general_dilated(
        x_nhwc, w, (stride, stride), [(pad, pad), (pad, pad)],
        dimension_numbers=("NHWC", "HWIO", "NHWC"))


def reference_forward(x_nchw, params, *, stride, remove_first_relu,
                      add_last_bn, preact):
    x = jnp.transpose(x_nchw, (0, 2, 3, 1)).astype(jnp.float32)
    if preact:
        x = jax.nn.relu(_ref_bn(x, *params["bn1"]))
        y = _ref_conv(x, params["conv1"], stride, 1)
    else:
        y = _ref_bn(x, *params["bn1"])
        if not remove_first_relu:
            y = jax.nn.relu(y)
        y = _ref_conv(y, params["conv1"], stride, 1)
    y = jax.nn.relu(_ref_bn(y, *params["bn2"]))
    y = _ref_conv(y, params["conv2"], 1, 1)
    if add_last_bn:
        y = _ref_bn(y, *params["bn3"])
    y = y + _ref_conv(x, params["shortcut"], stride, 0)
    return jnp.transpose(y, (0, 3, 1, 2))


# ----------------------------------------------------------------------------
# Main
# ----------------------------------------------------------------------------

if __name__ == "__main__":
    IN_C, OUT_C, STRIDE = 4, 8, 2
    REMOVE_FIRST_RELU, ADD_LAST_BN, PREACT = False, True, False
    N, H, W = 2, 16, 16

    key = jax.random.PRNGKey(0)
    keys = jax.random.split(key, 16)

    def bn_params(k, c):
        kg, kb, km, kv = jax.random.split(k, 4)
        gamma = 1.0 + 0.1 * jax.random.normal(kg, (c,), jnp.float32)
        beta = 0.1 * jax.random.normal(kb, (c,), jnp.float32)
        mean = 0.1 * jax.random.normal(km, (c,), jnp.float32)
        var = jax.random.uniform(kv, (c,), jnp.float32, 0.5, 1.5)
        return (gamma, beta, mean, var)

    params = {
        "bn1": bn_params(keys[0], IN_C),
        "conv1": 0.1 * jax.random.normal(keys[1], (OUT_C, IN_C, 3, 3), jnp.float32),
        "bn2": bn_params(keys[2], OUT_C),
        "conv2": 0.1 * jax.random.normal(keys[3], (OUT_C, OUT_C, 3, 3), jnp.float32),
        "bn3": bn_params(keys[4], OUT_C),
        "shortcut": 0.1 * jax.random.normal(keys[5], (OUT_C, IN_C, 1, 1), jnp.float32),
    }

    x = jax.random.normal(keys[6], (N, IN_C, H, W), jnp.float32)

    out = basic_block_forward(
        x, params, stride=STRIDE, remove_first_relu=REMOVE_FIRST_RELU,
        add_last_bn=ADD_LAST_BN, preact=PREACT)
    out = jax.block_until_ready(out)

    ref = reference_forward(
        x, params, stride=STRIDE, remove_first_relu=REMOVE_FIRST_RELU,
        add_last_bn=ADD_LAST_BN, preact=PREACT)
    ref = jax.block_until_ready(ref)

    assert out.shape == (N, OUT_C, H // STRIDE, W // STRIDE), out.shape
    tol = 1e-4 if MXU_DTYPE == jnp.float32 else 5e-2
    assert jnp.allclose(out, ref, rtol=tol, atol=tol), \
        float(jnp.max(jnp.abs(out - ref)))

    print("KERNEL_OK")
</pallas_src>

<mosaic_0001>
module attributes {stable_mosaic.version = 11 : i64} {
  func.func @_basic_block_kernel(%arg0: memref<4x2x8x8x4xf32, #tpu.memory_space<vmem>>, %arg1: memref<36x8xf32, #tpu.memory_space<vmem>>, %arg2: memref<76x8xf32, #tpu.memory_space<vmem>>, %arg3: memref<2x4xf32, #tpu.memory_space<vmem>>, %arg4: memref<2x8xf32, #tpu.memory_space<vmem>>, %arg5: memref<8x1xf32, #tpu.memory_space<vmem>>, %arg6: memref<8x128xf32, #tpu.memory_space<vmem>>, %arg7: memref<4x2x9x16x4xf32, #tpu.memory_space<vmem>>, %arg8: memref<2x10x17x8xf32, #tpu.memory_space<vmem>>, %arg9: memref<128x36xf32, #tpu.memory_space<vmem>>, %arg10: memref<128x76xf32, #tpu.memory_space<vmem>>) attributes {dimension_semantics = [], scalar_prefetch = 0 : i64, scratch_operands = 4 : i64, tpu.core_type = #tpu.core_type<tc>} {
    %c0 = arith.constant 0 : index
    %c0_0 = arith.constant 0 : index
    %0 = vector.load %arg3[%c0, %c0_0] : memref<2x4xf32, #tpu.memory_space<vmem>>, vector<1x4xf32>
    %c1 = arith.constant 1 : index
    %c0_1 = arith.constant 0 : index
    %1 = vector.load %arg3[%c1, %c0_1] : memref<2x4xf32, #tpu.memory_space<vmem>>, vector<1x4xf32>
    %c0_2 = arith.constant 0 : index
    %c0_3 = arith.constant 0 : index
    %2 = vector.load %arg4[%c0_2, %c0_3] : memref<2x8xf32, #tpu.memory_space<vmem>>, vector<1x8xf32>
    %c1_4 = arith.constant 1 : index
    %c0_5 = arith.constant 0 : index
    %3 = vector.load %arg4[%c1_4, %c0_5] : memref<2x8xf32, #tpu.memory_space<vmem>>, vector<1x8xf32>
    %cst = arith.constant 0.000000e+00 : f32
    %4 = vector.broadcast %cst : f32 to vector<4x2x1x9x4xf32>
    %c0_6 = arith.constant 0 : index
    %c0_7 = arith.constant 0 : index
    %c0_8 = arith.constant 0 : index
    %c7 = arith.constant 7 : index
    %c0_9 = arith.constant 0 : index
    %5 = vector.load %arg7[%c0_6, %c0_7, %c0_8, %c7, %c0_9] : memref<4x2x9x16x4xf32, #tpu.memory_space<vmem>>, vector<4x2x1x9x4xf32>
    tpu.vector_store %arg7[%c0_6, %c0_7, %c0_8, %c7, %c0_9], %4 {strides = array<i32>} : memref<4x2x9x16x4xf32, #tpu.memory_space<vmem>>, vector<4x2x1x9x4xf32>,
    %cst_10 = arith.constant 0.000000e+00 : f32
    %6 = vector.broadcast %cst_10 : f32 to vector<4x2x9x1x4xf32>
    %c0_11 = arith.constant 0 : index
    %c0_12 = arith.constant 0 : index
    %c0_13 = arith.constant 0 : index
    %c7_14 = arith.constant 7 : index
    %c0_15 = arith.constant 0 : index
    %7 = vector.load %arg7[%c0_11, %c0_12, %c0_13, %c7_14, %c0_15] : memref<4x2x9x16x4xf32, #tpu.memory_space<vmem>>, vector<4x2x9x1x4xf32>
    tpu.vector_store %arg7[%c0_11, %c0_12, %c0_13, %c7_14, %c0_15], %6 {strides = array<i32>} : memref<4x2x9x16x4xf32, #tpu.memory_space<vmem>>, vector<4x2x9x1x4xf32>,
    %c0_16 = arith.constant 0 : index
    %c0_17 = arith.constant 0 : index
    %c0_18 = arith.constant 0 : index
    %c0_19 = arith.constant 0 : index
    %c0_20 = arith.constant 0 : index
    %8 = vector.load %arg0[%c0_16, %c0_17, %c0_18, %c0_19, %c0_20] : memref<4x2x8x8x4xf32, #tpu.memory_space<vmem>>, vector<1x2x8x8x4xf32>
    %9 = vector.shape_cast %8 : vector<1x2x8x8x4xf32> to vector<2x8x8x4xf32>
    %10 = vector.shape_cast %0 : vector<1x4xf32> to vector<1x1x1x4xf32>
    %11 = vector.broadcast %10 : vector<1x1x1x4xf32> to vector<2x8x8x4xf32>
    %12 = arith.mulf %9, %11 : vector<2x8x8x4xf32>
    %13 = vector.shape_cast %1 : vector<1x4xf32> to vector<1x1x1x4xf32>
    %14 = vector.broadcast %13 : vector<1x1x1x4xf32> to vector<2x8x8x4xf32>
    %15 = arith.addf %12, %14 : vector<2x8x8x4xf32>
    %cst_21 = arith.constant 0.000000e+00 : f32
    %16 = vector.broadcast %cst_21 : f32 to vector<2x8x8x4xf32>
    %17 = arith.maximumf %15, %16 : vector<2x8x8x4xf32>
    %c0_22 = arith.constant 0 : index
    %c0_23 = arith.constant 0 : index
    %c1_24 = arith.constant 1 : index
    %c8 = arith.constant 8 : index
    %c0_25 = arith.constant 0 : index
    %18 = vector.load %arg7[%c0_22, %c0_23, %c1_24, %c8, %c0_25] : memref<4x2x9x16x4xf32, #tpu.memory_space<vmem>>, vector<1x2x8x8x4xf32>
    %19 = vector.shape_cast %18 : vector<1x2x8x8x4xf32> to vector<2x8x8x4xf32>
    %20 = vector.shape_cast %17 : vector<2x8x8x4xf32> to vector<1x2x8x8x4xf32>
    tpu.vector_store %arg7[%c0_22, %c0_23, %c1_24, %c8, %c0_25], %20 {strides = array<i32>} : memref<4x2x9x16x4xf32, #tpu.memory_space<vmem>>, vector<1x2x8x8x4xf32>,
    %c1_26 = arith.constant 1 : index
    %c0_27 = arith.constant 0 : index
    %c0_28 = arith.constant 0 : index
    %c0_29 = arith.constant 0 : index
    %c0_30 = arith.constant 0 : index
    %21 = vector.load %arg0[%c1_26, %c0_27, %c0_28, %c0_29, %c0_30] : memref<4x2x8x8x4xf32, #tpu.memory_space<vmem>>, vector<1x2x8x8x4xf32>
    %22 = vector.shape_cast %21 : vector<1x2x8x8x4xf32> to vector<2x8x8x4xf32>
    %23 = vector.shape_cast %0 : vector<1x4xf32> to vector<1x1x1x4xf32>
    %24 = vector.broadcast %23 : vector<1x1x1x4xf32> to vector<2x8x8x4xf32>
    %25 = arith.mulf %22, %24 : vector<2x8x8x4xf32>
    %26 = vector.shape_cast %1 : vector<1x4xf32> to vector<1x1x1x4xf32>
    %27 = vector.broadcast %26 : vector<1x1x1x4xf32> to vector<2x8x8x4xf32>
    %28 = arith.addf %25, %27 : vector<2x8x8x4xf32>
    %cst_31 = arith.constant 0.000000e+00 : f32
    %29 = vector.broadcast %cst_31 : f32 to vector<2x8x8x4xf32>
    %30 = arith.maximumf %28, %29 : vector<2x8x8x4xf32>
    %c1_32 = arith.constant 1 : index
    %c0_33 = arith.constant 0 : index
    %c1_34 = arith.constant 1 : index
    %c8_35 = arith.constant 8 : index
    %c0_36 = arith.constant 0 : index
    %31 = vector.load %arg7[%c1_32, %c0_33, %c1_34, %c8_35, %c0_36] : memref<4x2x9x16x4xf32, #tpu.memory_space<vmem>>, vector<1x2x8x8x4xf32>
    %32 = vector.shape_cast %31 : vector<1x2x8x8x4xf32> to vector<2x8x8x4xf32>
    %33 = vector.shape_cast %30 : vector<2x8x8x4xf32> to vector<1x2x8x8x4xf32>
    tpu.vector_store %arg7[%c1_32, %c0_33, %c1_34, %c8_35, %c0_36], %33 {strides = array<i32>} : memref<4x2x9x16x4xf32, #tpu.memory_space<vmem>>, vector<1x2x8x8x4xf32>,
    %c2 = arith.constant 2 : index
    %c0_37 = arith.constant 0 : index
    %c0_38 = arith.constant 0 : index
    %c0_39 = arith.constant 0 : index
    %c0_40 = arith.constant 0 : index
    %34 = vector.load %arg0[%c2, %c0_37, %c0_38, %c0_39, %c0_40] : memref<4x2x8x8x4xf32, #tpu.memory_space<vmem>>, vector<1x2x8x8x4xf32>
    %35 = vector.shape_cast %34 : vector<1x2x8x8x4xf32> to vector<2x8x8x4xf32>
    %36 = vector.shape_cast %0 : vector<1x4xf32> to vector<1x1x1x4xf32>
    %37 = vector.broadcast %36 : vector<1x1x1x4xf32> to vector<2x8x8x4xf32>
    %38 = arith.mulf %35, %37 : vector<2x8x8x4xf32>
    %39 = vector.shape_cast %1 : vector<1x4xf32> to vector<1x1x1x4xf32>
    %40 = vector.broadcast %39 : vector<1x1x1x4xf32> to vector<2x8x8x4xf32>
    %41 = arith.addf %38, %40 : vector<2x8x8x4xf32>
    %cst_41 = arith.constant 0.000000e+00 : f32
    %42 = vector.broadcast %cst_41 : f32 to vector<2x8x8x4xf32>
    %43 = arith.maximumf %41, %42 : vector<2x8x8x4xf32>
    %c2_42 = arith.constant 2 : index
    %c0_43 = arith.constant 0 : index
    %c1_44 = arith.constant 1 : index
    %c8_45 = arith.constant 8 : index
    %c0_46 = arith.constant 0 : index
    %44 = vector.load %arg7[%c2_42, %c0_43, %c1_44, %c8_45, %c0_46] : memref<4x2x9x16x4xf32, #tpu.memory_space<vmem>>, vector<1x2x8x8x4xf32>
    %45 = vector.shape_cast %44 : vector<1x2x8x8x4xf32> to vector<2x8x8x4xf32>
    %46 = vector.shape_cast %43 : vector<2x8x8x4xf32> to vector<1x2x8x8x4xf32>
    tpu.vector_store %arg7[%c2_42, %c0_43, %c1_44, %c8_45, %c0_46], %46 {strides = array<i32>} : memref<4x2x9x16x4xf32, #tpu.memory_space<vmem>>, vector<1x2x8x8x4xf32>,
    %c3 = arith.constant 3 : index
    %c0_47 = arith.constant 0 : index
    %c0_48 = arith.constant 0 : index
    %c0_49 = arith.constant 0 : index
    %c0_50 = arith.constant 0 : index
    %47 = vector.load %arg0[%c3, %c0_47, %c0_48, %c0_49, %c0_50] : memref<4x2x8x8x4xf32, #tpu.memory_space<vmem>>, vector<1x2x8x8x4xf32>
    %48 = vector.shape_cast %47 : vector<1x2x8x8x4xf32> to vector<2x8x8x4xf32>
    %49 = vector.shape_cast %0 : vector<1x4xf32> to vector<1x1x1x4xf32>
    %50 = vector.broadcast %49 : vector<1x1x1x4xf32> to vector<2x8x8x4xf32>
    %51 = arith.mulf %48, %50 : vector<2x8x8x4xf32>
    %52 = vector.shape_cast %1 : vector<1x4xf32> to vector<1x1x1x4xf32>
    %53 = vector.broadcast %52 : vector<1x1x1x4xf32> to vector<2x8x8x4xf32>
    %54 = arith.addf %51, %53 : vector<2x8x8x4xf32>
    %cst_51 = arith.constant 0.000000e+00 : f32
    %55 = vector.broadcast %cst_51 : f32 to vector<2x8x8x4xf32>
    %56 = arith.maximumf %54, %55 : vector<2x8x8x4xf32>
    %c3_52 = arith.constant 3 : index
    %c0_53 = arith.constant 0 : index
    %c1_54 = arith.constant 1 : index
    %c8_55 = arith.constant 8 : index
    %c0_56 = arith.constant 0 : index
    %57 = vector.load %arg7[%c3_52, %c0_53, %c1_54, %c8_55, %c0_56] : memref<4x2x9x16x4xf32, #tpu.memory_space<vmem>>, vector<1x2x8x8x4xf32>
    %58 = vector.shape_cast %57 : vector<1x2x8x8x4xf32> to vector<2x8x8x4xf32>
    %59 = vector.shape_cast %56 : vector<2x8x8x4xf32> to vector<1x2x8x8x4xf32>
    tpu.vector_store %arg7[%c3_52, %c0_53, %c1_54, %c8_55, %c0_56], %59 {strides = array<i32>} : memref<4x2x9x16x4xf32, #tpu.memory_space<vmem>>, vector<1x2x8x8x4xf32>,
    %c3_57 = arith.constant 3 : index
    %c0_58 = arith.constant 0 : index
    %c0_59 = arith.constant 0 : index
    %c7_60 = arith.constant 7 : index
    %c0_61 = arith.constant 0 : index
    %60 = vector.load %arg7[%c3_57, %c0_58, %c0_59, %c7_60, %c0_61] : memref<4x2x9x16x4xf32, #tpu.memory_space<vmem>>, vector<1x2x8x8x4xf32>
    %61 = vector.shape_cast %60 : vector<1x2x8x8x4xf32> to vector<2x8x8x4xf32>
    %62 = vector.shape_cast %61 : vector<2x8x8x4xf32> to vector<128x4xf32>
    %c0_62 = arith.constant 0 : index
    %c0_63 = arith.constant 0 : index
    %63 = vector.load %arg9[%c0_62, %c0_63] : memref<128x36xf32, #tpu.memory_space<vmem>>, vector<128x4xf32>
    tpu.vector_store %arg9[%c0_62, %c0_63], %62 {strides = array<i32>} : memref<128x36xf32, #tpu.memory_space<vmem>>, vector<128x4xf32>,
    %c2_64 = arith.constant 2 : index
    %c0_65 = arith.constant 0 : index
    %c0_66 = arith.constant 0 : index
    %c8_67 = arith.constant 8 : index
    %c0_68 = arith.constant 0 : index
    %64 = vector.load %arg7[%c2_64, %c0_65, %c0_66, %c8_67, %c0_68] : memref<4x2x9x16x4xf32, #tpu.memory_space<vmem>>, vector<1x2x8x8x4xf32>
    %65 = vector.shape_cast %64 : vector<1x2x8x8x4xf32> to vector<2x8x8x4xf32>
    %66 = vector.shape_cast %65 : vector<2x8x8x4xf32> to vector<128x4xf32>
    %c0_69 = arith.constant 0 : index
    %c4 = arith.constant 4 : index
    %67 = vector.load %arg9[%c0_69, %c4] : memref<128x36xf32, #tpu.memory_space<vmem>>, vector<128x4xf32>
    tpu.vector_store %arg9[%c0_69, %c4], %66 {strides = array<i32>} : memref<128x36xf32, #tpu.memory_space<vmem>>, vector<128x4xf32>,
    %c3_70 = arith.constant 3 : index
    %c0_71 = arith.constant 0 : index
    %c0_72 = arith.constant 0 : index
    %c8_73 = arith.constant 8 : index
    %c0_74 = arith.constant 0 : index
    %68 = vector.load %arg7[%c3_70, %c0_71, %c0_72, %c8_73, %c0_74] : memref<4x2x9x16x4xf32, #tpu.memory_space<vmem>>, vector<1x2x8x8x4xf32>
    %69 = vector.shape_cast %68 : vector<1x2x8x8x4xf32> to vector<2x8x8x4xf32>
    %70 = vector.shape_cast %69 : vector<2x8x8x4xf32> to vector<128x4xf32>
    %c0_75 = arith.constant 0 : index
    %c8_76 = arith.constant 8 : index
    %71 = vector.load %arg9[%c0_75, %c8_76] : memref<128x36xf32, #tpu.memory_space<vmem>>, vector<128x4xf32>
    tpu.vector_store %arg9[%c0_75, %c8_76], %70 {strides = array<i32>} : memref<128x36xf32, #tpu.memory_space<vmem>>, vector<128x4xf32>,
    %c1_77 = arith.constant 1 : index
    %c0_78 = arith.constant 0 : index
    %c1_79 = arith.constant 1 : index
    %c7_80 = arith.constant 7 : index
    %c0_81 = arith.constant 0 : index
    %72 = vector.load %arg7[%c1_77, %c0_78, %c1_79, %c7_80, %c0_81] : memref<4x2x9x16x4xf32, #tpu.memory_space<vmem>>, vector<1x2x8x8x4xf32>
    %73 = vector.shape_cast %72 : vector<1x2x8x8x4xf32> to vector<2x8x8x4xf32>
    %74 = vector.shape_cast %73 : vector<2x8x8x4xf32> to vector<128x4xf32>
    %c0_82 = arith.constant 0 : index
    %c12 = arith.constant 12 : index
    %75 = vector.load %arg9[%c0_82, %c12] : memref<128x36xf32, #tpu.memory_space<vmem>>, vector<128x4xf32>
    tpu.vector_store %arg9[%c0_82, %c12], %74 {strides = array<i32>} : memref<128x36xf32, #tpu.memory_space<vmem>>, vector<128x4xf32>,
    %c0_83 = arith.constant 0 : index
    %c0_84 = arith.constant 0 : index
    %c1_85 = arith.constant 1 : index
    %c8_86 = arith.constant 8 : index
    %c0_87 = arith.constant 0 : index
    %76 = vector.load %arg7[%c0_83, %c0_84, %c1_85, %c8_86, %c0_87] : memref<4x2x9x16x4xf32, #tpu.memory_space<vmem>>, vector<1x2x8x8x4xf32>
    %77 = vector.shape_cast %76 : vector<1x2x8x8x4xf32> to vector<2x8x8x4xf32>
    %78 = vector.shape_cast %77 : vector<2x8x8x4xf32> to vector<128x4xf32>
    %c0_88 = arith.constant 0 : index
    %c16 = arith.constant 16 : index
    %79 = vector.load %arg9[%c0_88, %c16] : memref<128x36xf32, #tpu.memory_space<vmem>>, vector<128x4xf32>
    tpu.vector_store %arg9[%c0_88, %c16], %78 {strides = array<i32>} : memref<128x36xf32, #tpu.memory_space<vmem>>, vector<128x4xf32>,
    %c1_89 = arith.constant 1 : index
    %c0_90 = arith.constant 0 : index
    %c1_91 = arith.constant 1 : index
    %c8_92 = arith.constant 8 : index
    %c0_93 = arith.constant 0 : index
    %80 = vector.load %arg7[%c1_89, %c0_90, %c1_91, %c8_92, %c0_93] : memref<4x2x9x16x4xf32, #tpu.memory_space<vmem>>, vector<1x2x8x8x4xf32>
    %81 = vector.shape_cast %80 : vector<1x2x8x8x4xf32> to vector<2x8x8x4xf32>
    %82 = vector.shape_cast %81 : vector<2x8x8x4xf32> to vector<128x4xf32>
    %c0_94 = arith.constant 0 : index
    %c20 = arith.constant 20 : index
    %83 = vector.load %arg9[%c0_94, %c20] : memref<128x36xf32, #tpu.memory_space<vmem>>, vector<128x4xf32>
    tpu.vector_store %arg9[%c0_94, %c20], %82 {strides = array<i32>} : memref<128x36xf32, #tpu.memory_space<vmem>>, vector<128x4xf32>,
    %c3_95 = arith.constant 3 : index
    %c0_96 = arith.constant 0 : index
    %c1_97 = arith.constant 1 : index
    %c7_98 = arith.constant 7 : index
    %c0_99 = arith.constant 0 : index
    %84 = vector.load %arg7[%c3_95, %c0_96, %c1_97, %c7_98, %c0_99] : memref<4x2x9x16x4xf32, #tpu.memory_space<vmem>>, vector<1x2x8x8x4xf32>
    %85 = vector.shape_cast %84 : vector<1x2x8x8x4xf32> to vector<2x8x8x4xf32>
    %86 = vector.shape_cast %85 : vector<2x8x8x4xf32> to vector<128x4xf32>
    %c0_100 = arith.constant 0 : index
    %c24 = arith.constant 24 : index
    %87 = vector.load %arg9[%c0_100, %c24] : memref<128x36xf32, #tpu.memory_space<vmem>>, vector<128x4xf32>
    tpu.vector_store %arg9[%c0_100, %c24], %86 {strides = array<i32>} : memref<128x36xf32, #tpu.memory_space<vmem>>, vector<128x4xf32>,
    %c2_101 = arith.constant 2 : index
    %c0_102 = arith.constant 0 : index
    %c1_103 = arith.constant 1 : index
    %c8_104 = arith.constant 8 : index
    %c0_105 = arith.constant 0 : index
    %88 = vector.load %arg7[%c2_101, %c0_102, %c1_103, %c8_104, %c0_105] : memref<4x2x9x16x4xf32, #tpu.memory_space<vmem>>, vector<1x2x8x8x4xf32>
    %89 = vector.shape_cast %88 : vector<1x2x8x8x4xf32> to vector<2x8x8x4xf32>
    %90 = vector.shape_cast %89 : vector<2x8x8x4xf32> to vector<128x4xf32>
    %c0_106 = arith.constant 0 : index
    %c28 = arith.constant 28 : index
    %91 = vector.load %arg9[%c0_106, %c28] : memref<128x36xf32, #tpu.memory_space<vmem>>, vector<128x4xf32>
    tpu.vector_store %arg9[%c0_106, %c28], %90 {strides = array<i32>} : memref<128x36xf32, #tpu.memory_space<vmem>>, vector<128x4xf32>,
    %c3_107 = arith.constant 3 : index
    %c0_108 = arith.constant 0 : index
    %c1_109 = arith.constant 1 : index
    %c8_110 = arith.constant 8 : index
    %c0_111 = arith.constant 0 : index
    %92 = vector.load %arg7[%c3_107, %c0_108, %c1_109, %c8_110, %c0_111] : memref<4x2x9x16x4xf32, #tpu.memory_space<vmem>>, vector<1x2x8x8x4xf32>
    %93 = vector.shape_cast %92 : vector<1x2x8x8x4xf32> to vector<2x8x8x4xf32>
    %94 = vector.shape_cast %93 : vector<2x8x8x4xf32> to vector<128x4xf32>
    %c0_112 = arith.constant 0 : index
    %c32 = arith.constant 32 : index
    %95 = vector.load %arg9[%c0_112, %c32] : memref<128x36xf32, #tpu.memory_space<vmem>>, vector<128x4xf32>
    tpu.vector_store %arg9[%c0_112, %c32], %94 {strides = array<i32>} : memref<128x36xf32, #tpu.memory_space<vmem>>, vector<128x4xf32>,
    %c0_113 = arith.constant 0 : index
    %c0_114 = arith.constant 0 : index
    %96 = vector.load %arg9[%c0_113, %c0_114] : memref<128x36xf32, #tpu.memory_space<vmem>>, vector<128x36xf32>
    %c0_115 = arith.constant 0 : index
    %c0_116 = arith.constant 0 : index
    %97 = vector.load %arg1[%c0_115, %c0_116] : memref<36x8xf32, #tpu.memory_space<vmem>>, vector<36x8xf32>
    %cst_117 = arith.constant dense<0.000000e+00> : vector<128x8xf32>
    %98 = tpu.matmul %96, %97, %cst_117 {dimension_numbers = #tpu.dot_dimension_numbers<[1], [0], [0], [1], [0, 0, 1, 1], [], []>} : vector<128x36xf32>, vector<36x8xf32>, vector<128x8xf32> -> vector<128x8xf32>
    %99 = vector.broadcast %2 : vector<1x8xf32> to vector<128x8xf32>
    %100 = arith.mulf %98, %99 : vector<128x8xf32>
    %101 = vector.broadcast %3 : vector<1x8xf32> to vector<128x8xf32>
    %102 = arith.addf %100, %101 : vector<128x8xf32>
    %cst_118 = arith.constant 0.000000e+00 : f32
    %103 = vector.broadcast %cst_118 : f32 to vector<128x8xf32>
    %104 = arith.maximumf %102, %103 : vector<128x8xf32>
    %cst_119 = arith.constant 0.000000e+00 : f32
    %105 = vector.broadcast %cst_119 : f32 to vector<2x1x10x8xf32>
    %c0_120 = arith.constant 0 : index
    %c0_121 = arith.constant 0 : index
    %c7_122 = arith.constant 7 : index
    %c0_123 = arith.constant 0 : index
    %106 = vector.load %arg8[%c0_120, %c0_121, %c7_122, %c0_123] : memref<2x10x17x8xf32, #tpu.memory_space<vmem>>, vector<2x1x10x8xf32>
    tpu.vector_store %arg8[%c0_120, %c0_121, %c7_122, %c0_123], %105 {strides = array<i32>} : memref<2x10x17x8xf32, #tpu.memory_space<vmem>>, vector<2x1x10x8xf32>,
    %cst_124 = arith.constant 0.000000e+00 : f32
    %107 = vector.broadcast %cst_124 : f32 to vector<2x1x10x8xf32>
    %c0_125 = arith.constant 0 : index
    %c9 = arith.constant 9 : index
    %c7_126 = arith.constant 7 : index
    %c0_127 = arith.constant 0 : index
    %108 = vector.load %arg8[%c0_125, %c9, %c7_126, %c0_127] : memref<2x10x17x8xf32, #tpu.memory_space<vmem>>, vector<2x1x10x8xf32>
    tpu.vector_store %arg8[%c0_125, %c9, %c7_126, %c0_127], %107 {strides = array<i32>} : memref<2x10x17x8xf32, #tpu.memory_space<vmem>>, vector<2x1x10x8xf32>,
    %cst_128 = arith.constant 0.000000e+00 : f32
    %109 = vector.broadcast %cst_128 : f32 to vector<2x10x1x8xf32>
    %c0_129 = arith.constant 0 : index
    %c0_130 = arith.constant 0 : index
    %c7_131 = arith.constant 7 : index
    %c0_132 = arith.constant 0 : index
    %110 = vector.load %arg8[%c0_129, %c0_130, %c7_131, %c0_132] : memref<2x10x17x8xf32, #tpu.memory_space<vmem>>, vector<2x10x1x8xf32>
    tpu.vector_store %arg8[%c0_129, %c0_130, %c7_131, %c0_132], %109 {strides = array<i32>} : memref<2x10x17x8xf32, #tpu.memory_space<vmem>>, vector<2x10x1x8xf32>,
    %cst_133 = arith.constant 0.000000e+00 : f32
    %111 = vector.broadcast %cst_133 : f32 to vector<2x10x1x8xf32>
    %c0_134 = arith.constant 0 : index
    %c0_135 = arith.constant 0 : index
    %c16_136 = arith.constant 16 : index
    %c0_137 = arith.constant 0 : index
    %112 = vector.load %arg8[%c0_134, %c0_135, %c16_136, %c0_137] : memref<2x10x17x8xf32, #tpu.memory_space<vmem>>, vector<2x10x1x8xf32>
    tpu.vector_store %arg8[%c0_134, %c0_135, %c16_136, %c0_137], %111 {strides = array<i32>} : memref<2x10x17x8xf32, #tpu.memory_space<vmem>>, vector<2x10x1x8xf32>,
    %113 = vector.shape_cast %104 : vector<128x8xf32> to vector<2x8x8x8xf32>
    %c0_138 = arith.constant 0 : index
    %c1_139 = arith.constant 1 : index
    %c8_140 = arith.constant 8 : index
    %c0_141 = arith.constant 0 : index
    %114 = vector.load %arg8[%c0_138, %c1_139, %c8_140, %c0_141] : memref<2x10x17x8xf32, #tpu.memory_space<vmem>>, vector<2x8x8x8xf32>
    tpu.vector_store %arg8[%c0_138, %c1_139, %c8_140, %c0_141], %113 {strides = array<i32>} : memref<2x10x17x8xf32, #tpu.memory_space<vmem>>, vector<2x8x8x8xf32>,
    %c0_142 = arith.constant 0 : index
    %c0_143 = arith.constant 0 : index
    %c7_144 = arith.constant 7 : index
    %c0_145 = arith.constant 0 : index
    %115 = vector.load %arg8[%c0_142, %c0_143, %c7_144, %c0_145] : memref<2x10x17x8xf32, #tpu.memory_space<vmem>>, vector<2x8x8x8xf32>
    %116 = vector.shape_cast %115 : vector<2x8x8x8xf32> to vector<128x8xf32>
    %c0_146 = arith.constant 0 : index
    %c0_147 = arith.constant 0 : index
    %117 = vector.load %arg10[%c0_146, %c0_147] : memref<128x76xf32, #tpu.memory_space<vmem>>, vector<128x8xf32>
    tpu.vector_store %arg10[%c0_146, %c0_147], %116 {strides = array<i32>} : memref<128x76xf32, #tpu.memory_space<vmem>>, vector<128x8xf32>,
    %c0_148 = arith.constant 0 : index
    %c0_149 = arith.constant 0 : index
    %c8_150 = arith.constant 8 : index
    %c0_151 = arith.constant 0 : index
    %118 = vector.load %arg8[%c0_148, %c0_149, %c8_150, %c0_151] : memref<2x10x17x8xf32, #tpu.memory_space<vmem>>, vector<2x8x8x8xf32>
    %119 = vector.shape_cast %118 : vector<2x8x8x8xf32> to vector<128x8xf32>
    %c0_152 = arith.constant 0 : index
    %c8_153 = arith.constant 8 : index
    %120 = vector.load %arg10[%c0_152, %c8_153] : memref<128x76xf32, #tpu.memory_space<vmem>>, vector<128x8xf32>
    tpu.vector_store %arg10[%c0_152, %c8_153], %119 {strides = array<i32>} : memref<128x76xf32, #tpu.memory_space<vmem>>, vector<128x8xf32>,
    %c0_154 = arith.constant 0 : index
    %c0_155 = arith.constant 0 : index
    %c9_156 = arith.constant 9 : index
    %c0_157 = arith.constant 0 : index
    %121 = vector.load %arg8[%c0_154, %c0_155, %c9_156, %c0_157] : memref<2x10x17x8xf32, #tpu.memory_space<vmem>>, vector<2x8x8x8xf32>
    %122 = vector.shape_cast %121 : vector<2x8x8x8xf32> to vector<128x8xf32>
    %c0_158 = arith.constant 0 : index
    %c16_159 = arith.constant 16 : index
    %123 = vector.load %arg10[%c0_158, %c16_159] : memref<128x76xf32, #tpu.memory_space<vmem>>, vector<128x8xf32>
    tpu.vector_store %arg10[%c0_158, %c16_159], %122 {strides = array<i32>} : memref<128x76xf32, #tpu.memory_space<vmem>>, vector<128x8xf32>,
    %c0_160 = arith.constant 0 : index
    %c1_161 = arith.constant 1 : index
    %c7_162 = arith.constant 7 : index
    %c0_163 = arith.constant 0 : index
    %124 = vector.load %arg8[%c0_160, %c1_161, %c7_162, %c0_163] : memref<2x10x17x8xf32, #tpu.memory_space<vmem>>, vector<2x8x8x8xf32>
    %125 = vector.shape_cast %124 : vector<2x8x8x8xf32> to vector<128x8xf32>
    %c0_164 = arith.constant 0 : index
    %c24_165 = arith.constant 24 : index
    %126 = vector.load %arg10[%c0_164, %c24_165] : memref<128x76xf32, #tpu.memory_space<vmem>>, vector<128x8xf32>
    tpu.vector_store %arg10[%c0_164, %c24_165], %125 {strides = array<i32>} : memref<128x76xf32, #tpu.memory_space<vmem>>, vector<128x8xf32>,
    %c0_166 = arith.constant 0 : index
    %c1_167 = arith.constant 1 : index
    %c8_168 = arith.constant 8 : index
    %c0_169 = arith.constant 0 : index
    %127 = vector.load %arg8[%c0_166, %c1_167, %c8_168, %c0_169] : memref<2x10x17x8xf32, #tpu.memory_space<vmem>>, vector<2x8x8x8xf32>
    %128 = vector.shape_cast %127 : vector<2x8x8x8xf32> to vector<128x8xf32>
    %c0_170 = arith.constant 0 : index
    %c32_171 = arith.constant 32 : index
    %129 = vector.load %arg10[%c0_170, %c32_171] : memref<128x76xf32, #tpu.memory_space<vmem>>, vector<128x8xf32>
    tpu.vector_store %arg10[%c0_170, %c32_171], %128 {strides = array<i32>} : memref<128x76xf32, #tpu.memory_space<vmem>>, vector<128x8xf32>,
    %c0_172 = arith.constant 0 : index
    %c1_173 = arith.constant 1 : index
    %c9_174 = arith.constant 9 : index
    %c0_175 = arith.constant 0 : index
    %130 = vector.load %arg8[%c0_172, %c1_173, %c9_174, %c0_175] : memref<2x10x17x8xf32, #tpu.memory_space<vmem>>, vector<2x8x8x8xf32>
    %131 = vector.shape_cast %130 : vector<2x8x8x8xf32> to vector<128x8xf32>
    %c0_176 = arith.constant 0 : index
    %c40 = arith.constant 40 : index
    %132 = vector.load %arg10[%c0_176, %c40] : memref<128x76xf32, #tpu.memory_space<vmem>>, vector<128x8xf32>
    tpu.vector_store %arg10[%c0_176, %c40], %131 {strides = array<i32>} : memref<128x76xf32, #tpu.memory_space<vmem>>, vector<128x8xf32>,
    %c0_177 = arith.constant 0 : index
    %c2_178 = arith.constant 2 : index
    %c7_179 = arith.constant 7 : index
    %c0_180 = arith.constant 0 : index
    %133 = vector.load %arg8[%c0_177, %c2_178, %c7_179, %c0_180] : memref<2x10x17x8xf32, #tpu.memory_space<vmem>>, vector<2x8x8x8xf32>
    %134 = vector.shape_cast %133 : vector<2x8x8x8xf32> to vector<128x8xf32>
    %c0_181 = arith.constant 0 : index
    %c48 = arith.constant 48 : index
    %135 = vector.load %arg10[%c0_181, %c48] : memref<128x76xf32, #tpu.memory_space<vmem>>, vector<128x8xf32>
    tpu.vector_store %arg10[%c0_181, %c48], %134 {strides = array<i32>} : memref<128x76xf32, #tpu.memory_space<vmem>>, vector<128x8xf32>,
    %c0_182 = arith.constant 0 : index
    %c2_183 = arith.constant 2 : index
    %c8_184 = arith.constant 8 : index
    %c0_185 = arith.constant 0 : index
    %136 = vector.load %arg8[%c0_182, %c2_183, %c8_184, %c0_185] : memref<2x10x17x8xf32, #tpu.memory_space<vmem>>, vector<2x8x8x8xf32>
    %137 = vector.shape_cast %136 : vector<2x8x8x8xf32> to vector<128x8xf32>
    %c0_186 = arith.constant 0 : index
    %c56 = arith.constant 56 : index
    %138 = vector.load %arg10[%c0_186, %c56] : memref<128x76xf32, #tpu.memory_space<vmem>>, vector<128x8xf32>
    tpu.vector_store %arg10[%c0_186, %c56], %137 {strides = array<i32>} : memref<128x76xf32, #tpu.memory_space<vmem>>, vector<128x8xf32>,
    %c0_187 = arith.constant 0 : index
    %c2_188 = arith.constant 2 : index
    %c9_189 = arith.constant 9 : index
    %c0_190 = arith.constant 0 : index
    %139 = vector.load %arg8[%c0_187, %c2_188, %c9_189, %c0_190] : memref<2x10x17x8xf32, #tpu.memory_space<vmem>>, vector<2x8x8x8xf32>
    %140 = vector.shape_cast %139 : vector<2x8x8x8xf32> to vector<128x8xf32>
    %c0_191 = arith.constant 0 : index
    %c64 = arith.constant 64 : index
    %141 = vector.load %arg10[%c0_191, %c64] : memref<128x76xf32, #tpu.memory_space<vmem>>, vector<128x8xf32>
    tpu.vector_store %arg10[%c0_191, %c64], %140 {strides = array<i32>} : memref<128x76xf32, #tpu.memory_space<vmem>>, vector<128x8xf32>,
    %c0_192 = arith.constant 0 : index
    %c0_193 = arith.constant 0 : index
    %c0_194 = arith.constant 0 : index
    %c0_195 = arith.constant 0 : index
    %c0_196 = arith.constant 0 : index
    %142 = vector.load %arg0[%c0_192, %c0_193, %c0_194, %c0_195, %c0_196] : memref<4x2x8x8x4xf32, #tpu.memory_space<vmem>>, vector<1x2x8x8x4xf32>
    %143 = vector.shape_cast %142 : vector<1x2x8x8x4xf32> to vector<2x8x8x4xf32>
    %144 = vector.shape_cast %143 : vector<2x8x8x4xf32> to vector<128x4xf32>
    %c0_197 = arith.constant 0 : index
    %c72 = arith.constant 72 : index
    %145 = vector.load %arg10[%c0_197, %c72] : memref<128x76xf32, #tpu.memory_space<vmem>>, vector<128x4xf32>
    tpu.vector_store %arg10[%c0_197, %c72], %144 {strides = array<i32>} : memref<128x76xf32, #tpu.memory_space<vmem>>, vector<128x4xf32>,
    %c0_198 = arith.constant 0 : index
    %c0_199 = arith.constant 0 : index
    %146 = vector.load %arg10[%c0_198, %c0_199] : memref<128x76xf32, #tpu.memory_space<vmem>>, vector<128x76xf32>
    %c0_200 = arith.constant 0 : index
    %c0_201 = arith.constant 0 : index
    %147 = vector.load %arg2[%c0_200, %c0_201] : memref<76x8xf32, #tpu.memory_space<vmem>>, vector<76x8xf32>
    %cst_202 = arith.constant dense<0.000000e+00> : vector<128x8xf32>
    %148 = tpu.matmul %146, %147, %cst_202 {dimension_numbers = #tpu.dot_dimension_numbers<[1], [0], [0], [1], [0, 0, 1, 1], [], []>} : vector<128x76xf32>, vector<76x8xf32>, vector<128x8xf32> -> vector<128x8xf32>
    %149 = tpu.transpose %148, [1, 0] : vector<128x8xf32> -> vector<8x128xf32>
    %c0_203 = arith.constant 0 : index
    %c0_204 = arith.constant 0 : index
    %150 = vector.load %arg5[%c0_203, %c0_204] : memref<8x1xf32, #tpu.memory_space<vmem>>, vector<8x1xf32>
    %151 = vector.broadcast %150 : vector<8x1xf32> to vector<8x128xf32>
    %152 = arith.addf %149, %151 : vector<8x128xf32>
    %c0_205 = arith.constant 0 : index
    %c0_206 = arith.constant 0 : index
    %153 = vector.load %arg6[%c0_205, %c0_206] : memref<8x128xf32, #tpu.memory_space<vmem>>, vector<8x128xf32>
    tpu.vector_store %arg6[%c0_205, %c0_206], %152 {strides = array<i32>} : memref<8x128xf32, #tpu.memory_space<vmem>>, vector<8x128xf32>,
    return
  }
}

</mosaic_0001>

<llo_original>
// kernel: tpu_custom_call.1
$region0: #{tpu_custom_call.1}
  #allocation0 [shape = 'u32[]', space=smem, size = 0x4, offset = 0x4, fixed_abs, tag = 'smem constant byte address 0x4 - core index']
  #allocation1 [shape = 'u32[144,128]{1,0:T(1,128)}', space=vmem, size = 0x12000, scoped, tag = 'internal scratch']
  #allocation2 [shape = 'f32[4,2,9,16,4]{4,3,2,1,0:T(8,128)}', space=vmem, size = 0x90000, scoped, tag = 'scratch operand']
  #allocation3 [shape = 'f32[2,10,17,8]{3,2,1,0:T(8,128)}', space=vmem, size = 0x3c000, scoped, tag = 'scratch operand']
  #allocation4 [shape = 'f32[128,36]{1,0:T(8,128)}', space=vmem, size = 0x10000, scoped, tag = 'scratch operand']
  #allocation5 [shape = 'f32[128,76]{1,0:T(8,128)}', space=vmem, size = 0x10000, scoped, tag = 'scratch operand']
  %s0 = inlined_call_operand.vmem [shape: f32[4,2,8,8,4], index: 0, kind: input, shape index: {}]
  %s1 = inlined_call_operand.vmem [shape: f32[36,8], index: 1, kind: input, shape index: {}]
  %s2 = inlined_call_operand.vmem [shape: f32[76,8], index: 2, kind: input, shape index: {}]
  %s3 = inlined_call_operand.vmem [shape: f32[2,4], index: 3, kind: input, shape index: {}]
  %s4 = inlined_call_operand.vmem [shape: f32[2,8], index: 4, kind: input, shape index: {}]
  %s5 = inlined_call_operand.vmem [shape: f32[8,1], index: 5, kind: input, shape index: {}]
  %s6 = inlined_call_operand.hbm [shape: f32[8,128], index: 6, kind: output, shape index: {}]
  %s7 = sld [smem:[#allocation0]]
  $region34: #{tpu_custom_call.1} parent=0
    _
  %s9 = ssub.s32 1, %s7
  %s10 = scalar_select 0, %s9, %s7
  $region1: #{tpu_custom_call.1} parent=0
    #allocation6 [shape = 'u8[4096]{0}', space=vmem, size = 0x1000, scoped, tag = 'output window, operand 0, single buffered']
    #allocation7 [shape = 's32[1]{0}', space=sflag, size = 0x4, scoped, tag = 'scoped memory for tpu_custom_call.1']
    %11 = vsyncpa [#allocation7], 0
    // Predicated region
    $region2: #{tpu_custom_call.1} parent=1 // pred_check
      _
    $region3: #{tpu_custom_call.1} parent=1 // pred_check_branch
      %13 = sbr.rel (0) target = $region5
    $region4: #{tpu_custom_call.1} parent=1 // pred_region
      _
    $region5: #{tpu_custom_call.1} parent=1 // pred_fallthru
      _
    // Predicated region
    $region6: #{tpu_custom_call.1} parent=1 // pred_check
      _
    $region7: #{tpu_custom_call.1} parent=1 // pred_check_branch
      %15 = sbr.rel (0) target = $region9
    $region8: #{tpu_custom_call.1} parent=1 // pred_region
      _
    $region9: #{tpu_custom_call.1} parent=1 // pred_fallthru
      _
    // Predicated region
    $region10: #{tpu_custom_call.1} parent=1 // pred_check
      _
    $region11: #{tpu_custom_call.1} parent=1 // pred_check_branch
      %17 = sbr.rel (0) target = $region13
    $region12: #{tpu_custom_call.1} parent=1 // pred_region
      _
    $region13: #{tpu_custom_call.1} parent=1 // pred_fallthru
      _
    // Predicated region
    $region14: #{tpu_custom_call.1} parent=1 // pred_check
      _
    $region15: #{tpu_custom_call.1} parent=1 // pred_check_branch
      %19 = sbr.rel (0) target = $region17
    $region16: #{tpu_custom_call.1} parent=1 // pred_region
      _
    $region17: #{tpu_custom_call.1} parent=1 // pred_fallthru
      _
    // Predicated region
    $region18: #{tpu_custom_call.1} parent=1 // pred_check
      _
    $region19: #{tpu_custom_call.1} parent=1 // pred_check_branch
      %21 = sbr.rel (0) target = $region21
    $region20: #{tpu_custom_call.1} parent=1 // pred_region
      _
    $region21: #{tpu_custom_call.1} parent=1 // pred_fallthru
      _
    // Predicated region
    $region22: #{tpu_custom_call.1} parent=1 // pred_check
      _
    $region23: #{tpu_custom_call.1} parent=1 // pred_check_branch
      %23 = sbr.rel (0) target = $region25
    $region24: #{tpu_custom_call.1} parent=1 // pred_region
      _
    $region25: #{tpu_custom_call.1} parent=1 // pred_fallthru
      _
    %v24 = vld [vmem:[%s3] sm:$0x1]
    %v25 = vld [vmem:[%s3 + $0x1] sm:$0x1]
    %v26 = vld [vmem:[%s4] sm:$0x1]
    %v27 = vld [vmem:[%s4 + $0x1] sm:$0x1]
    %vm28 = vcmask 31744
    %29 = vst.msk [vmem:[#allocation2 + $0x7] sm:$0xff] %vm28, 0.0
    %vm30 = vcmask 24576
    %31 = vst.msk [vmem:[#allocation2 + $0xf] sm:$0x1] %vm30, 0.0
    %32 = vst.msk [vmem:[#allocation2 + $0x97] sm:$0xff] %vm28, 0.0
    %33 = vst.msk [vmem:[#allocation2 + $0x9f] sm:$0x1] %vm30, 0.0
    %34 = vst.msk [vmem:[#allocation2 + $0x127] sm:$0xff] %vm28, 0.0
    %35 = vst.msk [vmem:[#allocation2 + $0x12f] sm:$0x1] %vm30, 0.0
    %36 = vst.msk [vmem:[#allocation2 + $0x1b7] sm:$0xff] %vm28, 0.0
    %37 = vst.msk [vmem:[#allocation2 + $0x1bf] sm:$0x1] %vm30, 0.0
    %38 = vst.msk [vmem:[#allocation2 + $0x247] sm:$0xff] %vm28, 0.0
    %39 = vst.msk [vmem:[#allocation2 + $0x24f] sm:$0x1] %vm30, 0.0
    %40 = vst.msk [vmem:[#allocation2 + $0x2d7] sm:$0xff] %vm28, 0.0
    %41 = vst.msk [vmem:[#allocation2 + $0x2df] sm:$0x1] %vm30, 0.0
    %42 = vst.msk [vmem:[#allocation2 + $0x367] sm:$0xff] %vm28, 0.0
    %43 = vst.msk [vmem:[#allocation2 + $0x36f] sm:$0x1] %vm30, 0.0
    %44 = vst.msk [vmem:[#allocation2 + $0x3f7] sm:$0xff] %vm28, 0.0
    %45 = vst.msk [vmem:[#allocation2 + $0x3ff] sm:$0x1] %vm30, 0.0
    %46 = vst.msk [vmem:[#allocation2 + $0x7] sm:$0x1] %vm30, 0.0
    %47 = vst.msk [vmem:[#allocation2 + $0x17] sm:$0x1] %vm30, 0.0
    %48 = vst.msk [vmem:[#allocation2 + $0x27] sm:$0x1] %vm30, 0.0
    %49 = vst.msk [vmem:[#allocation2 + $0x37] sm:$0x1] %vm30, 0.0
    %50 = vst.msk [vmem:[#allocation2 + $0x47] sm:$0x1] %vm30, 0.0
    %51 = vst.msk [vmem:[#allocation2 + $0x57] sm:$0x1] %vm30, 0.0
    %52 = vst.msk [vmem:[#allocation2 + $0x67] sm:$0x1] %vm30, 0.0
    %53 = vst.msk [vmem:[#allocation2 + $0x77] sm:$0x1] %vm30, 0.0
    %54 = vst.msk [vmem:[#allocation2 + $0x87] sm:$0x1] %vm30, 0.0
    %55 = vst.msk [vmem:[#allocation2 + $0x97] sm:$0x1] %vm30, 0.0
    %56 = vst.msk [vmem:[#allocation2 + $0xa7] sm:$0x1] %vm30, 0.0
    %57 = vst.msk [vmem:[#allocation2 + $0xb7] sm:$0x1] %vm30, 0.0
    %58 = vst.msk [vmem:[#allocation2 + $0xc7] sm:$0x1] %vm30, 0.0
    %59 = vst.msk [vmem:[#allocation2 + $0xd7] sm:$0x1] %vm30, 0.0
    %60 = vst.msk [vmem:[#allocation2 + $0xe7] sm:$0x1] %vm30, 0.0
    %61 = vst.msk [vmem:[#allocation2 + $0xf7] sm:$0x1] %vm30, 0.0
    %62 = vst.msk [vmem:[#allocation2 + $0x107] sm:$0x1] %vm30, 0.0
    %63 = vst.msk [vmem:[#allocation2 + $0x117] sm:$0x1] %vm30, 0.0
    %64 = vst.msk [vmem:[#allocation2 + $0x127] sm:$0x1] %vm30, 0.0
    %65 = vst.msk [vmem:[#allocation2 + $0x137] sm:$0x1] %vm30, 0.0
    %66 = vst.msk [vmem:[#allocation2 + $0x147] sm:$0x1] %vm30, 0.0
    %67 = vst.msk [vmem:[#allocation2 + $0x157] sm:$0x1] %vm30, 0.0
    %68 = vst.msk [vmem:[#allocation2 + $0x167] sm:$0x1] %vm30, 0.0
    %69 = vst.msk [vmem:[#allocation2 + $0x177] sm:$0x1] %vm30, 0.0
    %70 = vst.msk [vmem:[#allocation2 + $0x187] sm:$0x1] %vm30, 0.0
    %71 = vst.msk [vmem:[#allocation2 + $0x197] sm:$0x1] %vm30, 0.0
    %72 = vst.msk [vmem:[#allocation2 + $0x1a7] sm:$0x1] %vm30, 0.0
    %73 = vst.msk [vmem:[#allocation2 + $0x1b7] sm:$0x1] %vm30, 0.0
    %74 = vst.msk [vmem:[#allocation2 + $0x1c7] sm:$0x1] %vm30, 0.0
    %75 = vst.msk [vmem:[#allocation2 + $0x1d7] sm:$0x1] %vm30, 0.0
    %76 = vst.msk [vmem:[#allocation2 + $0x1e7] sm:$0x1] %vm30, 0.0
    %77 = vst.msk [vmem:[#allocation2 + $0x1f7] sm:$0x1] %vm30, 0.0
    %78 = vst.msk [vmem:[#allocation2 + $0x207] sm:$0x1] %vm30, 0.0
    %79 = vst.msk [vmem:[#allocation2 + $0x217] sm:$0x1] %vm30, 0.0
    %80 = vst.msk [vmem:[#allocation2 + $0x227] sm:$0x1] %vm30, 0.0
    %81 = vst.msk [vmem:[#allocation2 + $0x237] sm:$0x1] %vm30, 0.0
    %82 = vst.msk [vmem:[#allocation2 + $0x247] sm:$0x1] %vm30, 0.0
    %83 = vst.msk [vmem:[#allocation2 + $0x257] sm:$0x1] %vm30, 0.0
    %84 = vst.msk [vmem:[#allocation2 + $0x267] sm:$0x1] %vm30, 0.0
    %85 = vst.msk [vmem:[#allocation2 + $0x277] sm:$0x1] %vm30, 0.0
    %86 = vst.msk [vmem:[#allocation2 + $0x287] sm:$0x1] %vm30, 0.0
    %87 = vst.msk [vmem:[#allocation2 + $0x297] sm:$0x1] %vm30, 0.0
    %88 = vst.msk [vmem:[#allocation2 + $0x2a7] sm:$0x1] %vm30, 0.0
    %89 = vst.msk [vmem:[#allocation2 + $0x2b7] sm:$0x1] %vm30, 0.0
    %90 = vst.msk [vmem:[#allocation2 + $0x2c7] sm:$0x1] %vm30, 0.0
    %91 = vst.msk [vmem:[#allocation2 + $0x2d7] sm:$0x1] %vm30, 0.0
    %92 = vst.msk [vmem:[#allocation2 + $0x2e7] sm:$0x1] %vm30, 0.0
    %93 = vst.msk [vmem:[#allocation2 + $0x2f7] sm:$0x1] %vm30, 0.0
    %94 = vst.msk [vmem:[#allocation2 + $0x307] sm:$0x1] %vm30, 0.0
    %95 = vst.msk [vmem:[#allocation2 + $0x317] sm:$0x1] %vm30, 0.0
    %96 = vst.msk [vmem:[#allocation2 + $0x327] sm:$0x1] %vm30, 0.0
    %97 = vst.msk [vmem:[#allocation2 + $0x337] sm:$0x1] %vm30, 0.0
    %98 = vst.msk [vmem:[#allocation2 + $0x347] sm:$0x1] %vm30, 0.0
    %99 = vst.msk [vmem:[#allocation2 + $0x357] sm:$0x1] %vm30, 0.0
    %100 = vst.msk [vmem:[#allocation2 + $0x367] sm:$0x1] %vm30, 0.0
    %101 = vst.msk [vmem:[#allocation2 + $0x377] sm:$0x1] %vm30, 0.0
    %102 = vst.msk [vmem:[#allocation2 + $0x387] sm:$0x1] %vm30, 0.0
    %103 = vst.msk [vmem:[#allocation2 + $0x397] sm:$0x1] %vm30, 0.0
    %104 = vst.msk [vmem:[#allocation2 + $0x3a7] sm:$0x1] %vm30, 0.0
    %105 = vst.msk [vmem:[#allocation2 + $0x3b7] sm:$0x1] %vm30, 0.0
    %106 = vst.msk [vmem:[#allocation2 + $0x3c7] sm:$0x1] %vm30, 0.0
    %107 = vst.msk [vmem:[#allocation2 + $0x3d7] sm:$0x1] %vm30, 0.0
    %108 = vst.msk [vmem:[#allocation2 + $0x3e7] sm:$0x1] %vm30, 0.0
    %109 = vst.msk [vmem:[#allocation2 + $0x3f7] sm:$0x1] %vm30, 0.0
    %110 = vst.msk [vmem:[#allocation2 + $0x407] sm:$0x1] %vm30, 0.0
    %111 = vst.msk [vmem:[#allocation2 + $0x417] sm:$0x1] %vm30, 0.0
    %112 = vst.msk [vmem:[#allocation2 + $0x427] sm:$0x1] %vm30, 0.0
    %113 = vst.msk [vmem:[#allocation2 + $0x437] sm:$0x1] %vm30, 0.0
    %114 = vst.msk [vmem:[#allocation2 + $0x447] sm:$0x1] %vm30, 0.0
    %115 = vst.msk [vmem:[#allocation2 + $0x457] sm:$0x1] %vm30, 0.0
    %116 = vst.msk [vmem:[#allocation2 + $0x467] sm:$0x1] %vm30, 0.0
    %117 = vst.msk [vmem:[#allocation2 + $0x477] sm:$0x1] %vm30, 0.0
    %v118 = vld [vmem:[%s0] sm:$0xff]
    %v119 = vld [vmem:[%s0 + $0x8] sm:$0xff]
    %v120 = vld [vmem:[%s0 + $0x10] sm:$0xff]
    %v121 = vld [vmem:[%s0 + $0x18] sm:$0xff]
    %v122 = vld [vmem:[%s0 + $0x20] sm:$0xff]
    %v123 = vld [vmem:[%s0 + $0x28] sm:$0xff]
    %v124 = vld [vmem:[%s0 + $0x30] sm:$0xff]
    %v125 = vld [vmem:[%s0 + $0x38] sm:$0xff]
    %v126 = vld [vmem:[%s0 + $0x40] sm:$0xff]
    %v127 = vld [vmem:[%s0 + $0x48] sm:$0xff]
    %v128 = vld [vmem:[%s0 + $0x50] sm:$0xff]
    %v129 = vld [vmem:[%s0 + $0x58] sm:$0xff]
    %v130 = vld [vmem:[%s0 + $0x60] sm:$0xff]
    %v131 = vld [vmem:[%s0 + $0x68] sm:$0xff]
    %v132 = vld [vmem:[%s0 + $0x70] sm:$0xff]
    %v133 = vld [vmem:[%s0 + $0x78] sm:$0xff]
    %v134 = vlaneseq
    %v135 = vshrl.u32 %v134, 7
    %v136 = vsub.s32 0, %v135
    %v137 = vrot.slane %v24, %v136
    %v138 = vmul.f32 %v118, %v137
    %v139 = vmul.f32 %v119, %v137
    %v140 = vmul.f32 %v120, %v137
    %v141 = vmul.f32 %v121, %v137
    %v142 = vmul.f32 %v122, %v137
    %v143 = vmul.f32 %v123, %v137
    %v144 = vmul.f32 %v124, %v137
    %v145 = vmul.f32 %v125, %v137
    %v146 = vmul.f32 %v126, %v137
    %v147 = vmul.f32 %v127, %v137
    %v148 = vmul.f32 %v128, %v137
    %v149 = vmul.f32 %v129, %v137
    %v150 = vmul.f32 %v130, %v137
    %v151 = vmul.f32 %v131, %v137
    %v152 = vmul.f32 %v132, %v137
    %v153 = vmul.f32 %v133, %v137
    %v154 = vlaneseq
    %v155 = vshrl.u32 %v154, 7
    %v156 = vsub.s32 0, %v155
    %v157 = vrot.slane %v25, %v156
    %v158 = vadd.f32 %v138, %v157
    %v159 = vadd.f32 %v139, %v157
    %v160 = vadd.f32 %v140, %v157
    %v161 = vadd.f32 %v141, %v157
    %v162 = vadd.f32 %v142, %v157
    %v163 = vadd.f32 %v143, %v157
    %v164 = vadd.f32 %v144, %v157
    %v165 = vadd.f32 %v145, %v157
    %v166 = vadd.f32 %v146, %v157
    %v167 = vadd.f32 %v147, %v157
    %v168 = vadd.f32 %v148, %v157
    %v169 = vadd.f32 %v149, %v157
    %v170 = vadd.f32 %v150, %v157
    %v171 = vadd.f32 %v151, %v157
    %v172 = vadd.f32 %v152, %v157
    %v173 = vadd.f32 %v153, %v157
    %v174 = vmax.f32 %v158, 0.0
    %v175 = vmax.f32 %v159, 0.0
    %v176 = vmax.f32 %v160, 0.0
    %v177 = vmax.f32 %v161, 0.0
    %v178 = vmax.f32 %v162, 0.0
    %v179 = vmax.f32 %v163, 0.0
    %v180 = vmax.f32 %v164, 0.0
    %v181 = vmax.f32 %v165, 0.0
    %v182 = vmax.f32 %v166, 0.0
    %v183 = vmax.f32 %v167, 0.0
    %v184 = vmax.f32 %v168, 0.0
    %v185 = vmax.f32 %v169, 0.0
    %v186 = vmax.f32 %v170, 0.0
    %v187 = vmax.f32 %v171, 0.0
    %v188 = vmax.f32 %v172, 0.0
    %v189 = vmax.f32 %v173, 0.0
    %s190 = scalar_lea.vmem [#allocation2], 16
    %191 = vst.msk [vmem:[%s190 + $0x8] sm:$0xff] %vm28, %v174
    %192 = vst.msk [vmem:[%s190 + $0x18] sm:$0xff] %vm28, %v175
    %193 = vst.msk [vmem:[%s190 + $0x28] sm:$0xff] %vm28, %v176
    %194 = vst.msk [vmem:[%s190 + $0x38] sm:$0xff] %vm28, %v177
    %195 = vst.msk [vmem:[%s190 + $0x48] sm:$0xff] %vm28, %v178
    %196 = vst.msk [vmem:[%s190 + $0x58] sm:$0xff] %vm28, %v179
    %197 = vst.msk [vmem:[%s190 + $0x68] sm:$0xff] %vm28, %v180
    %198 = vst.msk [vmem:[%s190 + $0x78] sm:$0xff] %vm28, %v181
    %199 = vst.msk [vmem:[%s190 + $0x98] sm:$0xff] %vm28, %v182
    %200 = vst.msk [vmem:[%s190 + $0xa8] sm:$0xff] %vm28, %v183
    %201 = vst.msk [vmem:[%s190 + $0xb8] sm:$0xff] %vm28, %v184
    %202 = vst.msk [vmem:[%s190 + $0xc8] sm:$0xff] %vm28, %v185
    %203 = vst.msk [vmem:[%s190 + $0xd8] sm:$0xff] %vm28, %v186
    %204 = vst.msk [vmem:[%s190 + $0xe8] sm:$0xff] %vm28, %v187
    %205 = vst.msk [vmem:[%s190 + $0xf8] sm:$0xff] %vm28, %v188
    %206 = vst.msk [vmem:[%s190 + $0x108] sm:$0xff] %vm28, %v189
    %s207 = scalar_lea.vmem %s0, 128
    %v208 = vld [vmem:[%s207] sm:$0xff]
    %v209 = vld [vmem:[%s207 + $0x8] sm:$0xff]
    %v210 = vld [vmem:[%s207 + $0x10] sm:$0xff]
    %v211 = vld [vmem:[%s207 + $0x18] sm:$0xff]
    %v212 = vld [vmem:[%s207 + $0x20] sm:$0xff]
    %v213 = vld [vmem:[%s207 + $0x28] sm:$0xff]
    %v214 = vld [vmem:[%s207 + $0x30] sm:$0xff]
    %v215 = vld [vmem:[%s207 + $0x38] sm:$0xff]
    %v216 = vld [vmem:[%s207 + $0x40] sm:$0xff]
    %v217 = vld [vmem:[%s207 + $0x48] sm:$0xff]
    %v218 = vld [vmem:[%s207 + $0x50] sm:$0xff]
    %v219 = vld [vmem:[%s207 + $0x58] sm:$0xff]
    %v220 = vld [vmem:[%s207 + $0x60] sm:$0xff]
    %v221 = vld [vmem:[%s207 + $0x68] sm:$0xff]
    %v222 = vld [vmem:[%s207 + $0x70] sm:$0xff]
    %v223 = vld [vmem:[%s207 + $0x78] sm:$0xff]
    %v224 = vmul.f32 %v208, %v137
    %v225 = vmul.f32 %v209, %v137
    %v226 = vmul.f32 %v210, %v137
    %v227 = vmul.f32 %v211, %v137
    %v228 = vmul.f32 %v212, %v137
    %v229 = vmul.f32 %v213, %v137
    %v230 = vmul.f32 %v214, %v137
    %v231 = vmul.f32 %v215, %v137
    %v232 = vmul.f32 %v216, %v137
    %v233 = vmul.f32 %v217, %v137
    %v234 = vmul.f32 %v218, %v137
    %v235 = vmul.f32 %v219, %v137
    %v236 = vmul.f32 %v220, %v137
    %v237 = vmul.f32 %v221, %v137
    %v238 = vmul.f32 %v222, %v137
    %v239 = vmul.f32 %v223, %v137
    %v240 = vadd.f32 %v224, %v157
    %v241 = vadd.f32 %v225, %v157
    %v242 = vadd.f32 %v226, %v157
    %v243 = vadd.f32 %v227, %v157
    %v244 = vadd.f32 %v228, %v157
    %v245 = vadd.f32 %v229, %v157
    %v246 = vadd.f32 %v230, %v157
    %v247 = vadd.f32 %v231, %v157
    %v248 = vadd.f32 %v232, %v157
    %v249 = vadd.f32 %v233, %v157
    %v250 = vadd.f32 %v234, %v157
    %v251 = vadd.f32 %v235, %v157
    %v252 = vadd.f32 %v236, %v157
    %v253 = vadd.f32 %v237, %v157
    %v254 = vadd.f32 %v238, %v157
    %v255 = vadd.f32 %v239, %v157
    %v256 = vmax.f32 %v240, 0.0
    %v257 = vmax.f32 %v241, 0.0
    %v258 = vmax.f32 %v242, 0.0
    %v259 = vmax.f32 %v243, 0.0
    %v260 = vmax.f32 %v244, 0.0
    %v261 = vmax.f32 %v245, 0.0
    %v262 = vmax.f32 %v246, 0.0
    %v263 = vmax.f32 %v247, 0.0
    %v264 = vmax.f32 %v248, 0.0
    %v265 = vmax.f32 %v249, 0.0
    %v266 = vmax.f32 %v250, 0.0
    %v267 = vmax.f32 %v251, 0.0
    %v268 = vmax.f32 %v252, 0.0
    %v269 = vmax.f32 %v253, 0.0
    %v270 = vmax.f32 %v254, 0.0
    %v271 = vmax.f32 %v255, 0.0
    %s272 = scalar_lea.vmem [#allocation2], 304
    %273 = vst.msk [vmem:[%s272 + $0x8] sm:$0xff] %vm28, %v256
    %274 = vst.msk [vmem:[%s272 + $0x18] sm:$0xff] %vm28, %v257
    %275 = vst.msk [vmem:[%s272 + $0x28] sm:$0xff] %vm28, %v258
    %276 = vst.msk [vmem:[%s272 + $0x38] sm:$0xff] %vm28, %v259
    %277 = vst.msk [vmem:[%s272 + $0x48] sm:$0xff] %vm28, %v260
    %278 = vst.msk [vmem:[%s272 + $0x58] sm:$0xff] %vm28, %v261
    %279 = vst.msk [vmem:[%s272 + $0x68] sm:$0xff] %vm28, %v262
    %280 = vst.msk [vmem:[%s272 + $0x78] sm:$0xff] %vm28, %v263
    %281 = vst.msk [vmem:[%s272 + $0x98] sm:$0xff] %vm28, %v264
    %282 = vst.msk [vmem:[%s272 + $0xa8] sm:$0xff] %vm28, %v265
    %283 = vst.msk [vmem:[%s272 + $0xb8] sm:$0xff] %vm28, %v266
    %284 = vst.msk [vmem:[%s272 + $0xc8] sm:$0xff] %vm28, %v267
    %285 = vst.msk [vmem:[%s272 + $0xd8] sm:$0xff] %vm28, %v268
    %286 = vst.msk [vmem:[%s272 + $0xe8] sm:$0xff] %vm28, %v269
    %287 = vst.msk [vmem:[%s272 + $0xf8] sm:$0xff] %vm28, %v270
    %288 = vst.msk [vmem:[%s272 + $0x108] sm:$0xff] %vm28, %v271
    %s289 = scalar_lea.vmem %s0, 256
    %v290 = vld [vmem:[%s289] sm:$0xff]
    %v291 = vld [vmem:[%s289 + $0x8] sm:$0xff]
    %v292 = vld [vmem:[%s289 + $0x10] sm:$0xff]
    %v293 = vld [vmem:[%s289 + $0x18] sm:$0xff]
    %v294 = vld [vmem:[%s289 + $0x20] sm:$0xff]
    %v295 = vld [vmem:[%s289 + $0x28] sm:$0xff]
    %v296 = vld [vmem:[%s289 + $0x30] sm:$0xff]
    %v297 = vld [vmem:[%s289 + $0x38] sm:$0xff]
    %v298 = vld [vmem:[%s289 + $0x40] sm:$0xff]
    %v299 = vld [vmem:[%s289 + $0x48] sm:$0xff]
    %v300 = vld [vmem:[%s289 + $0x50] sm:$0xff]
    %v301 = vld [vmem:[%s289 + $0x58] sm:$0xff]
    %v302 = vld [vmem:[%s289 + $0x60] sm:$0xff]
    %v303 = vld [vmem:[%s289 + $0x68] sm:$0xff]
    %v304 = vld [vmem:[%s289 + $0x70] sm:$0xff]
    %v305 = vld [vmem:[%s289 + $0x78] sm:$0xff]
    %v306 = vmul.f32 %v290, %v137
    %v307 = vmul.f32 %v291, %v137
    %v308 = vmul.f32 %v292, %v137
    %v309 = vmul.f32 %v293, %v137
    %v310 = vmul.f32 %v294, %v137
    %v311 = vmul.f32 %v295, %v137
    %v312 = vmul.f32 %v296, %v137
    %v313 = vmul.f32 %v297, %v137
    %v314 = vmul.f32 %v298, %v137
    %v315 = vmul.f32 %v299, %v137
    %v316 = vmul.f32 %v300, %v137
    %v317 = vmul.f32 %v301, %v137
    %v318 = vmul.f32 %v302, %v137
    %v319 = vmul.f32 %v303, %v137
    %v320 = vmul.f32 %v304, %v137
    %v321 = vmul.f32 %v305, %v137
    %v322 = vadd.f32 %v306, %v157
    %v323 = vadd.f32 %v307, %v157
    %v324 = vadd.f32 %v308, %v157
    %v325 = vadd.f32 %v309, %v157
    %v326 = vadd.f32 %v310, %v157
    %v327 = vadd.f32 %v311, %v157
    %v328 = vadd.f32 %v312, %v157
    %v329 = vadd.f32 %v313, %v157
    %v330 = vadd.f32 %v314, %v157
    %v331 = vadd.f32 %v315, %v157
    %v332 = vadd.f32 %v316, %v157
    %v333 = vadd.f32 %v317, %v157
    %v334 = vadd.f32 %v318, %v157
    %v335 = vadd.f32 %v319, %v157
    %v336 = vadd.f32 %v320, %v157
    %v337 = vadd.f32 %v321, %v157
    %v338 = vmax.f32 %v322, 0.0
    %v339 = vmax.f32 %v323, 0.0
    %v340 = vmax.f32 %v324, 0.0
    %v341 = vmax.f32 %v325, 0.0
    %v342 = vmax.f32 %v326, 0.0
    %v343 = vmax.f32 %v327, 0.0
    %v344 = vmax.f32 %v328, 0.0
    %v345 = vmax.f32 %v329, 0.0
    %v346 = vmax.f32 %v330, 0.0
    %v347 = vmax.f32 %v331, 0.0
    %v348 = vmax.f32 %v332, 0.0
    %v349 = vmax.f32 %v333, 0.0
    %v350 = vmax.f32 %v334, 0.0
    %v351 = vmax.f32 %v335, 0.0
    %v352 = vmax.f32 %v336, 0.0
    %v353 = vmax.f32 %v337, 0.0
    %s354 = scalar_lea.vmem [#allocation2], 592
    %355 = vst.msk [vmem:[%s354 + $0x8] sm:$0xff] %vm28, %v338
    %356 = vst.msk [vmem:[%s354 + $0x18] sm:$0xff] %vm28, %v339
    %357 = vst.msk [vmem:[%s354 + $0x28] sm:$0xff] %vm28, %v340
    %358 = vst.msk [vmem:[%s354 + $0x38] sm:$0xff] %vm28, %v341
    %359 = vst.msk [vmem:[%s354 + $0x48] sm:$0xff] %vm28, %v342
    %360 = vst.msk [vmem:[%s354 + $0x58] sm:$0xff] %vm28, %v343
    %361 = vst.msk [vmem:[%s354 + $0x68] sm:$0xff] %vm28, %v344
    %362 = vst.msk [vmem:[%s354 + $0x78] sm:$0xff] %vm28, %v345
    %363 = vst.msk [vmem:[%s354 + $0x98] sm:$0xff] %vm28, %v346
    %364 = vst.msk [vmem:[%s354 + $0xa8] sm:$0xff] %vm28, %v347
    %365 = vst.msk [vmem:[%s354 + $0xb8] sm:$0xff] %vm28, %v348
    %366 = vst.msk [vmem:[%s354 + $0xc8] sm:$0xff] %vm28, %v349
    %367 = vst.msk [vmem:[%s354 + $0xd8] sm:$0xff] %vm28, %v350
    %368 = vst.msk [vmem:[%s354 + $0xe8] sm:$0xff] %vm28, %v351
    %369 = vst.msk [vmem:[%s354 + $0xf8] sm:$0xff] %vm28, %v352
    %370 = vst.msk [vmem:[%s354 + $0x108] sm:$0xff] %vm28, %v353
    %s371 = scalar_lea.vmem %s0, 384
    %v372 = vld [vmem:[%s371] sm:$0xff]
    %v373 = vld [vmem:[%s371 + $0x8] sm:$0xff]
    %v374 = vld [vmem:[%s371 + $0x10] sm:$0xff]
    %v375 = vld [vmem:[%s371 + $0x18] sm:$0xff]
    %v376 = vld [vmem:[%s371 + $0x20] sm:$0xff]
    %v377 = vld [vmem:[%s371 + $0x28] sm:$0xff]
    %v378 = vld [vmem:[%s371 + $0x30] sm:$0xff]
    %v379 = vld [vmem:[%s371 + $0x38] sm:$0xff]
    %v380 = vld [vmem:[%s371 + $0x40] sm:$0xff]
    %v381 = vld [vmem:[%s371 + $0x48] sm:$0xff]
    %v382 = vld [vmem:[%s371 + $0x50] sm:$0xff]
    %v383 = vld [vmem:[%s371 + $0x58] sm:$0xff]
    %v384 = vld [vmem:[%s371 + $0x60] sm:$0xff]
    %v385 = vld [vmem:[%s371 + $0x68] sm:$0xff]
    %v386 = vld [vmem:[%s371 + $0x70] sm:$0xff]
    %v387 = vld [vmem:[%s371 + $0x78] sm:$0xff]
    %v388 = vmul.f32 %v372, %v137
    %v389 = vmul.f32 %v373, %v137
    %v390 = vmul.f32 %v374, %v137
    %v391 = vmul.f32 %v375, %v137
    %v392 = vmul.f32 %v376, %v137
    %v393 = vmul.f32 %v377, %v137
    %v394 = vmul.f32 %v378, %v137
    %v395 = vmul.f32 %v379, %v137
    %v396 = vmul.f32 %v380, %v137
    %v397 = vmul.f32 %v381, %v137
    %v398 = vmul.f32 %v382, %v137
    %v399 = vmul.f32 %v383, %v137
    %v400 = vmul.f32 %v384, %v137
    %v401 = vmul.f32 %v385, %v137
    %v402 = vmul.f32 %v386, %v137
    %v403 = vmul.f32 %v387, %v137
    %v404 = vadd.f32 %v388, %v157
    %v405 = vadd.f32 %v389, %v157
    %v406 = vadd.f32 %v390, %v157
    %v407 = vadd.f32 %v391, %v157
    %v408 = vadd.f32 %v392, %v157
    %v409 = vadd.f32 %v393, %v157
    %v410 = vadd.f32 %v394, %v157
    %v411 = vadd.f32 %v395, %v157
    %v412 = vadd.f32 %v396, %v157
    %v413 = vadd.f32 %v397, %v157
    %v414 = vadd.f32 %v398, %v157
    %v415 = vadd.f32 %v399, %v157
    %v416 = vadd.f32 %v400, %v157
    %v417 = vadd.f32 %v401, %v157
    %v418 = vadd.f32 %v402, %v157
    %v419 = vadd.f32 %v403, %v157
    %v420 = vmax.f32 %v404, 0.0
    %v421 = vmax.f32 %v405, 0.0
    %v422 = vmax.f32 %v406, 0.0
    %v423 = vmax.f32 %v407, 0.0
    %v424 = vmax.f32 %v408, 0.0
    %v425 = vmax.f32 %v409, 0.0
    %v426 = vmax.f32 %v410, 0.0
    %v427 = vmax.f32 %v411, 0.0
    %v428 = vmax.f32 %v412, 0.0
    %v429 = vmax.f32 %v413, 0.0
    %v430 = vmax.f32 %v414, 0.0
    %v431 = vmax.f32 %v415, 0.0
    %v432 = vmax.f32 %v416, 0.0
    %v433 = vmax.f32 %v417, 0.0
    %v434 = vmax.f32 %v418, 0.0
    %v435 = vmax.f32 %v419, 0.0
    %s436 = scalar_lea.vmem [#allocation2], 880
    %437 = vst.msk [vmem:[%s436 + $0x8] sm:$0xff] %vm28, %v420
    %438 = vst.msk [vmem:[%s436 + $0x18] sm:$0xff] %vm28, %v421
    %439 = vst.msk [vmem:[%s436 + $0x28] sm:$0xff] %vm28, %v422
    %440 = vst.msk [vmem:[%s436 + $0x38] sm:$0xff] %vm28, %v423
    %441 = vst.msk [vmem:[%s436 + $0x48] sm:$0xff] %vm28, %v424
    %442 = vst.msk [vmem:[%s436 + $0x58] sm:$0xff] %vm28, %v425
    %443 = vst.msk [vmem:[%s436 + $0x68] sm:$0xff] %vm28, %v426
    %444 = vst.msk [vmem:[%s436 + $0x78] sm:$0xff] %vm28, %v427
    %445 = vst.msk [vmem:[%s436 + $0x98] sm:$0xff] %vm28, %v428
    %446 = vst.msk [vmem:[%s436 + $0xa8] sm:$0xff] %vm28, %v429
    %447 = vst.msk [vmem:[%s436 + $0xb8] sm:$0xff] %vm28, %v430
    %448 = vst.msk [vmem:[%s436 + $0xc8] sm:$0xff] %vm28, %v431
    %449 = vst.msk [vmem:[%s436 + $0xd8] sm:$0xff] %vm28, %v432
    %450 = vst.msk [vmem:[%s436 + $0xe8] sm:$0xff] %vm28, %v433
    %451 = vst.msk [vmem:[%s436 + $0xf8] sm:$0xff] %vm28, %v434
    %452 = vst.msk [vmem:[%s436 + $0x108] sm:$0xff] %vm28, %v435
    %s453 = scalar_lea.vmem [#allocation2], 864
    %v454 = vld [vmem:[%s453 + $0x7] sm:$0xff]
    %v455 = vld [vmem:[%s453 + $0x17] sm:$0xff]
    %v456 = vld [vmem:[%s453 + $0x27] sm:$0xff]
    %v457 = vld [vmem:[%s453 + $0x37] sm:$0xff]
    %v458 = vld [vmem:[%s453 + $0x47] sm:$0xff]
    %v459 = vld [vmem:[%s453 + $0x57] sm:$0xff]
    %v460 = vld [vmem:[%s453 + $0x67] sm:$0xff]
    %v461 = vld [vmem:[%s453 + $0x77] sm:$0xff]
    %v462 = vld [vmem:[%s453 + $0x97] sm:$0xff]
    %v463 = vld [vmem:[%s453 + $0xa7] sm:$0xff]
    %v464 = vld [vmem:[%s453 + $0xb7] sm:$0xff]
    %v465 = vld [vmem:[%s453 + $0xc7] sm:$0xff]
    %v466 = vld [vmem:[%s453 + $0xd7] sm:$0xff]
    %v467 = vld [vmem:[%s453 + $0xe7] sm:$0xff]
    %v468 = vld [vmem:[%s453 + $0xf7] sm:$0xff]
    %v469 = vld [vmem:[%s453 + $0x107] sm:$0xff]
    %470 = vst.msk [vmem:[#allocation4] sm:$0xff] %vm28, %v454
    %471 = vst.msk [vmem:[#allocation4 + $0x8] sm:$0xff] %vm28, %v455
    %472 = vst.msk [vmem:[#allocation4 + $0x10] sm:$0xff] %vm28, %v456
    %473 = vst.msk [vmem:[#allocation4 + $0x18] sm:$0xff] %vm28, %v457
    %474 = vst.msk [vmem:[#allocation4 + $0x20] sm:$0xff] %vm28, %v458
    %475 = vst.msk [vmem:[#allocation4 + $0x28] sm:$0xff] %vm28, %v459
    %476 = vst.msk [vmem:[#allocation4 + $0x30] sm:$0xff] %vm28, %v460
    %477 = vst.msk [vmem:[#allocation4 + $0x38] sm:$0xff] %vm28, %v461
    %478 = vst.msk [vmem:[#allocation4 + $0x40] sm:$0xff] %vm28, %v462
    %479 = vst.msk [vmem:[#allocation4 + $0x48] sm:$0xff] %vm28, %v463
    %480 = vst.msk [vmem:[#allocation4 + $0x50] sm:$0xff] %vm28, %v464
    %481 = vst.msk [vmem:[#allocation4 + $0x58] sm:$0xff] %vm28, %v465
    %482 = vst.msk [vmem:[#allocation4 + $0x60] sm:$0xff] %vm28, %v466
    %483 = vst.msk [vmem:[#allocation4 + $0x68] sm:$0xff] %vm28, %v467
    %484 = vst.msk [vmem:[#allocation4 + $0x70] sm:$0xff] %vm28, %v468
    %485 = vst.msk [vmem:[#allocation4 + $0x78] sm:$0xff] %vm28, %v469
    %s486 = scalar_lea.vmem [#allocation2], 576
    %v487 = vld [vmem:[%s486 + $0x8] sm:$0xff]
    %v488 = vld [vmem:[%s486 + $0x18] sm:$0xff]
    %v489 = vld [vmem:[%s486 + $0x28] sm:$0xff]
    %v490 = vld [vmem:[%s486 + $0x38] sm:$0xff]
    %v491 = vld [vmem:[%s486 + $0x48] sm:$0xff]
    %v492 = vld [vmem:[%s486 + $0x58] sm:$0xff]
    %v493 = vld [vmem:[%s486 + $0x68] sm:$0xff]
    %v494 = vld [vmem:[%s486 + $0x78] sm:$0xff]
    %v495 = vld [vmem:[%s486 + $0x98] sm:$0xff]
    %v496 = vld [vmem:[%s486 + $0xa8] sm:$0xff]
    %v497 = vld [vmem:[%s486 + $0xb8] sm:$0xff]
    %v498 = vld [vmem:[%s486 + $0xc8] sm:$0xff]
    %v499 = vld [vmem:[%s486 + $0xd8] sm:$0xff]
    %v500 = vld [vmem:[%s486 + $0xe8] sm:$0xff]
    %v501 = vld [vmem:[%s486 + $0xf8] sm:$0xff]
    %v502 = vld [vmem:[%s486 + $0x108] sm:$0xff]
    %519 = vrot.lane.b32.xlu0 %v487, 4
    %v520 = vpop.permute.xlu0 %519
    %521 = vrot.lane.b32.xlu0 %v488, 4
    %v522 = vpop.permute.xlu0 %521
    %523 = vrot.lane.b32.xlu0 %v489, 4
    %v524 = vpop.permute.xlu0 %523
    %525 = vrot.lane.b32.xlu0 %v490, 4
    %v526 = vpop.permute.xlu0 %525
    %527 = vrot.lane.b32.xlu0 %v491, 4
    %v528 = vpop.permute.xlu0 %527
    %529 = vrot.lane.b32.xlu0 %v492, 4
    %v530 = vpop.permute.xlu0 %529
    %531 = vrot.lane.b32.xlu0 %v493, 4
    %v532 = vpop.permute.xlu0 %531
    %533 = vrot.lane.b32.xlu0 %v494, 4
    %v534 = vpop.permute.xlu0 %533
    %535 = vrot.lane.b32.xlu0 %v495, 4
    %v536 = vpop.permute.xlu0 %535
    %537 = vrot.lane.b32.xlu0 %v496, 4
    %v538 = vpop.permute.xlu0 %537
    %539 = vrot.lane.b32.xlu0 %v497, 4
    %v540 = vpop.permute.xlu0 %539
    %541 = vrot.lane.b32.xlu0 %v498, 4
    %v542 = vpop.permute.xlu0 %541
    %543 = vrot.lane.b32.xlu0 %v499, 4
    %v544 = vpop.permute.xlu0 %543
    %545 = vrot.lane.b32.xlu0 %v500, 4
    %v546 = vpop.permute.xlu0 %545
    %547 = vrot.lane.b32.xlu0 %v501, 4
    %v548 = vpop.permute.xlu0 %547
    %549 = vrot.lane.b32.xlu0 %v502, 4
    %v550 = vpop.permute.xlu0 %549
    %vm567 = vcmask 64544
    %568 = vst.msk [vmem:[#allocation4] sm:$0xff] %vm567, %v520
    %569 = vst.msk [vmem:[#allocation4 + $0x8] sm:$0xff] %vm567, %v522
    %570 = vst.msk [vmem:[#allocation4 + $0x10] sm:$0xff] %vm567, %v524
    %571 = vst.msk [vmem:[#allocation4 + $0x18] sm:$0xff] %vm567, %v526
    %572 = vst.msk [vmem:[#allocation4 + $0x20] sm:$0xff] %vm567, %v528
    %573 = vst.msk [vmem:[#allocation4 + $0x28] sm:$0xff] %vm567, %v530
    %574 = vst.msk [vmem:[#allocation4 + $0x30] sm:$0xff] %vm567, %v532
    %575 = vst.msk [vmem:[#allocation4 + $0x38] sm:$0xff] %vm567, %v534
    %576 = vst.msk [vmem:[#allocation4 + $0x40] sm:$0xff] %vm567, %v536
    %577 = vst.msk [vmem:[#allocation4 + $0x48] sm:$0xff] %vm567, %v538
    %578 = vst.msk [vmem:[#allocation4 + $0x50] sm:$0xff] %vm567, %v540
    %579 = vst.msk [vmem:[#allocation4 + $0x58] sm:$0xff] %vm567, %v542
    %580 = vst.msk [vmem:[#allocation4 + $0x60] sm:$0xff] %vm567, %v544
    %581 = vst.msk [vmem:[#allocation4 + $0x68] sm:$0xff] %vm567, %v546
    %582 = vst.msk [vmem:[#allocation4 + $0x70] sm:$0xff] %vm567, %v548
    %583 = vst.msk [vmem:[#allocation4 + $0x78] sm:$0xff] %vm567, %v550
    %v584 = vld [vmem:[%s453 + $0x8] sm:$0xff]
    %v585 = vld [vmem:[%s453 + $0x18] sm:$0xff]
    %v586 = vld [vmem:[%s453 + $0x28] sm:$0xff]
    %v587 = vld [vmem:[%s453 + $0x38] sm:$0xff]
    %v588 = vld [vmem:[%s453 + $0x48] sm:$0xff]
    %v589 = vld [vmem:[%s453 + $0x58] sm:$0xff]
    %v590 = vld [vmem:[%s453 + $0x68] sm:$0xff]
    %v591 = vld [vmem:[%s453 + $0x78] sm:$0xff]
    %v592 = vld [vmem:[%s453 + $0x98] sm:$0xff]
    %v593 = vld [vmem:[%s453 + $0xa8] sm:$0xff]
    %v594 = vld [vmem:[%s453 + $0xb8] sm:$0xff]
    %v595 = vld [vmem:[%s453 + $0xc8] sm:$0xff]
    %v596 = vld [vmem:[%s453 + $0xd8] sm:$0xff]
    %v597 = vld [vmem:[%s453 + $0xe8] sm:$0xff]
    %v598 = vld [vmem:[%s453 + $0xf8] sm:$0xff]
    %v599 = vld [vmem:[%s453 + $0x108] sm:$0xff]
    %616 = vrot.lane.b32.xlu0 %v584, 8
    %v617 = vpop.permute.xlu0 %616
    %618 = vrot.lane.b32.xlu0 %v585, 8
    %v619 = vpop.permute.xlu0 %618
    %620 = vrot.lane.b32.xlu0 %v586, 8
    %v621 = vpop.permute.xlu0 %620
    %622 = vrot.lane.b32.xlu0 %v587, 8
    %v623 = vpop.permute.xlu0 %622
    %624 = vrot.lane.b32.xlu0 %v588, 8
    %v625 = vpop.permute.xlu0 %624
    %626 = vrot.lane.b32.xlu0 %v589, 8
    %v627 = vpop.permute.xlu0 %626
    %628 = vrot.lane.b32.xlu0 %v590, 8
    %v629 = vpop.permute.xlu0 %628
    %630 = vrot.lane.b32.xlu0 %v591, 8
    %v631 = vpop.permute.xlu0 %630
    %632 = vrot.lane.b32.xlu0 %v592, 8
    %v633 = vpop.permute.xlu0 %632
    %634 = vrot.lane.b32.xlu0 %v593, 8
    %v635 = vpop.permute.xlu0 %634
    %636 = vrot.lane.b32.xlu0 %v594, 8
    %v637 = vpop.permute.xlu0 %636
    %638 = vrot.lane.b32.xlu0 %v595, 8
    %v639 = vpop.permute.xlu0 %638
    %640 = vrot.lane.b32.xlu0 %v596, 8
    %v641 = vpop.permute.xlu0 %640
    %642 = vrot.lane.b32.xlu0 %v597, 8
    %v643 = vpop.permute.xlu0 %642
    %644 = vrot.lane.b32.xlu0 %v598, 8
    %v645 = vpop.permute.xlu0 %644
    %646 = vrot.lane.b32.xlu0 %v599, 8
    %v647 = vpop.permute.xlu0 %646
    %vm664 = vcmask 97344
    %665 = vst.msk [vmem:[#allocation4] sm:$0xff] %vm664, %v617
    %666 = vst.msk [vmem:[#allocation4 + $0x8] sm:$0xff] %vm664, %v619
    %667 = vst.msk [vmem:[#allocation4 + $0x10] sm:$0xff] %vm664, %v621
    %668 = vst.msk [vmem:[#allocation4 + $0x18] sm:$0xff] %vm664, %v623
    %669 = vst.msk [vmem:[#allocation4 + $0x20] sm:$0xff] %vm664, %v625
    %670 = vst.msk [vmem:[#allocation4 + $0x28] sm:$0xff] %vm664, %v627
    %671 = vst.msk [vmem:[#allocation4 + $0x30] sm:$0xff] %vm664, %v629
    %672 = vst.msk [vmem:[#allocation4 + $0x38] sm:$0xff] %vm664, %v631
    %673 = vst.msk [vmem:[#allocation4 + $0x40] sm:$0xff] %vm664, %v633
    %674 = vst.msk [vmem:[#allocation4 + $0x48] sm:$0xff] %vm664, %v635
    %675 = vst.msk [vmem:[#allocation4 + $0x50] sm:$0xff] %vm664, %v637
    %676 = vst.msk [vmem:[#allocation4 + $0x58] sm:$0xff] %vm664, %v639
    %677 = vst.msk [vmem:[#allocation4 + $0x60] sm:$0xff] %vm664, %v641
    %678 = vst.msk [vmem:[#allocation4 + $0x68] sm:$0xff] %vm664, %v643
    %679 = vst.msk [vmem:[#allocation4 + $0x70] sm:$0xff] %vm664, %v645
    %680 = vst.msk [vmem:[#allocation4 + $0x78] sm:$0xff] %vm664, %v647
    %v681 = vld [vmem:[%s272 + $0x7] sm:$0xff]
    %v682 = vld [vmem:[%s272 + $0x17] sm:$0xff]
    %v683 = vld [vmem:[%s272 + $0x27] sm:$0xff]
    %v684 = vld [vmem:[%s272 + $0x37] sm:$0xff]
    %v685 = vld [vmem:[%s272 + $0x47] sm:$0xff]
    %v686 = vld [vmem:[%s272 + $0x57] sm:$0xff]
    %v687 = vld [vmem:[%s272 + $0x67] sm:$0xff]
    %v688 = vld [vmem:[%s272 + $0x77] sm:$0xff]
    %v689 = vld [vmem:[%s272 + $0x97] sm:$0xff]
    %v690 = vld [vmem:[%s272 + $0xa7] sm:$0xff]
    %v691 = vld [vmem:[%s272 + $0xb7] sm:$0xff]
    %v692 = vld [vmem:[%s272 + $0xc7] sm:$0xff]
    %v693 = vld [vmem:[%s272 + $0xd7] sm:$0xff]
    %v694 = vld [vmem:[%s272 + $0xe7] sm:$0xff]
    %v695 = vld [vmem:[%s272 + $0xf7] sm:$0xff]
    %v696 = vld [vmem:[%s272 + $0x107] sm:$0xff]
    %713 = vrot.lane.b32.xlu0 %v681, 12
    %v714 = vpop.permute.xlu0 %713
    %715 = vrot.lane.b32.xlu0 %v682, 12
    %v716 = vpop.permute.xlu0 %715
    %717 = vrot.lane.b32.xlu0 %v683, 12
    %v718 = vpop.permute.xlu0 %717
    %719 = vrot.lane.b32.xlu0 %v684, 12
    %v720 = vpop.permute.xlu0 %719
    %721 = vrot.lane.b32.xlu0 %v685, 12
    %v722 = vpop.permute.xlu0 %721
    %723 = vrot.lane.b32.xlu0 %v686, 12
    %v724 = vpop.permute.xlu0 %723
    %725 = vrot.lane.b32.xlu0 %v687, 12
    %v726 = vpop.permute.xlu0 %725
    %727 = vrot.lane.b32.xlu0 %v688, 12
    %v728 = vpop.permute.xlu0 %727
    %729 = vrot.lane.b32.xlu0 %v689, 12
    %v730 = vpop.permute.xlu0 %729
    %731 = vrot.lane.b32.xlu0 %v690, 12
    %v732 = vpop.permute.xlu0 %731
    %733 = vrot.lane.b32.xlu0 %v691, 12
    %v734 = vpop.permute.xlu0 %733
    %735 = vrot.lane.b32.xlu0 %v692, 12
    %v736 = vpop.permute.xlu0 %735
    %737 = vrot.lane.b32.xlu0 %v693, 12
    %v738 = vpop.permute.xlu0 %737
    %739 = vrot.lane.b32.xlu0 %v694, 12
    %v740 = vpop.permute.xlu0 %739
    %741 = vrot.lane.b32.xlu0 %v695, 12
    %v742 = vpop.permute.xlu0 %741
    %743 = vrot.lane.b32.xlu0 %v696, 12
    %v744 = vpop.permute.xlu0 %743
    %vm761 = vcmask 130144
    %762 = vst.msk [vmem:[#allocation4] sm:$0xff] %vm761, %v714
    %763 = vst.msk [vmem:[#allocation4 + $0x8] sm:$0xff] %vm761, %v716
    %764 = vst.msk [vmem:[#allocation4 + $0x10] sm:$0xff] %vm761, %v718
    %765 = vst.msk [vmem:[#allocation4 + $0x18] sm:$0xff] %vm761, %v720
    %766 = vst.msk [vmem:[#allocation4 + $0x20] sm:$0xff] %vm761, %v722
    %767 = vst.msk [vmem:[#allocation4 + $0x28] sm:$0xff] %vm761, %v724
    %768 = vst.msk [vmem:[#allocation4 + $0x30] sm:$0xff] %vm761, %v726
    %769 = vst.msk [vmem:[#allocation4 + $0x38] sm:$0xff] %vm761, %v728
    %770 = vst.msk [vmem:[#allocation4 + $0x40] sm:$0xff] %vm761, %v730
    %771 = vst.msk [vmem:[#allocation4 + $0x48] sm:$0xff] %vm761, %v732
    %772 = vst.msk [vmem:[#allocation4 + $0x50] sm:$0xff] %vm761, %v734
    %773 = vst.msk [vmem:[#allocation4 + $0x58] sm:$0xff] %vm761, %v736
    %774 = vst.msk [vmem:[#allocation4 + $0x60] sm:$0xff] %vm761, %v738
    %775 = vst.msk [vmem:[#allocation4 + $0x68] sm:$0xff] %vm761, %v740
    %776 = vst.msk [vmem:[#allocation4 + $0x70] sm:$0xff] %vm761, %v742
    %777 = vst.msk [vmem:[#allocation4 + $0x78] sm:$0xff] %vm761, %v744
    %v778 = vld [vmem:[%s190 + $0x8] sm:$0xff]
    %v779 = vld [vmem:[%s190 + $0x18] sm:$0xff]
    %v780 = vld [vmem:[%s190 + $0x28] sm:$0xff]
    %v781 = vld [vmem:[%s190 + $0x38] sm:$0xff]
    %v782 = vld [vmem:[%s190 + $0x48] sm:$0xff]
    %v783 = vld [vmem:[%s190 + $0x58] sm:$0xff]
    %v784 = vld [vmem:[%s190 + $0x68] sm:$0xff]
    %v785 = vld [vmem:[%s190 + $0x78] sm:$0xff]
    %v786 = vld [vmem:[%s190 + $0x98] sm:$0xff]
    %v787 = vld [vmem:[%s190 + $0xa8] sm:$0xff]
    %v788 = vld [vmem:[%s190 + $0xb8] sm:$0xff]
    %v789 = vld [vmem:[%s190 + $0xc8] sm:$0xff]
    %v790 = vld [vmem:[%s190 + $0xd8] sm:$0xff]
    %v791 = vld [vmem:[%s190 + $0xe8] sm:$0xff]
    %v792 = vld [vmem:[%s190 + $0xf8] sm:$0xff]
    %v793 = vld [vmem:[%s190 + $0x108] sm:$0xff]
    %810 = vrot.lane.b32.xlu0 %v778, 16
    %v811 = vpop.permute.xlu0 %810
    %812 = vrot.lane.b32.xlu0 %v779, 16
    %v813 = vpop.permute.xlu0 %812
    %814 = vrot.lane.b32.xlu0 %v780, 16
    %v815 = vpop.permute.xlu0 %814
    %816 = vrot.lane.b32.xlu0 %v781, 16
    %v817 = vpop.permute.xlu0 %816
    %818 = vrot.lane.b32.xlu0 %v782, 16
    %v819 = vpop.permute.xlu0 %818
    %820 = vrot.lane.b32.xlu0 %v783, 16
    %v821 = vpop.permute.xlu0 %820
    %822 = vrot.lane.b32.xlu0 %v784, 16
    %v823 = vpop.permute.xlu0 %822
    %824 = vrot.lane.b32.xlu0 %v785, 16
    %v825 = vpop.permute.xlu0 %824
    %826 = vrot.lane.b32.xlu0 %v786, 16
    %v827 = vpop.permute.xlu0 %826
    %828 = vrot.lane.b32.xlu0 %v787, 16
    %v829 = vpop.permute.xlu0 %828
    %830 = vrot.lane.b32.xlu0 %v788, 16
    %v831 = vpop.permute.xlu0 %830
    %832 = vrot.lane.b32.xlu0 %v789, 16
    %v833 = vpop.permute.xlu0 %832
    %834 = vrot.lane.b32.xlu0 %v790, 16
    %v835 = vpop.permute.xlu0 %834
    %836 = vrot.lane.b32.xlu0 %v791, 16
    %v837 = vpop.permute.xlu0 %836
    %838 = vrot.lane.b32.xlu0 %v792, 16
    %v839 = vpop.permute.xlu0 %838
    %840 = vrot.lane.b32.xlu0 %v793, 16
    %v841 = vpop.permute.xlu0 %840
    %vm858 = vcmask 162944
    %859 = vst.msk [vmem:[#allocation4] sm:$0xff] %vm858, %v811
    %860 = vst.msk [vmem:[#allocation4 + $0x8] sm:$0xff] %vm858, %v813
    %861 = vst.msk [vmem:[#allocation4 + $0x10] sm:$0xff] %vm858, %v815
    %862 = vst.msk [vmem:[#allocation4 + $0x18] sm:$0xff] %vm858, %v817
    %863 = vst.msk [vmem:[#allocation4 + $0x20] sm:$0xff] %vm858, %v819
    %864 = vst.msk [vmem:[#allocation4 + $0x28] sm:$0xff] %vm858, %v821
    %865 = vst.msk [vmem:[#allocation4 + $0x30] sm:$0xff] %vm858, %v823
    %866 = vst.msk [vmem:[#allocation4 + $0x38] sm:$0xff] %vm858, %v825
    %867 = vst.msk [vmem:[#allocation4 + $0x40] sm:$0xff] %vm858, %v827
    %868 = vst.msk [vmem:[#allocation4 + $0x48] sm:$0xff] %vm858, %v829
    %869 = vst.msk [vmem:[#allocation4 + $0x50] sm:$0xff] %vm858, %v831
    %870 = vst.msk [vmem:[#allocation4 + $0x58] sm:$0xff] %vm858, %v833
    %871 = vst.msk [vmem:[#allocation4 + $0x60] sm:$0xff] %vm858, %v835
    %872 = vst.msk [vmem:[#allocation4 + $0x68] sm:$0xff] %vm858, %v837
    %873 = vst.msk [vmem:[#allocation4 + $0x70] sm:$0xff] %vm858, %v839
    %874 = vst.msk [vmem:[#allocation4 + $0x78] sm:$0xff] %vm858, %v841
    %v875 = vld [vmem:[%s272 + $0x8] sm:$0xff]
    %v876 = vld [vmem:[%s272 + $0x18] sm:$0xff]
    %v877 = vld [vmem:[%s272 + $0x28] sm:$0xff]
    %v878 = vld [vmem:[%s272 + $0x38] sm:$0xff]
    %v879 = vld [vmem:[%s272 + $0x48] sm:$0xff]
    %v880 = vld [vmem:[%s272 + $0x58] sm:$0xff]
    %v881 = vld [vmem:[%s272 + $0x68] sm:$0xff]
    %v882 = vld [vmem:[%s272 + $0x78] sm:$0xff]
    %v883 = vld [vmem:[%s272 + $0x98] sm:$0xff]
    %v884 = vld [vmem:[%s272 + $0xa8] sm:$0xff]
    %v885 = vld [vmem:[%s272 + $0xb8] sm:$0xff]
    %v886 = vld [vmem:[%s272 + $0xc8] sm:$0xff]
    %v887 = vld [vmem:[%s272 + $0xd8] sm:$0xff]
    %v888 = vld [vmem:[%s272 + $0xe8] sm:$0xff]
    %v889 = vld [vmem:[%s272 + $0xf8] sm:$0xff]
    %v890 = vld [vmem:[%s272 + $0x108] sm:$0xff]
    %907 = vrot.lane.b32.xlu0 %v875, 20
    %v908 = vpop.permute.xlu0 %907
    %909 = vrot.lane.b32.xlu0 %v876, 20
    %v910 = vpop.permute.xlu0 %909
    %911 = vrot.lane.b32.xlu0 %v877, 20
    %v912 = vpop.permute.xlu0 %911
    %913 = vrot.lane.b32.xlu0 %v878, 20
    %v914 = vpop.permute.xlu0 %913
    %915 = vrot.lane.b32.xlu0 %v879, 20
    %v916 = vpop.permute.xlu0 %915
    %917 = vrot.lane.b32.xlu0 %v880, 20
    %v918 = vpop.permute.xlu0 %917
    %919 = vrot.lane.b32.xlu0 %v881, 20
    %v920 = vpop.permute.xlu0 %919
    %921 = vrot.lane.b32.xlu0 %v882, 20
    %v922 = vpop.permute.xlu0 %921
    %923 = vrot.lane.b32.xlu0 %v883, 20
    %v924 = vpop.permute.xlu0 %923
    %925 = vrot.lane.b32.xlu0 %v884, 20
    %v926 = vpop.permute.xlu0 %925
    %927 = vrot.lane.b32.xlu0 %v885, 20
    %v928 = vpop.permute.xlu0 %927
    %929 = vrot.lane.b32.xlu0 %v886, 20
    %v930 = vpop.permute.xlu0 %929
    %931 = vrot.lane.b32.xlu0 %v887, 20
    %v932 = vpop.permute.xlu0 %931
    %933 = vrot.lane.b32.xlu0 %v888, 20
    %v934 = vpop.permute.xlu0 %933
    %935 = vrot.lane.b32.xlu0 %v889, 20
    %v936 = vpop.permute.xlu0 %935
    %937 = vrot.lane.b32.xlu0 %v890, 20
    %v938 = vpop.permute.xlu0 %937
    %vm955 = vcmask 195744
    %956 = vst.msk [vmem:[#allocation4] sm:$0xff] %vm955, %v908
    %957 = vst.msk [vmem:[#allocation4 + $0x8] sm:$0xff] %vm955, %v910
    %958 = vst.msk [vmem:[#allocation4 + $0x10] sm:$0xff] %vm955, %v912
    %959 = vst.msk [vmem:[#allocation4 + $0x18] sm:$0xff] %vm955, %v914
    %960 = vst.msk [vmem:[#allocation4 + $0x20] sm:$0xff] %vm955, %v916
    %961 = vst.msk [vmem:[#allocation4 + $0x28] sm:$0xff] %vm955, %v918
    %962 = vst.msk [vmem:[#allocation4 + $0x30] sm:$0xff] %vm955, %v920
    %963 = vst.msk [vmem:[#allocation4 + $0x38] sm:$0xff] %vm955, %v922
    %964 = vst.msk [vmem:[#allocation4 + $0x40] sm:$0xff] %vm955, %v924
    %965 = vst.msk [vmem:[#allocation4 + $0x48] sm:$0xff] %vm955, %v926
    %966 = vst.msk [vmem:[#allocation4 + $0x50] sm:$0xff] %vm955, %v928
    %967 = vst.msk [vmem:[#allocation4 + $0x58] sm:$0xff] %vm955, %v930
    %968 = vst.msk [vmem:[#allocation4 + $0x60] sm:$0xff] %vm955, %v932
    %969 = vst.msk [vmem:[#allocation4 + $0x68] sm:$0xff] %vm955, %v934
    %970 = vst.msk [vmem:[#allocation4 + $0x70] sm:$0xff] %vm955, %v936
    %971 = vst.msk [vmem:[#allocation4 + $0x78] sm:$0xff] %vm955, %v938
    %v972 = vld [vmem:[%s436 + $0x7] sm:$0xff]
    %v973 = vld [vmem:[%s436 + $0x17] sm:$0xff]
    %v974 = vld [vmem:[%s436 + $0x27] sm:$0xff]
    %v975 = vld [vmem:[%s436 + $0x37] sm:$0xff]
    %v976 = vld [vmem:[%s436 + $0x47] sm:$0xff]
    %v977 = vld [vmem:[%s436 + $0x57] sm:$0xff]
    %v978 = vld [vmem:[%s436 + $0x67] sm:$0xff]
    %v979 = vld [vmem:[%s436 + $0x77] sm:$0xff]
    %v980 = vld [vmem:[%s436 + $0x97] sm:$0xff]
    %v981 = vld [vmem:[%s436 + $0xa7] sm:$0xff]
    %v982 = vld [vmem:[%s436 + $0xb7] sm:$0xff]
    %v983 = vld [vmem:[%s436 + $0xc7] sm:$0xff]
    %v984 = vld [vmem:[%s436 + $0xd7] sm:$0xff]
    %v985 = vld [vmem:[%s436 + $0xe7] sm:$0xff]
    %v986 = vld [vmem:[%s436 + $0xf7] sm:$0xff]
    %v987 = vld [vmem:[%s436 + $0x107] sm:$0xff]
    %1004 = vrot.lane.b32.xlu0 %v972, 24
    %v1005 = vpop.permute.xlu0 %1004
    %1006 = vrot.lane.b32.xlu0 %v973, 24
    %v1007 = vpop.permute.xlu0 %1006
    %1008 = vrot.lane.b32.xlu0 %v974, 24
    %v1009 = vpop.permute.xlu0 %1008
    %1010 = vrot.lane.b32.xlu0 %v975, 24
    %v1011 = vpop.permute.xlu0 %1010
    %1012 = vrot.lane.b32.xlu0 %v976, 24
    %v1013 = vpop.permute.xlu0 %1012
    %1014 = vrot.lane.b32.xlu0 %v977, 24
    %v1015 = vpop.permute.xlu0 %1014
    %1016 = vrot.lane.b32.xlu0 %v978, 24
    %v1017 = vpop.permute.xlu0 %1016
    %1018 = vrot.lane.b32.xlu0 %v979, 24
    %v1019 = vpop.permute.xlu0 %1018
    %1020 = vrot.lane.b32.xlu0 %v980, 24
    %v1021 = vpop.permute.xlu0 %1020
    %1022 = vrot.lane.b32.xlu0 %v981, 24
    %v1023 = vpop.permute.xlu0 %1022
    %1024 = vrot.lane.b32.xlu0 %v982, 24
    %v1025 = vpop.permute.xlu0 %1024
    %1026 = vrot.lane.b32.xlu0 %v983, 24
    %v1027 = vpop.permute.xlu0 %1026
    %1028 = vrot.lane.b32.xlu0 %v984, 24
    %v1029 = vpop.permute.xlu0 %1028
    %1030 = vrot.lane.b32.xlu0 %v985, 24
    %v1031 = vpop.permute.xlu0 %1030
    %1032 = vrot.lane.b32.xlu0 %v986, 24
    %v1033 = vpop.permute.xlu0 %1032
    %1034 = vrot.lane.b32.xlu0 %v987, 24
    %v1035 = vpop.permute.xlu0 %1034
    %vm1052 = vcmask 228544
    %1053 = vst.msk [vmem:[#allocation4] sm:$0xff] %vm1052, %v1005
    %1054 = vst.msk [vmem:[#allocation4 + $0x8] sm:$0xff] %vm1052, %v1007
    %1055 = vst.msk [vmem:[#allocation4 + $0x10] sm:$0xff] %vm1052, %v1009
    %1056 = vst.msk [vmem:[#allocation4 + $0x18] sm:$0xff] %vm1052, %v1011
    %1057 = vst.msk [vmem:[#allocation4 + $0x20] sm:$0xff] %vm1052, %v1013
    %1058 = vst.msk [vmem:[#allocation4 + $0x28] sm:$0xff] %vm1052, %v1015
    %1059 = vst.msk [vmem:[#allocation4 + $0x30] sm:$0xff] %vm1052, %v1017
    %1060 = vst.msk [vmem:[#allocation4 + $0x38] sm:$0xff] %vm1052, %v1019
    %1061 = vst.msk [vmem:[#allocation4 + $0x40] sm:$0xff] %vm1052, %v1021
    %1062 = vst.msk [vmem:[#allocation4 + $0x48] sm:$0xff] %vm1052, %v1023
    %1063 = vst.msk [vmem:[#allocation4 + $0x50] sm:$0xff] %vm1052, %v1025
    %1064 = vst.msk [vmem:[#allocation4 + $0x58] sm:$0xff] %vm1052, %v1027
    %1065 = vst.msk [vmem:[#allocation4 + $0x60] sm:$0xff] %vm1052, %v1029
    %1066 = vst.msk [vmem:[#allocation4 + $0x68] sm:$0xff] %vm1052, %v1031
    %1067 = vst.msk [vmem:[#allocation4 + $0x70] sm:$0xff] %vm1052, %v1033
    %1068 = vst.msk [vmem:[#allocation4 + $0x78] sm:$0xff] %vm1052, %v1035
    %v1069 = vld [vmem:[%s354 + $0x8] sm:$0xff]
    %v1070 = vld [vmem:[%s354 + $0x18] sm:$0xff]
    %v1071 = vld [vmem:[%s354 + $0x28] sm:$0xff]
    %v1072 = vld [vmem:[%s354 + $0x38] sm:$0xff]
    %v1073 = vld [vmem:[%s354 + $0x48] sm:$0xff]
    %v1074 = vld [vmem:[%s354 + $0x58] sm:$0xff]
    %v1075 = vld [vmem:[%s354 + $0x68] sm:$0xff]
    %v1076 = vld [vmem:[%s354 + $0x78] sm:$0xff]
    %v1077 = vld [vmem:[%s354 + $0x98] sm:$0xff]
    %v1078 = vld [vmem:[%s354 + $0xa8] sm:$0xff]
    %v1079 = vld [vmem:[%s354 + $0xb8] sm:$0xff]
    %v1080 = vld [vmem:[%s354 + $0xc8] sm:$0xff]
    %v1081 = vld [vmem:[%s354 + $0xd8] sm:$0xff]
    %v1082 = vld [vmem:[%s354 + $0xe8] sm:$0xff]
    %v1083 = vld [vmem:[%s354 + $0xf8] sm:$0xff]
    %v1084 = vld [vmem:[%s354 + $0x108] sm:$0xff]
    %1101 = vrot.lane.b32.xlu0 %v1069, 28
    %v1102 = vpop.permute.xlu0 %1101
    %1103 = vrot.lane.b32.xlu0 %v1070, 28
    %v1104 = vpop.permute.xlu0 %1103
    %1105 = vrot.lane.b32.xlu0 %v1071, 28
    %v1106 = vpop.permute.xlu0 %1105
    %1107 = vrot.lane.b32.xlu0 %v1072, 28
    %v1108 = vpop.permute.xlu0 %1107
    %1109 = vrot.lane.b32.xlu0 %v1073, 28
    %v1110 = vpop.permute.xlu0 %1109
    %1111 = vrot.lane.b32.xlu0 %v1074, 28
    %v1112 = vpop.permute.xlu0 %1111
    %1113 = vrot.lane.b32.xlu0 %v1075, 28
    %v1114 = vpop.permute.xlu0 %1113
    %1115 = vrot.lane.b32.xlu0 %v1076, 28
    %v1116 = vpop.permute.xlu0 %1115
    %1117 = vrot.lane.b32.xlu0 %v1077, 28
    %v1118 = vpop.permute.xlu0 %1117
    %1119 = vrot.lane.b32.xlu0 %v1078, 28
    %v1120 = vpop.permute.xlu0 %1119
    %1121 = vrot.lane.b32.xlu0 %v1079, 28
    %v1122 = vpop.permute.xlu0 %1121
    %1123 = vrot.lane.b32.xlu0 %v1080, 28
    %v1124 = vpop.permute.xlu0 %1123
    %1125 = vrot.lane.b32.xlu0 %v1081, 28
    %v1126 = vpop.permute.xlu0 %1125
    %1127 = vrot.lane.b32.xlu0 %v1082, 28
    %v1128 = vpop.permute.xlu0 %1127
    %1129 = vrot.lane.b32.xlu0 %v1083, 28
    %v1130 = vpop.permute.xlu0 %1129
    %1131 = vrot.lane.b32.xlu0 %v1084, 28
    %v1132 = vpop.permute.xlu0 %1131
    %vm1149 = vcmask 261344
    %1150 = vst.msk [vmem:[#allocation4] sm:$0xff] %vm1149, %v1102
    %1151 = vst.msk [vmem:[#allocation4 + $0x8] sm:$0xff] %vm1149, %v1104
    %1152 = vst.msk [vmem:[#allocation4 + $0x10] sm:$0xff] %vm1149, %v1106
    %1153 = vst.msk [vmem:[#allocation4 + $0x18] sm:$0xff] %vm1149, %v1108
    %1154 = vst.msk [vmem:[#allocation4 + $0x20] sm:$0xff] %vm1149, %v1110
    %1155 = vst.msk [vmem:[#allocation4 + $0x28] sm:$0xff] %vm1149, %v1112
    %1156 = vst.msk [vmem:[#allocation4 + $0x30] sm:$0xff] %vm1149, %v1114
    %1157 = vst.msk [vmem:[#allocation4 + $0x38] sm:$0xff] %vm1149, %v1116
    %1158 = vst.msk [vmem:[#allocation4 + $0x40] sm:$0xff] %vm1149, %v1118
    %1159 = vst.msk [vmem:[#allocation4 + $0x48] sm:$0xff] %vm1149, %v1120
    %1160 = vst.msk [vmem:[#allocation4 + $0x50] sm:$0xff] %vm1149, %v1122
    %1161 = vst.msk [vmem:[#allocation4 + $0x58] sm:$0xff] %vm1149, %v1124
    %1162 = vst.msk [vmem:[#allocation4 + $0x60] sm:$0xff] %vm1149, %v1126
    %1163 = vst.msk [vmem:[#allocation4 + $0x68] sm:$0xff] %vm1149, %v1128
    %1164 = vst.msk [vmem:[#allocation4 + $0x70] sm:$0xff] %vm1149, %v1130
    %1165 = vst.msk [vmem:[#allocation4 + $0x78] sm:$0xff] %vm1149, %v1132
    %v1166 = vld [vmem:[%s436 + $0x8] sm:$0xff]
    %v1167 = vld [vmem:[%s436 + $0x18] sm:$0xff]
    %v1168 = vld [vmem:[%s436 + $0x28] sm:$0xff]
    %v1169 = vld [vmem:[%s436 + $0x38] sm:$0xff]
    %v1170 = vld [vmem:[%s436 + $0x48] sm:$0xff]
    %v1171 = vld [vmem:[%s436 + $0x58] sm:$0xff]
    %v1172 = vld [vmem:[%s436 + $0x68] sm:$0xff]
    %v1173 = vld [vmem:[%s436 + $0x78] sm:$0xff]
    %v1174 = vld [vmem:[%s436 + $0x98] sm:$0xff]
    %v1175 = vld [vmem:[%s436 + $0xa8] sm:$0xff]
    %v1176 = vld [vmem:[%s436 + $0xb8] sm:$0xff]
    %v1177 = vld [vmem:[%s436 + $0xc8] sm:$0xff]
    %v1178 = vld [vmem:[%s436 + $0xd8] sm:$0xff]
    %v1179 = vld [vmem:[%s436 + $0xe8] sm:$0xff]
    %v1180 = vld [vmem:[%s436 + $0xf8] sm:$0xff]
    %v1181 = vld [vmem:[%s436 + $0x108] sm:$0xff]
    %1198 = vrot.lane.b32.xlu0 %v1166, 32
    %v1199 = vpop.permute.xlu0 %1198
    %1200 = vrot.lane.b32.xlu0 %v1167, 32
    %v1201 = vpop.permute.xlu0 %1200
    %1202 = vrot.lane.b32.xlu0 %v1168, 32
    %v1203 = vpop.permute.xlu0 %1202
    %1204 = vrot.lane.b32.xlu0 %v1169, 32
    %v1205 = vpop.permute.xlu0 %1204
    %1206 = vrot.lane.b32.xlu0 %v1170, 32
    %v1207 = vpop.permute.xlu0 %1206
    %1208 = vrot.lane.b32.xlu0 %v1171, 32
    %v1209 = vpop.permute.xlu0 %1208
    %1210 = vrot.lane.b32.xlu0 %v1172, 32
    %v1211 = vpop.permute.xlu0 %1210
    %1212 = vrot.lane.b32.xlu0 %v1173, 32
    %v1213 = vpop.permute.xlu0 %1212
    %1214 = vrot.lane.b32.xlu0 %v1174, 32
    %v1215 = vpop.permute.xlu0 %1214
    %1216 = vrot.lane.b32.xlu0 %v1175, 32
    %v1217 = vpop.permute.xlu0 %1216
    %1218 = vrot.lane.b32.xlu0 %v1176, 32
    %v1219 = vpop.permute.xlu0 %1218
    %1220 = vrot.lane.b32.xlu0 %v1177, 32
    %v1221 = vpop.permute.xlu0 %1220
    %1222 = vrot.lane.b32.xlu0 %v1178, 32
    %v1223 = vpop.permute.xlu0 %1222
    %1224 = vrot.lane.b32.xlu0 %v1179, 32
    %v1225 = vpop.permute.xlu0 %1224
    %1226 = vrot.lane.b32.xlu0 %v1180, 32
    %v1227 = vpop.permute.xlu0 %1226
    %1228 = vrot.lane.b32.xlu0 %v1181, 32
    %v1229 = vpop.permute.xlu0 %1228
    %vm1246 = vcmask 294144
    %1247 = vst.msk [vmem:[#allocation4] sm:$0xff] %vm1246, %v1199
    %1248 = vst.msk [vmem:[#allocation4 + $0x8] sm:$0xff] %vm1246, %v1201
    %1249 = vst.msk [vmem:[#allocation4 + $0x10] sm:$0xff] %vm1246, %v1203
    %1250 = vst.msk [vmem:[#allocation4 + $0x18] sm:$0xff] %vm1246, %v1205
    %1251 = vst.msk [vmem:[#allocation4 + $0x20] sm:$0xff] %vm1246, %v1207
    %1252 = vst.msk [vmem:[#allocation4 + $0x28] sm:$0xff] %vm1246, %v1209
    %1253 = vst.msk [vmem:[#allocation4 + $0x30] sm:$0xff] %vm1246, %v1211
    %1254 = vst.msk [vmem:[#allocation4 + $0x38] sm:$0xff] %vm1246, %v1213
    %1255 = vst.msk [vmem:[#allocation4 + $0x40] sm:$0xff] %vm1246, %v1215
    %1256 = vst.msk [vmem:[#allocation4 + $0x48] sm:$0xff] %vm1246, %v1217
    %1257 = vst.msk [vmem:[#allocation4 + $0x50] sm:$0xff] %vm1246, %v1219
    %1258 = vst.msk [vmem:[#allocation4 + $0x58] sm:$0xff] %vm1246, %v1221
    %1259 = vst.msk [vmem:[#allocation4 + $0x60] sm:$0xff] %vm1246, %v1223
    %1260 = vst.msk [vmem:[#allocation4 + $0x68] sm:$0xff] %vm1246, %v1225
    %1261 = vst.msk [vmem:[#allocation4 + $0x70] sm:$0xff] %vm1246, %v1227
    %1262 = vst.msk [vmem:[#allocation4 + $0x78] sm:$0xff] %vm1246, %v1229
    %v1263 = vld [vmem:[#allocation4] sm:$0xff]
    %v1264 = vld [vmem:[#allocation4 + $0x8] sm:$0xff]
    %v1265 = vld [vmem:[#allocation4 + $0x10] sm:$0xff]
    %v1266 = vld [vmem:[#allocation4 + $0x18] sm:$0xff]
    %v1267 = vld [vmem:[#allocation4 + $0x20] sm:$0xff]
    %v1268 = vld [vmem:[#allocation4 + $0x28] sm:$0xff]
    %v1269 = vld [vmem:[#allocation4 + $0x30] sm:$0xff]
    %v1270 = vld [vmem:[#allocation4 + $0x38] sm:$0xff]
    %v1271 = vld [vmem:[#allocation4 + $0x40] sm:$0xff]
    %v1272 = vld [vmem:[#allocation4 + $0x48] sm:$0xff]
    %v1273 = vld [vmem:[#allocation4 + $0x50] sm:$0xff]
    %v1274 = vld [vmem:[#allocation4 + $0x58] sm:$0xff]
    %v1275 = vld [vmem:[#allocation4 + $0x60] sm:$0xff]
    %v1276 = vld [vmem:[#allocation4 + $0x68] sm:$0xff]
    %v1277 = vld [vmem:[#allocation4 + $0x70] sm:$0xff]
    %v1278 = vld [vmem:[#allocation4 + $0x78] sm:$0xff]
    %v1279 = vld [vmem:[%s1] sm:$0xff]
    %v1280 = vld [vmem:[%s1 + $0x8] sm:$0xff]
    %v1281 = vld [vmem:[%s1 + $0x10] sm:$0xff]
    %v1282 = vld [vmem:[%s1 + $0x18] sm:$0xff]
    %v1283 = vld [vmem:[%s1 + $0x20] sm:$0xf]
    %vm1284 = vcmask 293888
    %v1286 = vsel %vm1284, %v1263, 0
    %v1289 = vsel %vm1284, %v1264, 0
    %v1292 = vsel %vm1284, %v1265, 0
    %v1295 = vsel %vm1284, %v1266, 0
    %v1298 = vsel %vm1284, %v1267, 0
    %v1301 = vsel %vm1284, %v1268, 0
    %v1304 = vsel %vm1284, %v1269, 0
    %v1307 = vsel %vm1284, %v1270, 0
    %v1310 = vsel %vm1284, %v1271, 0
    %v1313 = vsel %vm1284, %v1272, 0
    %v1316 = vsel %vm1284, %v1273, 0
    %v1319 = vsel %vm1284, %v1274, 0
    %v1322 = vsel %vm1284, %v1275, 0
    %v1325 = vsel %vm1284, %v1276, 0
    %v1328 = vsel %vm1284, %v1277, 0
    %v1331 = vsel %vm1284, %v1278, 0
    %vm1333 = vcmask 1043456
    %v1335 = vsel %vm1333, %v1283, 0
    %1337 = vmatprep.subr.mxu0 0.0
    %1338 = vmatpush1.msra.mxu0 %v1279
    %1339 = vmatprep.subr.mxu0 0.0
    %1340 = vmatpush1.msra.mxu0 %v1280
    %1341 = vmatprep.subr.mxu0 0.0
    %1342 = vmatpush1.msra.mxu0 %v1281
    %1343 = vmatprep.subr.mxu0 0.0
    %1344 = vmatpush1.msra.mxu0 %v1282
    %1345 = vmatprep.subr.mxu0 0.0
    %1346 = vmatpush1.msra.mxu0 %v1335
    %1347 = vmatprep.subr.mxu0 0.0
    %1348 = vmatpush1.msra.mxu0 0.0
    %1349 = vmatprep.subr.mxu0 0.0
    %1350 = vmatpush1.msra.mxu0 0.0
    %1351 = vmatprep.subr.mxu0 0.0
    %1352 = vmatpush1.msra.mxu0 0.0
    %1353 = vmatprep.subr.mxu0 0.0
    %1354 = vmatpush1.msra.mxu0 0.0
    %1355 = vmatprep.subr.mxu0 0.0
    %1356 = vmatpush1.msra.mxu0 0.0
    %1357 = vmatprep.subr.mxu0 0.0
    %1358 = vmatpush1.msra.mxu0 0.0
    %1359 = vmatprep.subr.mxu0 0.0
    %1360 = vmatpush1.msra.mxu0 0.0
    %1361 = vmatprep.subr.mxu0 0.0
    %1362 = vmatpush1.msra.mxu0 0.0
    %1363 = vmatprep.subr.mxu0 0.0
    %1364 = vmatpush1.msra.mxu0 0.0
    %1365 = vmatprep.subr.mxu0 0.0
    %1366 = vmatpush1.msra.mxu0 0.0
    %1367 = vmatprep.subr.mxu0 0.0
    %1368 = vmatpush1.msra.mxu0 0.0
    %1369 = vmatprep.subr.mxu0 0.0
    %1370 = vmatpush1.msra.mxu0 0.0
    %1371 = vmatprep.subr.mxu0 0.0
    %1372 = vmatpush1.msra.mxu0 0.0
    %1373 = vmatprep.subr.mxu0 0.0
    %1374 = vmatpush1.msra.mxu0 0.0
    %1375 = vmatprep.subr.mxu0 0.0
    %1376 = vmatpush1.msra.mxu0 0.0
    %1377 = vmatprep.subr.mxu0 0.0
    %1378 = vmatpush1.msra.mxu0 0.0
    %1379 = vmatprep.subr.mxu0 0.0
    %1380 = vmatpush1.msra.mxu0 0.0
    %1381 = vmatprep.subr.mxu0 0.0
    %1382 = vmatpush1.msra.mxu0 0.0
    %1383 = vmatprep.subr.mxu0 0.0
    %1384 = vmatpush1.msra.mxu0 0.0
    %1385 = vmatprep.subr.mxu0 0.0
    %1386 = vmatpush1.msra.mxu0 0.0
    %1387 = vmatprep.subr.mxu0 0.0
    %1388 = vmatpush1.msra.mxu0 0.0
    %1389 = vmatprep.subr.mxu0 0.0
    %1390 = vmatpush1.msra.mxu0 0.0
    %1391 = vmatprep.subr.mxu0 0.0
    %1392 = vmatpush1.msra.mxu0 0.0
    %1393 = vmatprep.subr.mxu0 0.0
    %1394 = vmatpush1.msra.mxu0 0.0
    %1395 = vmatprep.subr.mxu0 0.0
    %1396 = vmatpush1.msra.mxu0 0.0
    %1397 = vmatprep.subr.mxu0 0.0
    %1398 = vmatpush1.msra.mxu0 0.0
    %1399 = vmatprep.subr.mxu0 0.0
    %1400 = vmatpush1.msra.mxu0 0.0
    %1401 = vmatprep.mubr.f32.mxu0 0.0
    %1402 = vmatmul.mubr.f32.gmra.mrb[0].mxu0 %v1286
    %v1403 = vpop.f32.mrb[0].mxu0
    %v1404 = vadd.f32 0.0, %v1403
    %v1405 = vpop.f32.mrb[0].mxu0
    %1406 = vmatprep.mubr.f32.mxu0 0.0
    %1407 = vmatmul.mubr.f32.gmra.mrb[0].mxu0 %v1289
    %v1408 = vpop.f32.mrb[0].mxu0
    %v1409 = vadd.f32 0.0, %v1408
    %v1410 = vpop.f32.mrb[0].mxu0
    %1411 = vmatprep.mubr.f32.mxu0 0.0
    %1412 = vmatmul.mubr.f32.gmra.mrb[0].mxu0 %v1292
    %v1413 = vpop.f32.mrb[0].mxu0
    %v1414 = vadd.f32 0.0, %v1413
    %v1415 = vpop.f32.mrb[0].mxu0
    %1416 = vmatprep.mubr.f32.mxu0 0.0
    %1417 = vmatmul.mubr.f32.gmra.mrb[0].mxu0 %v1295
    %v1418 = vpop.f32.mrb[0].mxu0
    %v1419 = vadd.f32 0.0, %v1418
    %v1420 = vpop.f32.mrb[0].mxu0
    %1421 = vmatprep.mubr.f32.mxu0 0.0
    %1422 = vmatmul.mubr.f32.gmra.mrb[0].mxu0 %v1298
    %v1423 = vpop.f32.mrb[0].mxu0
    %v1424 = vadd.f32 0.0, %v1423
    %v1425 = vpop.f32.mrb[0].mxu0
    %1426 = vmatprep.mubr.f32.mxu0 0.0
    %1427 = vmatmul.mubr.f32.gmra.mrb[0].mxu0 %v1301
    %v1428 = vpop.f32.mrb[0].mxu0
    %v1429 = vadd.f32 0.0, %v1428
    %v1430 = vpop.f32.mrb[0].mxu0
    %1431 = vmatprep.mubr.f32.mxu0 0.0
    %1432 = vmatmul.mubr.f32.gmra.mrb[0].mxu0 %v1304
    %v1433 = vpop.f32.mrb[0].mxu0
    %v1434 = vadd.f32 0.0, %v1433
    %v1435 = vpop.f32.mrb[0].mxu0
    %1436 = vmatprep.mubr.f32.mxu0 0.0
    %1437 = vmatmul.mubr.f32.gmra.mrb[0].mxu0 %v1307
    %v1438 = vpop.f32.mrb[0].mxu0
    %v1439 = vadd.f32 0.0, %v1438
    %v1440 = vpop.f32.mrb[0].mxu0
    %1441 = vmatprep.mubr.f32.mxu0 0.0
    %1442 = vmatmul.mubr.f32.gmra.mrb[0].mxu0 %v1310
    %v1443 = vpop.f32.mrb[0].mxu0
    %v1444 = vadd.f32 0.0, %v1443
    %v1445 = vpop.f32.mrb[0].mxu0
    %1446 = vmatprep.mubr.f32.mxu0 0.0
    %1447 = vmatmul.mubr.f32.gmra.mrb[0].mxu0 %v1313
    %v1448 = vpop.f32.mrb[0].mxu0
    %v1449 = vadd.f32 0.0, %v1448
    %v1450 = vpop.f32.mrb[0].mxu0
    %1451 = vmatprep.mubr.f32.mxu0 0.0
    %1452 = vmatmul.mubr.f32.gmra.mrb[0].mxu0 %v1316
    %v1453 = vpop.f32.mrb[0].mxu0
    %v1454 = vadd.f32 0.0, %v1453
    %v1455 = vpop.f32.mrb[0].mxu0
    %1456 = vmatprep.mubr.f32.mxu0 0.0
    %1457 = vmatmul.mubr.f32.gmra.mrb[0].mxu0 %v1319
    %v1458 = vpop.f32.mrb[0].mxu0
    %v1459 = vadd.f32 0.0, %v1458
    %v1460 = vpop.f32.mrb[0].mxu0
    %1461 = vmatprep.mubr.f32.mxu0 0.0
    %1462 = vmatmul.mubr.f32.gmra.mrb[0].mxu0 %v1322
    %v1463 = vpop.f32.mrb[0].mxu0
    %v1464 = vadd.f32 0.0, %v1463
    %v1465 = vpop.f32.mrb[0].mxu0
    %1466 = vmatprep.mubr.f32.mxu0 0.0
    %1467 = vmatmul.mubr.f32.gmra.mrb[0].mxu0 %v1325
    %v1468 = vpop.f32.mrb[0].mxu0
    %v1469 = vadd.f32 0.0, %v1468
    %v1470 = vpop.f32.mrb[0].mxu0
    %1471 = vmatprep.mubr.f32.mxu0 0.0
    %1472 = vmatmul.mubr.f32.gmra.mrb[0].mxu0 %v1328
    %v1473 = vpop.f32.mrb[0].mxu0
    %v1474 = vadd.f32 0.0, %v1473
    %v1475 = vpop.f32.mrb[0].mxu0
    %1476 = vmatprep.mubr.f32.mxu0 0.0
    %1477 = vmatmul.mubr.f32.gmra.mrb[0].mxu0 %v1331
    %v1478 = vpop.f32.mrb[0].mxu0
    %v1479 = vadd.f32 0.0, %v1478
    %v1480 = vpop.f32.mrb[0].mxu0
    %1481 = vdwg.mxu0
    %v1482 = vlaneseq
    %v1483 = vshrl.u32 %v1482, 7
    %v1484 = vsub.s32 0, %v1483
    %v1485 = vrot.slane %v26, %v1484
    %v1486 = vmul.f32 %v1404, %v1485
    %v1487 = vmul.f32 %v1409, %v1485
    %v1488 = vmul.f32 %v1414, %v1485
    %v1489 = vmul.f32 %v1419, %v1485
    %v1490 = vmul.f32 %v1424, %v1485
    %v1491 = vmul.f32 %v1429, %v1485
    %v1492 = vmul.f32 %v1434, %v1485
    %v1493 = vmul.f32 %v1439, %v1485
    %v1494 = vmul.f32 %v1444, %v1485
    %v1495 = vmul.f32 %v1449, %v1485
    %v1496 = vmul.f32 %v1454, %v1485
    %v1497 = vmul.f32 %v1459, %v1485
    %v1498 = vmul.f32 %v1464, %v1485
    %v1499 = vmul.f32 %v1469, %v1485
    %v1500 = vmul.f32 %v1474, %v1485
    %v1501 = vmul.f32 %v1479, %v1485
    %v1502 = vlaneseq
    %v1503 = vshrl.u32 %v1502, 7
    %v1504 = vsub.s32 0, %v1503
    %v1505 = vrot.slane %v27, %v1504
    %v1506 = vadd.f32 %v1486, %v1505
    %v1507 = vadd.f32 %v1487, %v1505
    %v1508 = vadd.f32 %v1488, %v1505
    %v1509 = vadd.f32 %v1489, %v1505
    %v1510 = vadd.f32 %v1490, %v1505
    %v1511 = vadd.f32 %v1491, %v1505
    %v1512 = vadd.f32 %v1492, %v1505
    %v1513 = vadd.f32 %v1493, %v1505
    %v1514 = vadd.f32 %v1494, %v1505
    %v1515 = vadd.f32 %v1495, %v1505
    %v1516 = vadd.f32 %v1496, %v1505
    %v1517 = vadd.f32 %v1497, %v1505
    %v1518 = vadd.f32 %v1498, %v1505
    %v1519 = vadd.f32 %v1499, %v1505
    %v1520 = vadd.f32 %v1500, %v1505
    %v1521 = vadd.f32 %v1501, %v1505
    %v1522 = vmax.f32 %v1506, 0.0
    %v1523 = vmax.f32 %v1507, 0.0
    %v1524 = vmax.f32 %v1508, 0.0
    %v1525 = vmax.f32 %v1509, 0.0
    %v1526 = vmax.f32 %v1510, 0.0
    %v1527 = vmax.f32 %v1511, 0.0
    %v1528 = vmax.f32 %v1512, 0.0
    %v1529 = vmax.f32 %v1513, 0.0
    %v1530 = vmax.f32 %v1514, 0.0
    %v1531 = vmax.f32 %v1515, 0.0
    %v1532 = vmax.f32 %v1516, 0.0
    %v1533 = vmax.f32 %v1517, 0.0
    %v1534 = vmax.f32 %v1518, 0.0
    %v1535 = vmax.f32 %v1519, 0.0
    %v1536 = vmax.f32 %v1520, 0.0
    %v1537 = vmax.f32 %v1521, 0.0
    %vm1538 = vcmask 64512
    %1539 = vst.msk [vmem:[#allocation3 + $0x7] sm:$0xff] %vm1538, 0.0
    %vm1540 = vcmask 58368
    %1541 = vst.msk [vmem:[#allocation3 + $0xf] sm:$0x3] %vm1540, 0.0
    %1542 = vst.msk [vmem:[#allocation3 + $0xf7] sm:$0xff] %vm1538, 0.0
    %1543 = vst.msk [vmem:[#allocation3 + $0xff] sm:$0x3] %vm1540, 0.0
    %s1544 = scalar_lea.vmem [#allocation3], 216
    %1545 = vst.msk [vmem:[%s1544 + $0x7] sm:$0xff] %vm1538, 0.0
    %1546 = vst.msk [vmem:[%s1544 + $0xf] sm:$0x3] %vm1540, 0.0
    %1547 = vst.msk [vmem:[%s1544 + $0xf7] sm:$0xff] %vm1538, 0.0
    %1548 = vst.msk [vmem:[%s1544 + $0xff] sm:$0x3] %vm1540, 0.0
    %vm1549 = vcmask 57344
    %1550 = vst.msk [vmem:[#allocation3 + $0x7] sm:$0x1] %vm1549, 0.0
    %1551 = vst.msk [vmem:[#allocation3 + $0x1f] sm:$0x1] %vm1549, 0.0
    %1552 = vst.msk [vmem:[#allocation3 + $0x37] sm:$0x1] %vm1549, 0.0
    %1553 = vst.msk [vmem:[#allocation3 + $0x4f] sm:$0x1] %vm1549, 0.0
    %1554 = vst.msk [vmem:[#allocation3 + $0x67] sm:$0x1] %vm1549, 0.0
    %1555 = vst.msk [vmem:[#allocation3 + $0x7f] sm:$0x1] %vm1549, 0.0
    %1556 = vst.msk [vmem:[#allocation3 + $0x97] sm:$0x1] %vm1549, 0.0
    %1557 = vst.msk [vmem:[#allocation3 + $0xaf] sm:$0x1] %vm1549, 0.0
    %1558 = vst.msk [vmem:[#allocation3 + $0xc7] sm:$0x1] %vm1549, 0.0
    %1559 = vst.msk [vmem:[#allocation3 + $0xdf] sm:$0x1] %vm1549, 0.0
    %1560 = vst.msk [vmem:[#allocation3 + $0xf7] sm:$0x1] %vm1549, 0.0
    %1561 = vst.msk [vmem:[#allocation3 + $0x10f] sm:$0x1] %vm1549, 0.0
    %1562 = vst.msk [vmem:[#allocation3 + $0x127] sm:$0x1] %vm1549, 0.0
    %1563 = vst.msk [vmem:[#allocation3 + $0x13f] sm:$0x1] %vm1549, 0.0
    %1564 = vst.msk [vmem:[#allocation3 + $0x157] sm:$0x1] %vm1549, 0.0
    %1565 = vst.msk [vmem:[#allocation3 + $0x16f] sm:$0x1] %vm1549, 0.0
    %1566 = vst.msk [vmem:[#allocation3 + $0x187] sm:$0x1] %vm1549, 0.0
    %1567 = vst.msk [vmem:[#allocation3 + $0x19f] sm:$0x1] %vm1549, 0.0
    %1568 = vst.msk [vmem:[#allocation3 + $0x1b7] sm:$0x1] %vm1549, 0.0
    %1569 = vst.msk [vmem:[#allocation3 + $0x1cf] sm:$0x1] %vm1549, 0.0
    %1570 = vst.msk [vmem:[#allocation3 + $0x10] sm:$0x1] %vm1549, 0.0
    %1571 = vst.msk [vmem:[#allocation3 + $0x28] sm:$0x1] %vm1549, 0.0
    %1572 = vst.msk [vmem:[#allocation3 + $0x40] sm:$0x1] %vm1549, 0.0
    %1573 = vst.msk [vmem:[#allocation3 + $0x58] sm:$0x1] %vm1549, 0.0
    %1574 = vst.msk [vmem:[#allocation3 + $0x70] sm:$0x1] %vm1549, 0.0
    %1575 = vst.msk [vmem:[#allocation3 + $0x88] sm:$0x1] %vm1549, 0.0
    %1576 = vst.msk [vmem:[#allocation3 + $0xa0] sm:$0x1] %vm1549, 0.0
    %1577 = vst.msk [vmem:[#allocation3 + $0xb8] sm:$0x1] %vm1549, 0.0
    %1578 = vst.msk [vmem:[#allocation3 + $0xd0] sm:$0x1] %vm1549, 0.0
    %1579 = vst.msk [vmem:[#allocation3 + $0xe8] sm:$0x1] %vm1549, 0.0
    %1580 = vst.msk [vmem:[#allocation3 + $0x100] sm:$0x1] %vm1549, 0.0
    %1581 = vst.msk [vmem:[#allocation3 + $0x118] sm:$0x1] %vm1549, 0.0
    %1582 = vst.msk [vmem:[#allocation3 + $0x130] sm:$0x1] %vm1549, 0.0
    %1583 = vst.msk [vmem:[#allocation3 + $0x148] sm:$0x1] %vm1549, 0.0
    %1584 = vst.msk [vmem:[#allocation3 + $0x160] sm:$0x1] %vm1549, 0.0
    %1585 = vst.msk [vmem:[#allocation3 + $0x178] sm:$0x1] %vm1549, 0.0
    %1586 = vst.msk [vmem:[#allocation3 + $0x190] sm:$0x1] %vm1549, 0.0
    %1587 = vst.msk [vmem:[#allocation3 + $0x1a8] sm:$0x1] %vm1549, 0.0
    %1588 = vst.msk [vmem:[#allocation3 + $0x1c0] sm:$0x1] %vm1549, 0.0
    %1589 = vst.msk [vmem:[#allocation3 + $0x1d8] sm:$0x1] %vm1549, 0.0
    %s1590 = scalar_lea.vmem [#allocation3], 24
    %1591 = vst.msk [vmem:[%s1590 + $0x8] sm:$0xff] %vm1538, %v1522
    %1592 = vst.msk [vmem:[%s1590 + $0x20] sm:$0xff] %vm1538, %v1523
    %1593 = vst.msk [vmem:[%s1590 + $0x38] sm:$0xff] %vm1538, %v1524
    %1594 = vst.msk [vmem:[%s1590 + $0x50] sm:$0xff] %vm1538, %v1525
    %1595 = vst.msk [vmem:[%s1590 + $0x68] sm:$0xff] %vm1538, %v1526
    %1596 = vst.msk [vmem:[%s1590 + $0x80] sm:$0xff] %vm1538, %v1527
    %1597 = vst.msk [vmem:[%s1590 + $0x98] sm:$0xff] %vm1538, %v1528
    %1598 = vst.msk [vmem:[%s1590 + $0xb0] sm:$0xff] %vm1538, %v1529
    %1599 = vst.msk [vmem:[%s1590 + $0xf8] sm:$0xff] %vm1538, %v1530
    %1600 = vst.msk [vmem:[%s1590 + $0x110] sm:$0xff] %vm1538, %v1531
    %1601 = vst.msk [vmem:[%s1590 + $0x128] sm:$0xff] %vm1538, %v1532
    %1602 = vst.msk [vmem:[%s1590 + $0x140] sm:$0xff] %vm1538, %v1533
    %1603 = vst.msk [vmem:[%s1590 + $0x158] sm:$0xff] %vm1538, %v1534
    %1604 = vst.msk [vmem:[%s1590 + $0x170] sm:$0xff] %vm1538, %v1535
    %1605 = vst.msk [vmem:[%s1590 + $0x188] sm:$0xff] %vm1538, %v1536
    %1606 = vst.msk [vmem:[%s1590 + $0x1a0] sm:$0xff] %vm1538, %v1537
    %v1607 = vld [vmem:[#allocation3 + $0x7] sm:$0xff]
    %v1608 = vld [vmem:[#allocation3 + $0x1f] sm:$0xff]
    %v1609 = vld [vmem:[#allocation3 + $0x37] sm:$0xff]
    %v1610 = vld [vmem:[#allocation3 + $0x4f] sm:$0xff]
    %v1611 = vld [vmem:[#allocation3 + $0x67] sm:$0xff]
    %v1612 = vld [vmem:[#allocation3 + $0x7f] sm:$0xff]
    %v1613 = vld [vmem:[#allocation3 + $0x97] sm:$0xff]
    %v1614 = vld [vmem:[#allocation3 + $0xaf] sm:$0xff]
    %v1615 = vld [vmem:[#allocation3 + $0xf7] sm:$0xff]
    %v1616 = vld [vmem:[#allocation3 + $0x10f] sm:$0xff]
    %v1617 = vld [vmem:[#allocation3 + $0x127] sm:$0xff]
    %v1618 = vld [vmem:[#allocation3 + $0x13f] sm:$0xff]
    %v1619 = vld [vmem:[#allocation3 + $0x157] sm:$0xff]
    %v1620 = vld [vmem:[#allocation3 + $0x16f] sm:$0xff]
    %v1621 = vld [vmem:[#allocation3 + $0x187] sm:$0xff]
    %v1622 = vld [vmem:[#allocation3 + $0x19f] sm:$0xff]
    %1623 = vst.msk [vmem:[#allocation5] sm:$0xff] %vm1538, %v1607
    %1624 = vst.msk [vmem:[#allocation5 + $0x8] sm:$0xff] %vm1538, %v1608
    %1625 = vst.msk [vmem:[#allocation5 + $0x10] sm:$0xff] %vm1538, %v1609
    %1626 = vst.msk [vmem:[#allocation5 + $0x18] sm:$0xff] %vm1538, %v1610
    %1627 = vst.msk [vmem:[#allocation5 + $0x20] sm:$0xff] %vm1538, %v1611
    %1628 = vst.msk [vmem:[#allocation5 + $0x28] sm:$0xff] %vm1538, %v1612
    %1629 = vst.msk [vmem:[#allocation5 + $0x30] sm:$0xff] %vm1538, %v1613
    %1630 = vst.msk [vmem:[#allocation5 + $0x38] sm:$0xff] %vm1538, %v1614
    %1631 = vst.msk [vmem:[#allocation5 + $0x40] sm:$0xff] %vm1538, %v1615
    %1632 = vst.msk [vmem:[#allocation5 + $0x48] sm:$0xff] %vm1538, %v1616
    %1633 = vst.msk [vmem:[#allocation5 + $0x50] sm:$0xff] %vm1538, %v1617
    %1634 = vst.msk [vmem:[#allocation5 + $0x58] sm:$0xff] %vm1538, %v1618
    %1635 = vst.msk [vmem:[#allocation5 + $0x60] sm:$0xff] %vm1538, %v1619
    %1636 = vst.msk [vmem:[#allocation5 + $0x68] sm:$0xff] %vm1538, %v1620
    %1637 = vst.msk [vmem:[#allocation5 + $0x70] sm:$0xff] %vm1538, %v1621
    %1638 = vst.msk [vmem:[#allocation5 + $0x78] sm:$0xff] %vm1538, %v1622
    %v1639 = vld [vmem:[#allocation3 + $0x8] sm:$0xff]
    %v1640 = vld [vmem:[#allocation3 + $0x20] sm:$0xff]
    %v1641 = vld [vmem:[#allocation3 + $0x38] sm:$0xff]
    %v1642 = vld [vmem:[#allocation3 + $0x50] sm:$0xff]
    %v1643 = vld [vmem:[#allocation3 + $0x68] sm:$0xff]
    %v1644 = vld [vmem:[#allocation3 + $0x80] sm:$0xff]
    %v1645 = vld [vmem:[#allocation3 + $0x98] sm:$0xff]
    %v1646 = vld [vmem:[#allocation3 + $0xb0] sm:$0xff]
    %v1647 = vld [vmem:[#allocation3 + $0xf8] sm:$0xff]
    %v1648 = vld [vmem:[#allocation3 + $0x110] sm:$0xff]
    %v1649 = vld [vmem:[#allocation3 + $0x128] sm:$0xff]
    %v1650 = vld [vmem:[#allocation3 + $0x140] sm:$0xff]
    %v1651 = vld [vmem:[#allocation3 + $0x158] sm:$0xff]
    %v1652 = vld [vmem:[#allocation3 + $0x170] sm:$0xff]
    %v1653 = vld [vmem:[#allocation3 + $0x188] sm:$0xff]
    %v1654 = vld [vmem:[#allocation3 + $0x1a0] sm:$0xff]
    %1671 = vrot.lane.b32.xlu0 %v1639, 8
    %v1672 = vpop.permute.xlu0 %1671
    %1673 = vrot.lane.b32.xlu0 %v1640, 8
    %v1674 = vpop.permute.xlu0 %1673
    %1675 = vrot.lane.b32.xlu0 %v1641, 8
    %v1676 = vpop.permute.xlu0 %1675
    %1677 = vrot.lane.b32.xlu0 %v1642, 8
    %v1678 = vpop.permute.xlu0 %1677
    %1679 = vrot.lane.b32.xlu0 %v1643, 8
    %v1680 = vpop.permute.xlu0 %1679
    %1681 = vrot.lane.b32.xlu0 %v1644, 8
    %v1682 = vpop.permute.xlu0 %1681
    %1683 = vrot.lane.b32.xlu0 %v1645, 8
    %v1684 = vpop.permute.xlu0 %1683
    %1685 = vrot.lane.b32.xlu0 %v1646, 8
    %v1686 = vpop.permute.xlu0 %1685
    %1687 = vrot.lane.b32.xlu0 %v1647, 8
    %v1688 = vpop.permute.xlu0 %1687
    %1689 = vrot.lane.b32.xlu0 %v1648, 8
    %v1690 = vpop.permute.xlu0 %1689
    %1691 = vrot.lane.b32.xlu0 %v1649, 8
    %v1692 = vpop.permute.xlu0 %1691
    %1693 = vrot.lane.b32.xlu0 %v1650, 8
    %v1694 = vpop.permute.xlu0 %1693
    %1695 = vrot.lane.b32.xlu0 %v1651, 8
    %v1696 = vpop.permute.xlu0 %1695
    %1697 = vrot.lane.b32.xlu0 %v1652, 8
    %v1698 = vpop.permute.xlu0 %1697
    %1699 = vrot.lane.b32.xlu0 %v1653, 8
    %v1700 = vpop.permute.xlu0 %1699
    %1701 = vrot.lane.b32.xlu0 %v1654, 8
    %v1702 = vpop.permute.xlu0 %1701
    %vm1719 = vcmask 130112
    %1720 = vst.msk [vmem:[#allocation5] sm:$0xff] %vm1719, %v1672
    %1721 = vst.msk [vmem:[#allocation5 + $0x8] sm:$0xff] %vm1719, %v1674
    %1722 = vst.msk [vmem:[#allocation5 + $0x10] sm:$0xff] %vm1719, %v1676
    %1723 = vst.msk [vmem:[#allocation5 + $0x18] sm:$0xff] %vm1719, %v1678
    %1724 = vst.msk [vmem:[#allocation5 + $0x20] sm:$0xff] %vm1719, %v1680
    %1725 = vst.msk [vmem:[#allocation5 + $0x28] sm:$0xff] %vm1719, %v1682
    %1726 = vst.msk [vmem:[#allocation5 + $0x30] sm:$0xff] %vm1719, %v1684
    %1727 = vst.msk [vmem:[#allocation5 + $0x38] sm:$0xff] %vm1719, %v1686
    %1728 = vst.msk [vmem:[#allocation5 + $0x40] sm:$0xff] %vm1719, %v1688
    %1729 = vst.msk [vmem:[#allocation5 + $0x48] sm:$0xff] %vm1719, %v1690
    %1730 = vst.msk [vmem:[#allocation5 + $0x50] sm:$0xff] %vm1719, %v1692
    %1731 = vst.msk [vmem:[#allocation5 + $0x58] sm:$0xff] %vm1719, %v1694
    %1732 = vst.msk [vmem:[#allocation5 + $0x60] sm:$0xff] %vm1719, %v1696
    %1733 = vst.msk [vmem:[#allocation5 + $0x68] sm:$0xff] %vm1719, %v1698
    %1734 = vst.msk [vmem:[#allocation5 + $0x70] sm:$0xff] %vm1719, %v1700
    %1735 = vst.msk [vmem:[#allocation5 + $0x78] sm:$0xff] %vm1719, %v1702
    %v1736 = vld [vmem:[#allocation3 + $0x9] sm:$0xff]
    %v1737 = vld [vmem:[#allocation3 + $0x21] sm:$0xff]
    %v1738 = vld [vmem:[#allocation3 + $0x39] sm:$0xff]
    %v1739 = vld [vmem:[#allocation3 + $0x51] sm:$0xff]
    %v1740 = vld [vmem:[#allocation3 + $0x69] sm:$0xff]
    %v1741 = vld [vmem:[#allocation3 + $0x81] sm:$0xff]
    %v1742 = vld [vmem:[#allocation3 + $0x99] sm:$0xff]
    %v1743 = vld [vmem:[#allocation3 + $0xb1] sm:$0xff]
    %v1744 = vld [vmem:[#allocation3 + $0xf9] sm:$0xff]
    %v1745 = vld [vmem:[#allocation3 + $0x111] sm:$0xff]
    %v1746 = vld [vmem:[#allocation3 + $0x129] sm:$0xff]
    %v1747 = vld [vmem:[#allocation3 + $0x141] sm:$0xff]
    %v1748 = vld [vmem:[#allocation3 + $0x159] sm:$0xff]
    %v1749 = vld [vmem:[#allocation3 + $0x171] sm:$0xff]
    %v1750 = vld [vmem:[#allocation3 + $0x189] sm:$0xff]
    %v1751 = vld [vmem:[#allocation3 + $0x1a1] sm:$0xff]
    %1768 = vrot.lane.b32.xlu0 %v1736, 16
    %v1769 = vpop.permute.xlu0 %1768
    %1770 = vrot.lane.b32.xlu0 %v1737, 16
    %v1771 = vpop.permute.xlu0 %1770
    %1772 = vrot.lane.b32.xlu0 %v1738, 16
    %v1773 = vpop.permute.xlu0 %1772
    %1774 = vrot.lane.b32.xlu0 %v1739, 16
    %v1775 = vpop.permute.xlu0 %1774
    %1776 = vrot.lane.b32.xlu0 %v1740, 16
    %v1777 = vpop.permute.xlu0 %1776
    %1778 = vrot.lane.b32.xlu0 %v1741, 16
    %v1779 = vpop.permute.xlu0 %1778
    %1780 = vrot.lane.b32.xlu0 %v1742, 16
    %v1781 = vpop.permute.xlu0 %1780
    %1782 = vrot.lane.b32.xlu0 %v1743, 16
    %v1783 = vpop.permute.xlu0 %1782
    %1784 = vrot.lane.b32.xlu0 %v1744, 16
    %v1785 = vpop.permute.xlu0 %1784
    %1786 = vrot.lane.b32.xlu0 %v1745, 16
    %v1787 = vpop.permute.xlu0 %1786
    %1788 = vrot.lane.b32.xlu0 %v1746, 16
    %v1789 = vpop.permute.xlu0 %1788
    %1790 = vrot.lane.b32.xlu0 %v1747, 16
    %v1791 = vpop.permute.xlu0 %1790
    %1792 = vrot.lane.b32.xlu0 %v1748, 16
    %v1793 = vpop.permute.xlu0 %1792
    %1794 = vrot.lane.b32.xlu0 %v1749, 16
    %v1795 = vpop.permute.xlu0 %1794
    %1796 = vrot.lane.b32.xlu0 %v1750, 16
    %v1797 = vpop.permute.xlu0 %1796
    %1798 = vrot.lane.b32.xlu0 %v1751, 16
    %v1799 = vpop.permute.xlu0 %1798
    %vm1816 = vcmask 195712
    %1817 = vst.msk [vmem:[#allocation5] sm:$0xff] %vm1816, %v1769
    %1818 = vst.msk [vmem:[#allocation5 + $0x8] sm:$0xff] %vm1816, %v1771
    %1819 = vst.msk [vmem:[#allocation5 + $0x10] sm:$0xff] %vm1816, %v1773
    %1820 = vst.msk [vmem:[#allocation5 + $0x18] sm:$0xff] %vm1816, %v1775
    %1821 = vst.msk [vmem:[#allocation5 + $0x20] sm:$0xff] %vm1816, %v1777
    %1822 = vst.msk [vmem:[#allocation5 + $0x28] sm:$0xff] %vm1816, %v1779
    %1823 = vst.msk [vmem:[#allocation5 + $0x30] sm:$0xff] %vm1816, %v1781
    %1824 = vst.msk [vmem:[#allocation5 + $0x38] sm:$0xff] %vm1816, %v1783
    %1825 = vst.msk [vmem:[#allocation5 + $0x40] sm:$0xff] %vm1816, %v1785
    %1826 = vst.msk [vmem:[#allocation5 + $0x48] sm:$0xff] %vm1816, %v1787
    %1827 = vst.msk [vmem:[#allocation5 + $0x50] sm:$0xff] %vm1816, %v1789
    %1828 = vst.msk [vmem:[#allocation5 + $0x58] sm:$0xff] %vm1816, %v1791
    %1829 = vst.msk [vmem:[#allocation5 + $0x60] sm:$0xff] %vm1816, %v1793
    %1830 = vst.msk [vmem:[#allocation5 + $0x68] sm:$0xff] %vm1816, %v1795
    %1831 = vst.msk [vmem:[#allocation5 + $0x70] sm:$0xff] %vm1816, %v1797
    %1832 = vst.msk [vmem:[#allocation5 + $0x78] sm:$0xff] %vm1816, %v1799
    %v1833 = vld [vmem:[%s1590 + $0x7] sm:$0xff]
    %v1834 = vld [vmem:[%s1590 + $0x1f] sm:$0xff]
    %v1835 = vld [vmem:[%s1590 + $0x37] sm:$0xff]
    %v1836 = vld [vmem:[%s1590 + $0x4f] sm:$0xff]
    %v1837 = vld [vmem:[%s1590 + $0x67] sm:$0xff]
    %v1838 = vld [vmem:[%s1590 + $0x7f] sm:$0xff]
    %v1839 = vld [vmem:[%s1590 + $0x97] sm:$0xff]
    %v1840 = vld [vmem:[%s1590 + $0xaf] sm:$0xff]
    %v1841 = vld [vmem:[%s1590 + $0xf7] sm:$0xff]
    %v1842 = vld [vmem:[%s1590 + $0x10f] sm:$0xff]
    %v1843 = vld [vmem:[%s1590 + $0x127] sm:$0xff]
    %v1844 = vld [vmem:[%s1590 + $0x13f] sm:$0xff]
    %v1845 = vld [vmem:[%s1590 + $0x157] sm:$0xff]
    %v1846 = vld [vmem:[%s1590 + $0x16f] sm:$0xff]
    %v1847 = vld [vmem:[%s1590 + $0x187] sm:$0xff]
    %v1848 = vld [vmem:[%s1590 + $0x19f] sm:$0xff]
    %1865 = vrot.lane.b32.xlu0 %v1833, 24
    %v1866 = vpop.permute.xlu0 %1865
    %1867 = vrot.lane.b32.xlu0 %v1834, 24
    %v1868 = vpop.permute.xlu0 %1867
    %1869 = vrot.lane.b32.xlu0 %v1835, 24
    %v1870 = vpop.permute.xlu0 %1869
    %1871 = vrot.lane.b32.xlu0 %v1836, 24
    %v1872 = vpop.permute.xlu0 %1871
    %1873 = vrot.lane.b32.xlu0 %v1837, 24
    %v1874 = vpop.permute.xlu0 %1873
    %1875 = vrot.lane.b32.xlu0 %v1838, 24
    %v1876 = vpop.permute.xlu0 %1875
    %1877 = vrot.lane.b32.xlu0 %v1839, 24
    %v1878 = vpop.permute.xlu0 %1877
    %1879 = vrot.lane.b32.xlu0 %v1840, 24
    %v1880 = vpop.permute.xlu0 %1879
    %1881 = vrot.lane.b32.xlu0 %v1841, 24
    %v1882 = vpop.permute.xlu0 %1881
    %1883 = vrot.lane.b32.xlu0 %v1842, 24
    %v1884 = vpop.permute.xlu0 %1883
    %1885 = vrot.lane.b32.xlu0 %v1843, 24
    %v1886 = vpop.permute.xlu0 %1885
    %1887 = vrot.lane.b32.xlu0 %v1844, 24
    %v1888 = vpop.permute.xlu0 %1887
    %1889 = vrot.lane.b32.xlu0 %v1845, 24
    %v1890 = vpop.permute.xlu0 %1889
    %1891 = vrot.lane.b32.xlu0 %v1846, 24
    %v1892 = vpop.permute.xlu0 %1891
    %1893 = vrot.lane.b32.xlu0 %v1847, 24
    %v1894 = vpop.permute.xlu0 %1893
    %1895 = vrot.lane.b32.xlu0 %v1848, 24
    %v1896 = vpop.permute.xlu0 %1895
    %vm1913 = vcmask 261312
    %1914 = vst.msk [vmem:[#allocation5] sm:$0xff] %vm1913, %v1866
    %1915 = vst.msk [vmem:[#allocation5 + $0x8] sm:$0xff] %vm1913, %v1868
    %1916 = vst.msk [vmem:[#allocation5 + $0x10] sm:$0xff] %vm1913, %v1870
    %1917 = vst.msk [vmem:[#allocation5 + $0x18] sm:$0xff] %vm1913, %v1872
    %1918 = vst.msk [vmem:[#allocation5 + $0x20] sm:$0xff] %vm1913, %v1874
    %1919 = vst.msk [vmem:[#allocation5 + $0x28] sm:$0xff] %vm1913, %v1876
    %1920 = vst.msk [vmem:[#allocation5 + $0x30] sm:$0xff] %vm1913, %v1878
    %1921 = vst.msk [vmem:[#allocation5 + $0x38] sm:$0xff] %vm1913, %v1880
    %1922 = vst.msk [vmem:[#allocation5 + $0x40] sm:$0xff] %vm1913, %v1882
    %1923 = vst.msk [vmem:[#allocation5 + $0x48] sm:$0xff] %vm1913, %v1884
    %1924 = vst.msk [vmem:[#allocation5 + $0x50] sm:$0xff] %vm1913, %v1886
    %1925 = vst.msk [vmem:[#allocation5 + $0x58] sm:$0xff] %vm1913, %v1888
    %1926 = vst.msk [vmem:[#allocation5 + $0x60] sm:$0xff] %vm1913, %v1890
    %1927 = vst.msk [vmem:[#allocation5 + $0x68] sm:$0xff] %vm1913, %v1892
    %1928 = vst.msk [vmem:[#allocation5 + $0x70] sm:$0xff] %vm1913, %v1894
    %1929 = vst.msk [vmem:[#allocation5 + $0x78] sm:$0xff] %vm1913, %v1896
    %v1930 = vld [vmem:[%s1590 + $0x8] sm:$0xff]
    %v1931 = vld [vmem:[%s1590 + $0x20] sm:$0xff]
    %v1932 = vld [vmem:[%s1590 + $0x38] sm:$0xff]
    %v1933 = vld [vmem:[%s1590 + $0x50] sm:$0xff]
    %v1934 = vld [vmem:[%s1590 + $0x68] sm:$0xff]
    %v1935 = vld [vmem:[%s1590 + $0x80] sm:$0xff]
    %v1936 = vld [vmem:[%s1590 + $0x98] sm:$0xff]
    %v1937 = vld [vmem:[%s1590 + $0xb0] sm:$0xff]
    %v1938 = vld [vmem:[%s1590 + $0xf8] sm:$0xff]
    %v1939 = vld [vmem:[%s1590 + $0x110] sm:$0xff]
    %v1940 = vld [vmem:[%s1590 + $0x128] sm:$0xff]
    %v1941 = vld [vmem:[%s1590 + $0x140] sm:$0xff]
    %v1942 = vld [vmem:[%s1590 + $0x158] sm:$0xff]
    %v1943 = vld [vmem:[%s1590 + $0x170] sm:$0xff]
    %v1944 = vld [vmem:[%s1590 + $0x188] sm:$0xff]
    %v1945 = vld [vmem:[%s1590 + $0x1a0] sm:$0xff]
    %1962 = vrot.lane.b32.xlu0 %v1930, 32
    %v1963 = vpop.permute.xlu0 %1962
    %1964 = vrot.lane.b32.xlu0 %v1931, 32
    %v1965 = vpop.permute.xlu0 %1964
    %1966 = vrot.lane.b32.xlu0 %v1932, 32
    %v1967 = vpop.permute.xlu0 %1966
    %1968 = vrot.lane.b32.xlu0 %v1933, 32
    %v1969 = vpop.permute.xlu0 %1968
    %1970 = vrot.lane.b32.xlu0 %v1934, 32
    %v1971 = vpop.permute.xlu0 %1970
    %1972 = vrot.lane.b32.xlu0 %v1935, 32
    %v1973 = vpop.permute.xlu0 %1972
    %1974 = vrot.lane.b32.xlu0 %v1936, 32
    %v1975 = vpop.permute.xlu0 %1974
    %1976 = vrot.lane.b32.xlu0 %v1937, 32
    %v1977 = vpop.permute.xlu0 %1976
    %1978 = vrot.lane.b32.xlu0 %v1938, 32
    %v1979 = vpop.permute.xlu0 %1978
    %1980 = vrot.lane.b32.xlu0 %v1939, 32
    %v1981 = vpop.permute.xlu0 %1980
    %1982 = vrot.lane.b32.xlu0 %v1940, 32
    %v1983 = vpop.permute.xlu0 %1982
    %1984 = vrot.lane.b32.xlu0 %v1941, 32
    %v1985 = vpop.permute.xlu0 %1984
    %1986 = vrot.lane.b32.xlu0 %v1942, 32
    %v1987 = vpop.permute.xlu0 %1986
    %1988 = vrot.lane.b32.xlu0 %v1943, 32
    %v1989 = vpop.permute.xlu0 %1988
    %1990 = vrot.lane.b32.xlu0 %v1944, 32
    %v1991 = vpop.permute.xlu0 %1990
    %1992 = vrot.lane.b32.xlu0 %v1945, 32
    %v1993 = vpop.permute.xlu0 %1992
    %vm2010 = vcmask 326912
    %2011 = vst.msk [vmem:[#allocation5] sm:$0xff] %vm2010, %v1963
    %2012 = vst.msk [vmem:[#allocation5 + $0x8] sm:$0xff] %vm2010, %v1965
    %2013 = vst.msk [vmem:[#allocation5 + $0x10] sm:$0xff] %vm2010, %v1967
    %2014 = vst.msk [vmem:[#allocation5 + $0x18] sm:$0xff] %vm2010, %v1969
    %2015 = vst.msk [vmem:[#allocation5 + $0x20] sm:$0xff] %vm2010, %v1971
    %2016 = vst.msk [vmem:[#allocation5 + $0x28] sm:$0xff] %vm2010, %v1973
    %2017 = vst.msk [vmem:[#allocation5 + $0x30] sm:$0xff] %vm2010, %v1975
    %2018 = vst.msk [vmem:[#allocation5 + $0x38] sm:$0xff] %vm2010, %v1977
    %2019 = vst.msk [vmem:[#allocation5 + $0x40] sm:$0xff] %vm2010, %v1979
    %2020 = vst.msk [vmem:[#allocation5 + $0x48] sm:$0xff] %vm2010, %v1981
    %2021 = vst.msk [vmem:[#allocation5 + $0x50] sm:$0xff] %vm2010, %v1983
    %2022 = vst.msk [vmem:[#allocation5 + $0x58] sm:$0xff] %vm2010, %v1985
    %2023 = vst.msk [vmem:[#allocation5 + $0x60] sm:$0xff] %vm2010, %v1987
    %2024 = vst.msk [vmem:[#allocation5 + $0x68] sm:$0xff] %vm2010, %v1989
    %2025 = vst.msk [vmem:[#allocation5 + $0x70] sm:$0xff] %vm2010, %v1991
    %2026 = vst.msk [vmem:[#allocation5 + $0x78] sm:$0xff] %vm2010, %v1993
    %v2027 = vld [vmem:[%s1590 + $0x9] sm:$0xff]
    %v2028 = vld [vmem:[%s1590 + $0x21] sm:$0xff]
    %v2029 = vld [vmem:[%s1590 + $0x39] sm:$0xff]
    %v2030 = vld [vmem:[%s1590 + $0x51] sm:$0xff]
    %v2031 = vld [vmem:[%s1590 + $0x69] sm:$0xff]
    %v2032 = vld [vmem:[%s1590 + $0x81] sm:$0xff]
    %v2033 = vld [vmem:[%s1590 + $0x99] sm:$0xff]
    %v2034 = vld [vmem:[%s1590 + $0xb1] sm:$0xff]
    %v2035 = vld [vmem:[%s1590 + $0xf9] sm:$0xff]
    %v2036 = vld [vmem:[%s1590 + $0x111] sm:$0xff]
    %v2037 = vld [vmem:[%s1590 + $0x129] sm:$0xff]
    %v2038 = vld [vmem:[%s1590 + $0x141] sm:$0xff]
    %v2039 = vld [vmem:[%s1590 + $0x159] sm:$0xff]
    %v2040 = vld [vmem:[%s1590 + $0x171] sm:$0xff]
    %v2041 = vld [vmem:[%s1590 + $0x189] sm:$0xff]
    %v2042 = vld [vmem:[%s1590 + $0x1a1] sm:$0xff]
    %2059 = vrot.lane.b32.xlu0 %v2027, 40
    %v2060 = vpop.permute.xlu0 %2059
    %2061 = vrot.lane.b32.xlu0 %v2028, 40
    %v2062 = vpop.permute.xlu0 %2061
    %2063 = vrot.lane.b32.xlu0 %v2029, 40
    %v2064 = vpop.permute.xlu0 %2063
    %2065 = vrot.lane.b32.xlu0 %v2030, 40
    %v2066 = vpop.permute.xlu0 %2065
    %2067 = vrot.lane.b32.xlu0 %v2031, 40
    %v2068 = vpop.permute.xlu0 %2067
    %2069 = vrot.lane.b32.xlu0 %v2032, 40
    %v2070 = vpop.permute.xlu0 %2069
    %2071 = vrot.lane.b32.xlu0 %v2033, 40
    %v2072 = vpop.permute.xlu0 %2071
    %2073 = vrot.lane.b32.xlu0 %v2034, 40
    %v2074 = vpop.permute.xlu0 %2073
    %2075 = vrot.lane.b32.xlu0 %v2035, 40
    %v2076 = vpop.permute.xlu0 %2075
    %2077 = vrot.lane.b32.xlu0 %v2036, 40
    %v2078 = vpop.permute.xlu0 %2077
    %2079 = vrot.lane.b32.xlu0 %v2037, 40
    %v2080 = vpop.permute.xlu0 %2079
    %2081 = vrot.lane.b32.xlu0 %v2038, 40
    %v2082 = vpop.permute.xlu0 %2081
    %2083 = vrot.lane.b32.xlu0 %v2039, 40
    %v2084 = vpop.permute.xlu0 %2083
    %2085 = vrot.lane.b32.xlu0 %v2040, 40
    %v2086 = vpop.permute.xlu0 %2085
    %2087 = vrot.lane.b32.xlu0 %v2041, 40
    %v2088 = vpop.permute.xlu0 %2087
    %2089 = vrot.lane.b32.xlu0 %v2042, 40
    %v2090 = vpop.permute.xlu0 %2089
    %vm2107 = vcmask 392512
    %2108 = vst.msk [vmem:[#allocation5] sm:$0xff] %vm2107, %v2060
    %2109 = vst.msk [vmem:[#allocation5 + $0x8] sm:$0xff] %vm2107, %v2062
    %2110 = vst.msk [vmem:[#allocation5 + $0x10] sm:$0xff] %vm2107, %v2064
    %2111 = vst.msk [vmem:[#allocation5 + $0x18] sm:$0xff] %vm2107, %v2066
    %2112 = vst.msk [vmem:[#allocation5 + $0x20] sm:$0xff] %vm2107, %v2068
    %2113 = vst.msk [vmem:[#allocation5 + $0x28] sm:$0xff] %vm2107, %v2070
    %2114 = vst.msk [vmem:[#allocation5 + $0x30] sm:$0xff] %vm2107, %v2072
    %2115 = vst.msk [vmem:[#allocation5 + $0x38] sm:$0xff] %vm2107, %v2074
    %2116 = vst.msk [vmem:[#allocation5 + $0x40] sm:$0xff] %vm2107, %v2076
    %2117 = vst.msk [vmem:[#allocation5 + $0x48] sm:$0xff] %vm2107, %v2078
    %2118 = vst.msk [vmem:[#allocation5 + $0x50] sm:$0xff] %vm2107, %v2080
    %2119 = vst.msk [vmem:[#allocation5 + $0x58] sm:$0xff] %vm2107, %v2082
    %2120 = vst.msk [vmem:[#allocation5 + $0x60] sm:$0xff] %vm2107, %v2084
    %2121 = vst.msk [vmem:[#allocation5 + $0x68] sm:$0xff] %vm2107, %v2086
    %2122 = vst.msk [vmem:[#allocation5 + $0x70] sm:$0xff] %vm2107, %v2088
    %2123 = vst.msk [vmem:[#allocation5 + $0x78] sm:$0xff] %vm2107, %v2090
    %s2124 = scalar_lea.vmem [#allocation3], 48
    %v2125 = vld [vmem:[%s2124 + $0x7] sm:$0xff]
    %v2126 = vld [vmem:[%s2124 + $0x1f] sm:$0xff]
    %v2127 = vld [vmem:[%s2124 + $0x37] sm:$0xff]
    %v2128 = vld [vmem:[%s2124 + $0x4f] sm:$0xff]
    %v2129 = vld [vmem:[%s2124 + $0x67] sm:$0xff]
    %v2130 = vld [vmem:[%s2124 + $0x7f] sm:$0xff]
    %v2131 = vld [vmem:[%s2124 + $0x97] sm:$0xff]
    %v2132 = vld [vmem:[%s2124 + $0xaf] sm:$0xff]
    %v2133 = vld [vmem:[%s2124 + $0xf7] sm:$0xff]
    %v2134 = vld [vmem:[%s2124 + $0x10f] sm:$0xff]
    %v2135 = vld [vmem:[%s2124 + $0x127] sm:$0xff]
    %v2136 = vld [vmem:[%s2124 + $0x13f] sm:$0xff]
    %v2137 = vld [vmem:[%s2124 + $0x157] sm:$0xff]
    %v2138 = vld [vmem:[%s2124 + $0x16f] sm:$0xff]
    %v2139 = vld [vmem:[%s2124 + $0x187] sm:$0xff]
    %v2140 = vld [vmem:[%s2124 + $0x19f] sm:$0xff]
    %2157 = vrot.lane.b32.xlu0 %v2125, 48
    %v2158 = vpop.permute.xlu0 %2157
    %2159 = vrot.lane.b32.xlu0 %v2126, 48
    %v2160 = vpop.permute.xlu0 %2159
    %2161 = vrot.lane.b32.xlu0 %v2127, 48
    %v2162 = vpop.permute.xlu0 %2161
    %2163 = vrot.lane.b32.xlu0 %v2128, 48
    %v2164 = vpop.permute.xlu0 %2163
    %2165 = vrot.lane.b32.xlu0 %v2129, 48
    %v2166 = vpop.permute.xlu0 %2165
    %2167 = vrot.lane.b32.xlu0 %v2130, 48
    %v2168 = vpop.permute.xlu0 %2167
    %2169 = vrot.lane.b32.xlu0 %v2131, 48
    %v2170 = vpop.permute.xlu0 %2169
    %2171 = vrot.lane.b32.xlu0 %v2132, 48
    %v2172 = vpop.permute.xlu0 %2171
    %2173 = vrot.lane.b32.xlu0 %v2133, 48
    %v2174 = vpop.permute.xlu0 %2173
    %2175 = vrot.lane.b32.xlu0 %v2134, 48
    %v2176 = vpop.permute.xlu0 %2175
    %2177 = vrot.lane.b32.xlu0 %v2135, 48
    %v2178 = vpop.permute.xlu0 %2177
    %2179 = vrot.lane.b32.xlu0 %v2136, 48
    %v2180 = vpop.permute.xlu0 %2179
    %2181 = vrot.lane.b32.xlu0 %v2137, 48
    %v2182 = vpop.permute.xlu0 %2181
    %2183 = vrot.lane.b32.xlu0 %v2138, 48
    %v2184 = vpop.permute.xlu0 %2183
    %2185 = vrot.lane.b32.xlu0 %v2139, 48
    %v2186 = vpop.permute.xlu0 %2185
    %2187 = vrot.lane.b32.xlu0 %v2140, 48
    %v2188 = vpop.permute.xlu0 %2187
    %vm2205 = vcmask 458112
    %2206 = vst.msk [vmem:[#allocation5] sm:$0xff] %vm2205, %v2158
    %2207 = vst.msk [vmem:[#allocation5 + $0x8] sm:$0xff] %vm2205, %v2160
    %2208 = vst.msk [vmem:[#allocation5 + $0x10] sm:$0xff] %vm2205, %v2162
    %2209 = vst.msk [vmem:[#allocation5 + $0x18] sm:$0xff] %vm2205, %v2164
    %2210 = vst.msk [vmem:[#allocation5 + $0x20] sm:$0xff] %vm2205, %v2166
    %2211 = vst.msk [vmem:[#allocation5 + $0x28] sm:$0xff] %vm2205, %v2168
    %2212 = vst.msk [vmem:[#allocation5 + $0x30] sm:$0xff] %vm2205, %v2170
    %2213 = vst.msk [vmem:[#allocation5 + $0x38] sm:$0xff] %vm2205, %v2172
    %2214 = vst.msk [vmem:[#allocation5 + $0x40] sm:$0xff] %vm2205, %v2174
    %2215 = vst.msk [vmem:[#allocation5 + $0x48] sm:$0xff] %vm2205, %v2176
    %2216 = vst.msk [vmem:[#allocation5 + $0x50] sm:$0xff] %vm2205, %v2178
    %2217 = vst.msk [vmem:[#allocation5 + $0x58] sm:$0xff] %vm2205, %v2180
    %2218 = vst.msk [vmem:[#allocation5 + $0x60] sm:$0xff] %vm2205, %v2182
    %2219 = vst.msk [vmem:[#allocation5 + $0x68] sm:$0xff] %vm2205, %v2184
    %2220 = vst.msk [vmem:[#allocation5 + $0x70] sm:$0xff] %vm2205, %v2186
    %2221 = vst.msk [vmem:[#allocation5 + $0x78] sm:$0xff] %vm2205, %v2188
    %v2222 = vld [vmem:[%s2124 + $0x8] sm:$0xff]
    %v2223 = vld [vmem:[%s2124 + $0x20] sm:$0xff]
    %v2224 = vld [vmem:[%s2124 + $0x38] sm:$0xff]
    %v2225 = vld [vmem:[%s2124 + $0x50] sm:$0xff]
    %v2226 = vld [vmem:[%s2124 + $0x68] sm:$0xff]
    %v2227 = vld [vmem:[%s2124 + $0x80] sm:$0xff]
    %v2228 = vld [vmem:[%s2124 + $0x98] sm:$0xff]
    %v2229 = vld [vmem:[%s2124 + $0xb0] sm:$0xff]
    %v2230 = vld [vmem:[%s2124 + $0xf8] sm:$0xff]
    %v2231 = vld [vmem:[%s2124 + $0x110] sm:$0xff]
    %v2232 = vld [vmem:[%s2124 + $0x128] sm:$0xff]
    %v2233 = vld [vmem:[%s2124 + $0x140] sm:$0xff]
    %v2234 = vld [vmem:[%s2124 + $0x158] sm:$0xff]
    %v2235 = vld [vmem:[%s2124 + $0x170] sm:$0xff]
    %v2236 = vld [vmem:[%s2124 + $0x188] sm:$0xff]
    %v2237 = vld [vmem:[%s2124 + $0x1a0] sm:$0xff]
    %2254 = vrot.lane.b32.xlu0 %v2222, 56
    %v2255 = vpop.permute.xlu0 %2254
    %2256 = vrot.lane.b32.xlu0 %v2223, 56
    %v2257 = vpop.permute.xlu0 %2256
    %2258 = vrot.lane.b32.xlu0 %v2224, 56
    %v2259 = vpop.permute.xlu0 %2258
    %2260 = vrot.lane.b32.xlu0 %v2225, 56
    %v2261 = vpop.permute.xlu0 %2260
    %2262 = vrot.lane.b32.xlu0 %v2226, 56
    %v2263 = vpop.permute.xlu0 %2262
    %2264 = vrot.lane.b32.xlu0 %v2227, 56
    %v2265 = vpop.permute.xlu0 %2264
    %2266 = vrot.lane.b32.xlu0 %v2228, 56
    %v2267 = vpop.permute.xlu0 %2266
    %2268 = vrot.lane.b32.xlu0 %v2229, 56
    %v2269 = vpop.permute.xlu0 %2268
    %2270 = vrot.lane.b32.xlu0 %v2230, 56
    %v2271 = vpop.permute.xlu0 %2270
    %2272 = vrot.lane.b32.xlu0 %v2231, 56
    %v2273 = vpop.permute.xlu0 %2272
    %2274 = vrot.lane.b32.xlu0 %v2232, 56
    %v2275 = vpop.permute.xlu0 %2274
    %2276 = vrot.lane.b32.xlu0 %v2233, 56
    %v2277 = vpop.permute.xlu0 %2276
    %2278 = vrot.lane.b32.xlu0 %v2234, 56
    %v2279 = vpop.permute.xlu0 %2278
    %2280 = vrot.lane.b32.xlu0 %v2235, 56
    %v2281 = vpop.permute.xlu0 %2280
    %2282 = vrot.lane.b32.xlu0 %v2236, 56
    %v2283 = vpop.permute.xlu0 %2282
    %2284 = vrot.lane.b32.xlu0 %v2237, 56
    %v2285 = vpop.permute.xlu0 %2284
    %vm2302 = vcmask 523712
    %2303 = vst.msk [vmem:[#allocation5] sm:$0xff] %vm2302, %v2255
    %2304 = vst.msk [vmem:[#allocation5 + $0x8] sm:$0xff] %vm2302, %v2257
    %2305 = vst.msk [vmem:[#allocation5 + $0x10] sm:$0xff] %vm2302, %v2259
    %2306 = vst.msk [vmem:[#allocation5 + $0x18] sm:$0xff] %vm2302, %v2261
    %2307 = vst.msk [vmem:[#allocation5 + $0x20] sm:$0xff] %vm2302, %v2263
    %2308 = vst.msk [vmem:[#allocation5 + $0x28] sm:$0xff] %vm2302, %v2265
    %2309 = vst.msk [vmem:[#allocation5 + $0x30] sm:$0xff] %vm2302, %v2267
    %2310 = vst.msk [vmem:[#allocation5 + $0x38] sm:$0xff] %vm2302, %v2269
    %2311 = vst.msk [vmem:[#allocation5 + $0x40] sm:$0xff] %vm2302, %v2271
    %2312 = vst.msk [vmem:[#allocation5 + $0x48] sm:$0xff] %vm2302, %v2273
    %2313 = vst.msk [vmem:[#allocation5 + $0x50] sm:$0xff] %vm2302, %v2275
    %2314 = vst.msk [vmem:[#allocation5 + $0x58] sm:$0xff] %vm2302, %v2277
    %2315 = vst.msk [vmem:[#allocation5 + $0x60] sm:$0xff] %vm2302, %v2279
    %2316 = vst.msk [vmem:[#allocation5 + $0x68] sm:$0xff] %vm2302, %v2281
    %2317 = vst.msk [vmem:[#allocation5 + $0x70] sm:$0xff] %vm2302, %v2283
    %2318 = vst.msk [vmem:[#allocation5 + $0x78] sm:$0xff] %vm2302, %v2285
    %v2319 = vld [vmem:[%s2124 + $0x9] sm:$0xff]
    %v2320 = vld [vmem:[%s2124 + $0x21] sm:$0xff]
    %v2321 = vld [vmem:[%s2124 + $0x39] sm:$0xff]
    %v2322 = vld [vmem:[%s2124 + $0x51] sm:$0xff]
    %v2323 = vld [vmem:[%s2124 + $0x69] sm:$0xff]
    %v2324 = vld [vmem:[%s2124 + $0x81] sm:$0xff]
    %v2325 = vld [vmem:[%s2124 + $0x99] sm:$0xff]
    %v2326 = vld [vmem:[%s2124 + $0xb1] sm:$0xff]
    %v2327 = vld [vmem:[%s2124 + $0xf9] sm:$0xff]
    %v2328 = vld [vmem:[%s2124 + $0x111] sm:$0xff]
    %v2329 = vld [vmem:[%s2124 + $0x129] sm:$0xff]
    %v2330 = vld [vmem:[%s2124 + $0x141] sm:$0xff]
    %v2331 = vld [vmem:[%s2124 + $0x159] sm:$0xff]
    %v2332 = vld [vmem:[%s2124 + $0x171] sm:$0xff]
    %v2333 = vld [vmem:[%s2124 + $0x189] sm:$0xff]
    %v2334 = vld [vmem:[%s2124 + $0x1a1] sm:$0xff]
    %2351 = vrot.lane.b32.xlu0 %v2319, 64
    %v2352 = vpop.permute.xlu0 %2351
    %2353 = vrot.lane.b32.xlu0 %v2320, 64
    %v2354 = vpop.permute.xlu0 %2353
    %2355 = vrot.lane.b32.xlu0 %v2321, 64
    %v2356 = vpop.permute.xlu0 %2355
    %2357 = vrot.lane.b32.xlu0 %v2322, 64
    %v2358 = vpop.permute.xlu0 %2357
    %2359 = vrot.lane.b32.xlu0 %v2323, 64
    %v2360 = vpop.permute.xlu0 %2359
    %2361 = vrot.lane.b32.xlu0 %v2324, 64
    %v2362 = vpop.permute.xlu0 %2361
    %2363 = vrot.lane.b32.xlu0 %v2325, 64
    %v2364 = vpop.permute.xlu0 %2363
    %2365 = vrot.lane.b32.xlu0 %v2326, 64
    %v2366 = vpop.permute.xlu0 %2365
    %2367 = vrot.lane.b32.xlu0 %v2327, 64
    %v2368 = vpop.permute.xlu0 %2367
    %2369 = vrot.lane.b32.xlu0 %v2328, 64
    %v2370 = vpop.permute.xlu0 %2369
    %2371 = vrot.lane.b32.xlu0 %v2329, 64
    %v2372 = vpop.permute.xlu0 %2371
    %2373 = vrot.lane.b32.xlu0 %v2330, 64
    %v2374 = vpop.permute.xlu0 %2373
    %2375 = vrot.lane.b32.xlu0 %v2331, 64
    %v2376 = vpop.permute.xlu0 %2375
    %2377 = vrot.lane.b32.xlu0 %v2332, 64
    %v2378 = vpop.permute.xlu0 %2377
    %2379 = vrot.lane.b32.xlu0 %v2333, 64
    %v2380 = vpop.permute.xlu0 %2379
    %2381 = vrot.lane.b32.xlu0 %v2334, 64
    %v2382 = vpop.permute.xlu0 %2381
    %vm2399 = vcmask 589312
    %2400 = vst.msk [vmem:[#allocation5] sm:$0xff] %vm2399, %v2352
    %2401 = vst.msk [vmem:[#allocation5 + $0x8] sm:$0xff] %vm2399, %v2354
    %2402 = vst.msk [vmem:[#allocation5 + $0x10] sm:$0xff] %vm2399, %v2356
    %2403 = vst.msk [vmem:[#allocation5 + $0x18] sm:$0xff] %vm2399, %v2358
    %2404 = vst.msk [vmem:[#allocation5 + $0x20] sm:$0xff] %vm2399, %v2360
    %2405 = vst.msk [vmem:[#allocation5 + $0x28] sm:$0xff] %vm2399, %v2362
    %2406 = vst.msk [vmem:[#allocation5 + $0x30] sm:$0xff] %vm2399, %v2364
    %2407 = vst.msk [vmem:[#allocation5 + $0x38] sm:$0xff] %vm2399, %v2366
    %2408 = vst.msk [vmem:[#allocation5 + $0x40] sm:$0xff] %vm2399, %v2368
    %2409 = vst.msk [vmem:[#allocation5 + $0x48] sm:$0xff] %vm2399, %v2370
    %2410 = vst.msk [vmem:[#allocation5 + $0x50] sm:$0xff] %vm2399, %v2372
    %2411 = vst.msk [vmem:[#allocation5 + $0x58] sm:$0xff] %vm2399, %v2374
    %2412 = vst.msk [vmem:[#allocation5 + $0x60] sm:$0xff] %vm2399, %v2376
    %2413 = vst.msk [vmem:[#allocation5 + $0x68] sm:$0xff] %vm2399, %v2378
    %2414 = vst.msk [vmem:[#allocation5 + $0x70] sm:$0xff] %vm2399, %v2380
    %2415 = vst.msk [vmem:[#allocation5 + $0x78] sm:$0xff] %vm2399, %v2382
    %v2416 = vld [vmem:[%s0] sm:$0xff]
    %v2417 = vld [vmem:[%s0 + $0x8] sm:$0xff]
    %v2418 = vld [vmem:[%s0 + $0x10] sm:$0xff]
    %v2419 = vld [vmem:[%s0 + $0x18] sm:$0xff]
    %v2420 = vld [vmem:[%s0 + $0x20] sm:$0xff]
    %v2421 = vld [vmem:[%s0 + $0x28] sm:$0xff]
    %v2422 = vld [vmem:[%s0 + $0x30] sm:$0xff]
    %v2423 = vld [vmem:[%s0 + $0x38] sm:$0xff]
    %v2424 = vld [vmem:[%s0 + $0x40] sm:$0xff]
    %v2425 = vld [vmem:[%s0 + $0x48] sm:$0xff]
    %v2426 = vld [vmem:[%s0 + $0x50] sm:$0xff]
    %v2427 = vld [vmem:[%s0 + $0x58] sm:$0xff]
    %v2428 = vld [vmem:[%s0 + $0x60] sm:$0xff]
    %v2429 = vld [vmem:[%s0 + $0x68] sm:$0xff]
    %v2430 = vld [vmem:[%s0 + $0x70] sm:$0xff]
    %v2431 = vld [vmem:[%s0 + $0x78] sm:$0xff]
    %2448 = vrot.lane.b32.xlu0 %v2416, 72
    %v2449 = vpop.permute.xlu0 %2448
    %2450 = vrot.lane.b32.xlu0 %v2417, 72
    %v2451 = vpop.permute.xlu0 %2450
    %2452 = vrot.lane.b32.xlu0 %v2418, 72
    %v2453 = vpop.permute.xlu0 %2452
    %2454 = vrot.lane.b32.xlu0 %v2419, 72
    %v2455 = vpop.permute.xlu0 %2454
    %2456 = vrot.lane.b32.xlu0 %v2420, 72
    %v2457 = vpop.permute.xlu0 %2456
    %2458 = vrot.lane.b32.xlu0 %v2421, 72
    %v2459 = vpop.permute.xlu0 %2458
    %2460 = vrot.lane.b32.xlu0 %v2422, 72
    %v2461 = vpop.permute.xlu0 %2460
    %2462 = vrot.lane.b32.xlu0 %v2423, 72
    %v2463 = vpop.permute.xlu0 %2462
    %2464 = vrot.lane.b32.xlu0 %v2424, 72
    %v2465 = vpop.permute.xlu0 %2464
    %2466 = vrot.lane.b32.xlu0 %v2425, 72
    %v2467 = vpop.permute.xlu0 %2466
    %2468 = vrot.lane.b32.xlu0 %v2426, 72
    %v2469 = vpop.permute.xlu0 %2468
    %2470 = vrot.lane.b32.xlu0 %v2427, 72
    %v2471 = vpop.permute.xlu0 %2470
    %2472 = vrot.lane.b32.xlu0 %v2428, 72
    %v2473 = vpop.permute.xlu0 %2472
    %2474 = vrot.lane.b32.xlu0 %v2429, 72
    %v2475 = vpop.permute.xlu0 %2474
    %2476 = vrot.lane.b32.xlu0 %v2430, 72
    %v2477 = vpop.permute.xlu0 %2476
    %2478 = vrot.lane.b32.xlu0 %v2431, 72
    %v2479 = vpop.permute.xlu0 %2478
    %vm2496 = vcmask 622144
    %2497 = vst.msk [vmem:[#allocation5] sm:$0xff] %vm2496, %v2449
    %2498 = vst.msk [vmem:[#allocation5 + $0x8] sm:$0xff] %vm2496, %v2451
    %2499 = vst.msk [vmem:[#allocation5 + $0x10] sm:$0xff] %vm2496, %v2453
    %2500 = vst.msk [vmem:[#allocation5 + $0x18] sm:$0xff] %vm2496, %v2455
    %2501 = vst.msk [vmem:[#allocation5 + $0x20] sm:$0xff] %vm2496, %v2457
    %2502 = vst.msk [vmem:[#allocation5 + $0x28] sm:$0xff] %vm2496, %v2459
    %2503 = vst.msk [vmem:[#allocation5 + $0x30] sm:$0xff] %vm2496, %v2461
    %2504 = vst.msk [vmem:[#allocation5 + $0x38] sm:$0xff] %vm2496, %v2463
    %2505 = vst.msk [vmem:[#allocation5 + $0x40] sm:$0xff] %vm2496, %v2465
    %2506 = vst.msk [vmem:[#allocation5 + $0x48] sm:$0xff] %vm2496, %v2467
    %2507 = vst.msk [vmem:[#allocation5 + $0x50] sm:$0xff] %vm2496, %v2469
    %2508 = vst.msk [vmem:[#allocation5 + $0x58] sm:$0xff] %vm2496, %v2471
    %2509 = vst.msk [vmem:[#allocation5 + $0x60] sm:$0xff] %vm2496, %v2473
    %2510 = vst.msk [vmem:[#allocation5 + $0x68] sm:$0xff] %vm2496, %v2475
    %2511 = vst.msk [vmem:[#allocation5 + $0x70] sm:$0xff] %vm2496, %v2477
    %2512 = vst.msk [vmem:[#allocation5 + $0x78] sm:$0xff] %vm2496, %v2479
    %v2513 = vld [vmem:[#allocation5] sm:$0xff]
    %v2514 = vld [vmem:[#allocation5 + $0x8] sm:$0xff]
    %v2515 = vld [vmem:[#allocation5 + $0x10] sm:$0xff]
    %v2516 = vld [vmem:[#allocation5 + $0x18] sm:$0xff]
    %v2517 = vld [vmem:[#allocation5 + $0x20] sm:$0xff]
    %v2518 = vld [vmem:[#allocation5 + $0x28] sm:$0xff]
    %v2519 = vld [vmem:[#allocation5 + $0x30] sm:$0xff]
    %v2520 = vld [vmem:[#allocation5 + $0x38] sm:$0xff]
    %v2521 = vld [vmem:[#allocation5 + $0x40] sm:$0xff]
    %v2522 = vld [vmem:[#allocation5 + $0x48] sm:$0xff]
    %v2523 = vld [vmem:[#allocation5 + $0x50] sm:$0xff]
    %v2524 = vld [vmem:[#allocation5 + $0x58] sm:$0xff]
    %v2525 = vld [vmem:[#allocation5 + $0x60] sm:$0xff]
    %v2526 = vld [vmem:[#allocation5 + $0x68] sm:$0xff]
    %v2527 = vld [vmem:[#allocation5 + $0x70] sm:$0xff]
    %v2528 = vld [vmem:[#allocation5 + $0x78] sm:$0xff]
    %v2529 = vld [vmem:[%s2] sm:$0xff]
    %v2530 = vld [vmem:[%s2 + $0x8] sm:$0xff]
    %v2531 = vld [vmem:[%s2 + $0x10] sm:$0xff]
    %v2532 = vld [vmem:[%s2 + $0x18] sm:$0xff]
    %v2533 = vld [vmem:[%s2 + $0x20] sm:$0xff]
    %v2534 = vld [vmem:[%s2 + $0x28] sm:$0xff]
    %v2535 = vld [vmem:[%s2 + $0x30] sm:$0xff]
    %v2536 = vld [vmem:[%s2 + $0x38] sm:$0xff]
    %v2537 = vld [vmem:[%s2 + $0x40] sm:$0xff]
    %v2538 = vld [vmem:[%s2 + $0x48] sm:$0xf]
    %vm2539 = vcmask 621568
    %v2541 = vsel %vm2539, %v2513, 0
    %v2544 = vsel %vm2539, %v2514, 0
    %v2547 = vsel %vm2539, %v2515, 0
    %v2550 = vsel %vm2539, %v2516, 0
    %v2553 = vsel %vm2539, %v2517, 0
    %v2556 = vsel %vm2539, %v2518, 0
    %v2559 = vsel %vm2539, %v2519, 0
    %v2562 = vsel %vm2539, %v2520, 0
    %v2565 = vsel %vm2539, %v2521, 0
    %v2568 = vsel %vm2539, %v2522, 0
    %v2571 = vsel %vm2539, %v2523, 0
    %v2574 = vsel %vm2539, %v2524, 0
    %v2577 = vsel %vm2539, %v2525, 0
    %v2580 = vsel %vm2539, %v2526, 0
    %v2583 = vsel %vm2539, %v2527, 0
    %v2586 = vsel %vm2539, %v2528, 0
    %v2589 = vsel %vm1333, %v2538, 0
    %2591 = vmatprep.subr.mxu0 0.0
    %2592 = vmatpush1.msra.mxu0 %v2529
    %2593 = vmatprep.subr.mxu0 0.0
    %2594 = vmatpush1.msra.mxu0 %v2530
    %2595 = vmatprep.subr.mxu0 0.0
    %2596 = vmatpush1.msra.mxu0 %v2531
    %2597 = vmatprep.subr.mxu0 0.0
    %2598 = vmatpush1.msra.mxu0 %v2532
    %2599 = vmatprep.subr.mxu0 0.0
    %2600 = vmatpush1.msra.mxu0 %v2533
    %2601 = vmatprep.subr.mxu0 0.0
    %2602 = vmatpush1.msra.mxu0 %v2534
    %2603 = vmatprep.subr.mxu0 0.0
    %2604 = vmatpush1.msra.mxu0 %v2535
    %2605 = vmatprep.subr.mxu0 0.0
    %2606 = vmatpush1.msra.mxu0 %v2536
    %2607 = vmatprep.subr.mxu0 0.0
    %2608 = vmatpush1.msra.mxu0 %v2537
    %2609 = vmatprep.subr.mxu0 0.0
    %2610 = vmatpush1.msra.mxu0 %v2589
    %2611 = vmatprep.subr.mxu0 0.0
    %2612 = vmatpush1.msra.mxu0 0.0
    %2613 = vmatprep.subr.mxu0 0.0
    %2614 = vmatpush1.msra.mxu0 0.0
    %2615 = vmatprep.subr.mxu0 0.0
    %2616 = vmatpush1.msra.mxu0 0.0
    %2617 = vmatprep.subr.mxu0 0.0
    %2618 = vmatpush1.msra.mxu0 0.0
    %2619 = vmatprep.subr.mxu0 0.0
    %2620 = vmatpush1.msra.mxu0 0.0
    %2621 = vmatprep.subr.mxu0 0.0
    %2622 = vmatpush1.msra.mxu0 0.0
    %2623 = vmatprep.subr.mxu0 0.0
    %2624 = vmatpush1.msra.mxu0 0.0
    %2625 = vmatprep.subr.mxu0 0.0
    %2626 = vmatpush1.msra.mxu0 0.0
    %2627 = vmatprep.subr.mxu0 0.0
    %2628 = vmatpush1.msra.mxu0 0.0
    %2629 = vmatprep.subr.mxu0 0.0
    %2630 = vmatpush1.msra.mxu0 0.0
    %2631 = vmatprep.subr.mxu0 0.0
    %2632 = vmatpush1.msra.mxu0 0.0
    %2633 = vmatprep.subr.mxu0 0.0
    %2634 = vmatpush1.msra.mxu0 0.0
    %2635 = vmatprep.subr.mxu0 0.0
    %2636 = vmatpush1.msra.mxu0 0.0
    %2637 = vmatprep.subr.mxu0 0.0
    %2638 = vmatpush1.msra.mxu0 0.0
    %2639 = vmatprep.subr.mxu0 0.0
    %2640 = vmatpush1.msra.mxu0 0.0
    %2641 = vmatprep.subr.mxu0 0.0
    %2642 = vmatpush1.msra.mxu0 0.0
    %2643 = vmatprep.subr.mxu0 0.0
    %2644 = vmatpush1.msra.mxu0 0.0
    %2645 = vmatprep.subr.mxu0 0.0
    %2646 = vmatpush1.msra.mxu0 0.0
    %2647 = vmatprep.subr.mxu0 0.0
    %2648 = vmatpush1.msra.mxu0 0.0
    %2649 = vmatprep.subr.mxu0 0.0
    %2650 = vmatpush1.msra.mxu0 0.0
    %2651 = vmatprep.subr.mxu0 0.0
    %2652 = vmatpush1.msra.mxu0 0.0
    %2653 = vmatprep.subr.mxu0 0.0
    %2654 = vmatpush1.msra.mxu0 0.0
    %2655 = vmatprep.mubr.f32.mxu0 0.0
    %2656 = vmatmul.mubr.f32.gmra.mrb[0].mxu0 %v2541
    %v2657 = vpop.f32.mrb[0].mxu0
    %v2658 = vadd.f32 0.0, %v2657
    %v2659 = vpop.f32.mrb[0].mxu0
    %2660 = vmatprep.mubr.f32.mxu0 0.0
    %2661 = vmatmul.mubr.f32.gmra.mrb[0].mxu0 %v2544
    %v2662 = vpop.f32.mrb[0].mxu0
    %v2663 = vadd.f32 0.0, %v2662
    %v2664 = vpop.f32.mrb[0].mxu0
    %2665 = vmatprep.mubr.f32.mxu0 0.0
    %2666 = vmatmul.mubr.f32.gmra.mrb[0].mxu0 %v2547
    %v2667 = vpop.f32.mrb[0].mxu0
    %v2668 = vadd.f32 0.0, %v2667
    %v2669 = vpop.f32.mrb[0].mxu0
    %2670 = vmatprep.mubr.f32.mxu0 0.0
    %2671 = vmatmul.mubr.f32.gmra.mrb[0].mxu0 %v2550
    %v2672 = vpop.f32.mrb[0].mxu0
    %v2673 = vadd.f32 0.0, %v2672
    %v2674 = vpop.f32.mrb[0].mxu0
    %2675 = vmatprep.mubr.f32.mxu0 0.0
    %2676 = vmatmul.mubr.f32.gmra.mrb[0].mxu0 %v2553
    %v2677 = vpop.f32.mrb[0].mxu0
    %v2678 = vadd.f32 0.0, %v2677
    %v2679 = vpop.f32.mrb[0].mxu0
    %2680 = vmatprep.mubr.f32.mxu0 0.0
    %2681 = vmatmul.mubr.f32.gmra.mrb[0].mxu0 %v2556
    %v2682 = vpop.f32.mrb[0].mxu0
    %v2683 = vadd.f32 0.0, %v2682
    %v2684 = vpop.f32.mrb[0].mxu0
    %2685 = vmatprep.mubr.f32.mxu0 0.0
    %2686 = vmatmul.mubr.f32.gmra.mrb[0].mxu0 %v2559
    %v2687 = vpop.f32.mrb[0].mxu0
    %v2688 = vadd.f32 0.0, %v2687
    %v2689 = vpop.f32.mrb[0].mxu0
    %2690 = vmatprep.mubr.f32.mxu0 0.0
    %2691 = vmatmul.mubr.f32.gmra.mrb[0].mxu0 %v2562
    %v2692 = vpop.f32.mrb[0].mxu0
    %v2693 = vadd.f32 0.0, %v2692
    %v2694 = vpop.f32.mrb[0].mxu0
    %2695 = vmatprep.mubr.f32.mxu0 0.0
    %2696 = vmatmul.mubr.f32.gmra.mrb[0].mxu0 %v2565
    %v2697 = vpop.f32.mrb[0].mxu0
    %v2698 = vadd.f32 0.0, %v2697
    %v2699 = vpop.f32.mrb[0].mxu0
    %2700 = vmatprep.mubr.f32.mxu0 0.0
    %2701 = vmatmul.mubr.f32.gmra.mrb[0].mxu0 %v2568
    %v2702 = vpop.f32.mrb[0].mxu0
    %v2703 = vadd.f32 0.0, %v2702
    %v2704 = vpop.f32.mrb[0].mxu0
    %2705 = vmatprep.mubr.f32.mxu0 0.0
    %2706 = vmatmul.mubr.f32.gmra.mrb[0].mxu0 %v2571
    %v2707 = vpop.f32.mrb[0].mxu0
    %v2708 = vadd.f32 0.0, %v2707
    %v2709 = vpop.f32.mrb[0].mxu0
    %2710 = vmatprep.mubr.f32.mxu0 0.0
    %2711 = vmatmul.mubr.f32.gmra.mrb[0].mxu0 %v2574
    %v2712 = vpop.f32.mrb[0].mxu0
    %v2713 = vadd.f32 0.0, %v2712
    %v2714 = vpop.f32.mrb[0].mxu0
    %2715 = vmatprep.mubr.f32.mxu0 0.0
    %2716 = vmatmul.mubr.f32.gmra.mrb[0].mxu0 %v2577
    %v2717 = vpop.f32.mrb[0].mxu0
    %v2718 = vadd.f32 0.0, %v2717
    %v2719 = vpop.f32.mrb[0].mxu0
    %2720 = vmatprep.mubr.f32.mxu0 0.0
    %2721 = vmatmul.mubr.f32.gmra.mrb[0].mxu0 %v2580
    %v2722 = vpop.f32.mrb[0].mxu0
    %v2723 = vadd.f32 0.0, %v2722
    %v2724 = vpop.f32.mrb[0].mxu0
    %2725 = vmatprep.mubr.f32.mxu0 0.0
    %2726 = vmatmul.mubr.f32.gmra.mrb[0].mxu0 %v2583
    %v2727 = vpop.f32.mrb[0].mxu0
    %v2728 = vadd.f32 0.0, %v2727
    %v2729 = vpop.f32.mrb[0].mxu0
    %2730 = vmatprep.mubr.f32.mxu0 0.0
    %2731 = vmatmul.mubr.f32.gmra.mrb[0].mxu0 %v2586
    %v2732 = vpop.f32.mrb[0].mxu0
    %v2733 = vadd.f32 0.0, %v2732
    %v2734 = vpop.f32.mrb[0].mxu0
    %2735 = vdwg.mxu0
    %2736 = vxpose.xlu0.b32.start [1/16] %v2658, 128
    %2737 = vxpose.xlu0.b32.cont [2/16] %v2663, 128
    %2738 = vxpose.xlu0.b32.cont [3/16] %v2668, 128
    %2739 = vxpose.xlu0.b32.cont [4/16] %v2673, 128
    %2740 = vxpose.xlu0.b32.cont [5/16] %v2678, 128
    %2741 = vxpose.xlu0.b32.cont [6/16] %v2683, 128
    %2742 = vxpose.xlu0.b32.cont [7/16] %v2688, 128
    %2743 = vxpose.xlu0.b32.cont [8/16] %v2693, 128
    %2744 = vxpose.xlu0.b32.cont [9/16] %v2698, 128
    %2745 = vxpose.xlu0.b32.cont [10/16] %v2703, 128
    %2746 = vxpose.xlu0.b32.cont [11/16] %v2708, 128
    %2747 = vxpose.xlu0.b32.cont [12/16] %v2713, 128
    %2748 = vxpose.xlu0.b32.cont [13/16] %v2718, 128
    %2749 = vxpose.xlu0.b32.cont [14/16] %v2723, 128
    %2750 = vxpose.xlu0.b32.cont [15/16] %v2728, 128
    %2751 = vxpose.xlu0.b32.end [16/16] %v2733, 128
    %v2752 = vpop.trf.xlu0
    %v2753 = vpop.trf.xlu0
    %v2754 = vpop.trf.xlu0
    %v2755 = vpop.trf.xlu0
    %v2756 = vpop.trf.xlu0
    %v2757 = vpop.trf.xlu0
    %v2758 = vpop.trf.xlu0
    %v2759 = vpop.trf.xlu0
    %v2760 = vpop.trf.xlu0
    %v2761 = vpop.trf.xlu0
    %v2762 = vpop.trf.xlu0
    %v2763 = vpop.trf.xlu0
    %v2764 = vpop.trf.xlu0
    %v2765 = vpop.trf.xlu0
    %v2766 = vpop.trf.xlu0
    %v2767 = vpop.trf.xlu0
    %v2768 = vld [vmem:[%s5] sm:$0xff]
    %2770 = vset.pattern.permute.xlu0 0
    %2771 = vperm.xlu0 %2770, %v2768
    %v2772 = vpop.permute.xlu0 %2771
    %v2774 = vadd.f32 %v2752, %v2772
    %2775 = vst [vmem:[#allocation6] sm:$0xff] %v2774
    // Predicated region
    $region26: #{tpu_custom_call.1} parent=1 // pred_check
      _
    $region27: #{tpu_custom_call.1} parent=1 // pred_check_branch
      %2777 = sbr.rel (0) target = $region29
    $region28: #{tpu_custom_call.1} parent=1 // pred_region
      %s2779 = ssub.s32 128, 128
      %2780 = vsyncadd [#allocation7], %s2779
      %s2782 = sshll.u32 [#allocation6], 4
      %s2783 = int_to_ptr.vmem [resolvable:$true] %s2782
      %2785 = dma.vmem_to_hbm [thread:$0]  %s2783, 128, %s6, [#allocation7]
    $region29: #{tpu_custom_call.1} parent=1 // pred_fallthru
      _
    // Predicated region
    $region30: #{tpu_custom_call.1} parent=1 // pred_check
      _
    $region31: #{tpu_custom_call.1} parent=1 // pred_check_branch
      %2787 = sbr.rel (0) target = $region33
    $region32: #{tpu_custom_call.1} parent=1 // pred_region
      %2788 = dma.done [#allocation7], 128
    $region33: #{tpu_custom_call.1} parent=1 // pred_fallthru
      _
    %2789 = vsyncpa [#allocation7], 1

</llo_original>
